<compile_context>
chip_gen: v7x
topology: tpu7x:2x2x1
jax: 0.10.0
libtpu: 0.0.40
codegen_flags: <defaults>
</compile_context>

<pallas_src>
import math

import jax
import jax.numpy as jnp
from jax.experimental import pallas as pl
from jax.experimental.pallas import tpu as pltpu


# ----------------------------- in-kernel math helpers (f32) -----------------------------

_SQRT_HALF = 0.7071067811865476


def _erf(x):
    # Abramowitz & Stegun 7.1.26, |err| <= 1.5e-7; built only from exp/mul/add/where so it is
    # guaranteed to lower in Mosaic (erf_p may not have a TPU lowering rule).
    a1, a2, a3, a4, a5 = 0.254829592, -0.284496736, 1.421413741, -1.453152027, 1.061405429
    p = 0.3275911
    sgn = jnp.where(x < 0.0, -1.0, 1.0)
    ax = jnp.abs(x)
    t = 1.0 / (1.0 + p * ax)
    poly = ((((a5 * t + a4) * t + a3) * t + a2) * t + a1) * t
    return sgn * (1.0 - poly * jnp.exp(-ax * ax))


def _gelu_exact(x):
    # nn.GELU() default (erf formulation), evaluated in f32.
    return 0.5 * x * (1.0 + _erf(x * _SQRT_HALF))


def _layernorm(x, g, b, eps):
    mu = jnp.mean(x, axis=-1, keepdims=True)
    var = jnp.mean(jnp.square(x - mu), axis=-1, keepdims=True)
    return (x - mu) * jax.lax.rsqrt(var + eps) * g + b


# ----------------------------- ResidualAdd2: fn(x) + x fused in one kernel -----------------------------

class ResidualAdd2:
    """out = fn(x) + x, with `fn` fused into the same Pallas kernel as the residual add.

    `fn_body(x2d_f32, *param_arrays) -> y2d_f32` runs on one batch element's (N, C) token slab
    inside the kernel; `params` is the flat list of (2-D) parameter arrays it consumes.
    """

    def __init__(self, fn_body, params):
        self.fn_body = fn_body
        self.params = tuple(params)

    def __call__(self, x):
        B, N, C = x.shape
        n_params = len(self.params)
        fn_body = self.fn_body

        def kernel(*refs):
            x_ref = refs[0]
            p_vals = [r[...] for r in refs[1:1 + n_params]]
            o_ref = refs[1 + n_params]
            xb = x_ref[0].astype(jnp.float32)            # (N, C) for this batch element
            y = fn_body(xb, *p_vals)                     # fused wrapped fn
            o_ref[0] = (y + xb).astype(o_ref.dtype)      # fused residual add (x += res)

        in_specs = [pl.BlockSpec((1, N, C), lambda b: (b, 0, 0))]
        for p in self.params:
            # Constant block index across the batch grid -> weights DMA'd once, stay resident.
            in_specs.append(pl.BlockSpec(p.shape, lambda b, nd=p.ndim: (0,) * nd))

        return pl.pallas_call(
            kernel,
            out_shape=jax.ShapeDtypeStruct((B, N, C), x.dtype),
            grid=(B,),
            in_specs=in_specs,
            out_specs=pl.BlockSpec((1, N, C), lambda b: (b, 0, 0)),
            compiler_params=pltpu.CompilerParams(
                dimension_semantics=("parallel",)),      # lets v7x shard batch over its 2 TCs
        )(x, *self.params)


# ----------------------------- wrapped fns from IntraAtt.py -----------------------------

def make_prenorm_intra_msa(dim, num_heads, eps=1e-5):
    """LayerNorm -> IntraMultiHeadAttention -> Dropout(identity); all heads in one kernel."""
    hd = dim // num_heads
    post_scale = 1.0 / math.sqrt(dim)   # vapformer: softmax(Q K^T), THEN divide by sqrt(emb_size)

    def fn(x, ln_g, ln_b, wqkv, bqkv, wproj, bproj):
        xn = _layernorm(x, ln_g, ln_b, eps)                                   # f32 (N, C)
        qkv = jnp.dot(xn.astype(jnp.bfloat16), wqkv,
                      preferred_element_type=jnp.float32) + bqkv              # (N, 3C) = [q|k|v]
        outs = []
        for h in range(num_heads):                                            # unrolled, static slices
            q = qkv[:, h * hd:(h + 1) * hd]
            k = qkv[:, dim + h * hd:dim + (h + 1) * hd]
            v = qkv[:, 2 * dim + h * hd:2 * dim + (h + 1) * hd]
            s = jax.lax.dot_general(q, k, (((1,), (1,)), ((), ())),
                                    preferred_element_type=jnp.float32)       # (N, N) = q @ k.T
            s = s - jnp.max(s, axis=-1, keepdims=True)
            p = jnp.exp(s)
            l = jnp.sum(p, axis=-1, keepdims=True)
            o = jnp.dot(p, v, preferred_element_type=jnp.float32)             # (N, hd)
            # softmax normalization (EUP reciprocal) + post-softmax 1/sqrt(C) folded into the
            # small (N, hd) epilogue multiply instead of the (N, N) probability matrix.
            outs.append(o * (pl.reciprocal(l, approx=True) * post_scale))
        o = jnp.concatenate(outs, axis=-1)                                    # lane-dense (N, C)
        return jnp.dot(o.astype(jnp.bfloat16), wproj,
                       preferred_element_type=jnp.float32) + bproj
    return fn


def make_prenorm_ffn(eps=1e-5):
    """LayerNorm -> Linear -> GELU -> Dropout(identity) -> Linear, fused."""
    def fn(x, ln_g, ln_b, w1, b1, w2, b2):
        xn = _layernorm(x, ln_g, ln_b, eps)
        h = jnp.dot(xn.astype(jnp.bfloat16), w1, preferred_element_type=jnp.float32) + b1
        h = _gelu_exact(h)
        return jnp.dot(h.astype(jnp.bfloat16), w2, preferred_element_type=jnp.float32) + b2
    return fn


# ----------------------------- parameter init / prep (PyTorch layout -> kernel layout) -----------------------------

def init_linear(key, in_dim, out_dim, scale=0.02):
    # nn.Linear stores W as (out, in); keep that convention, transpose once at prep time.
    k1, k2 = jax.random.split(key)
    return {'w': scale * jax.random.normal(k1, (out_dim, in_dim), jnp.float32),
            'b': scale * jax.random.normal(k2, (out_dim,), jnp.float32)}


def qkv_permutation(dim, num_heads):
    # vapformer packs the qkv projection output as (h, d, qkv); permute columns ONCE at prep
    # time into [q_allheads | k_allheads | v_allheads] (head-major) so the kernel slices
    # q/k/v and heads with contiguous static slices. Pure relabeling -> same math.
    hd = dim // num_heads
    perm = []
    for c in range(3):               # q, k, v
        for h in range(num_heads):
            for d in range(hd):
                perm.append(h * hd * 3 + d * 3 + c)
    return jnp.array(perm, dtype=jnp.int32)


def prep_msa_params(dim, num_heads, ln_g, ln_b, qkv_lin, proj_lin):
    perm = qkv_permutation(dim, num_heads)
    wqkv = qkv_lin['w'].T[:, perm].astype(jnp.bfloat16)    # (C, 3C) bf16 for the MXU
    bqkv = qkv_lin['b'][perm].reshape(1, -1)               # f32
    wproj = proj_lin['w'].T.astype(jnp.bfloat16)
    bproj = proj_lin['b'].reshape(1, -1)
    return [ln_g.reshape(1, -1), ln_b.reshape(1, -1), wqkv, bqkv, wproj, bproj]


def prep_ffn_params(ln_g, ln_b, lin1, lin2):
    return [ln_g.reshape(1, -1), ln_b.reshape(1, -1),
            lin1['w'].T.astype(jnp.bfloat16), lin1['b'].reshape(1, -1),
            lin2['w'].T.astype(jnp.bfloat16), lin2['b'].reshape(1, -1)]


# ----------------------------- main -----------------------------

if __name__ == "__main__":
    B = 2
    dim = 64
    num_heads = 8            # default in IntraMultiHeadAttention
    num_patches = 8          # tokens = num_patches + 1 (global token)
    N = num_patches + 1
    ffn_hidden = 4 * dim

    key = jax.random.PRNGKey(0)
    kx, k1, k2, k3, k4 = jax.random.split(key, 5)
    x = jax.random.normal(kx, (B, N, dim), jnp.float32)

    ln1_g = jnp.ones((dim,), jnp.float32)
    ln1_b = jnp.zeros((dim,), jnp.float32)
    ln2_g = jnp.ones((dim,), jnp.float32)
    ln2_b = jnp.zeros((dim,), jnp.float32)
    qkv_lin = init_linear(k1, dim, 3 * dim)
    proj_lin = init_linear(k2, dim, dim)
    ffn1 = init_linear(k3, dim, ffn_hidden)
    ffn2 = init_linear(k4, ffn_hidden, dim)

    # ResidualAdd2(nn.Sequential(LayerNorm, IntraMultiHeadAttention, Dropout))
    res_msa = ResidualAdd2(make_prenorm_intra_msa(dim, num_heads),
                           prep_msa_params(dim, num_heads, ln1_g, ln1_b, qkv_lin, proj_lin))
    # ResidualAdd2(nn.Sequential(LayerNorm, FeedForward(Linear, GELU, Dropout, Linear)))
    res_ffn = ResidualAdd2(make_prenorm_ffn(),
                           prep_ffn_params(ln2_g, ln2_b, ffn1, ffn2))

    @jax.jit
    def block(x):
        # One fused pallas_call per ResidualAdd2 instance (2 launches total vs ~15 before).
        return res_ffn(res_msa(x))

    out = block(x)
    jax.block_until_ready(out)

    assert out.shape == (B, N, dim), out.shape
    assert jnp.all(jnp.isfinite(out)), "non-finite output"
    print("KERNEL_OK")
</pallas_src>

<mosaic_0001>
module attributes {stable_mosaic.version = 11 : i64} {
  func.func @kernel(%arg0: i32, %arg1: memref<1x9x64xf32, #tpu.memory_space<vmem>>, %arg2: memref<1x64xf32, #tpu.memory_space<vmem>>, %arg3: memref<1x64xf32, #tpu.memory_space<vmem>>, %arg4: memref<64x192xbf16, #tpu.memory_space<vmem>>, %arg5: memref<1x192xf32, #tpu.memory_space<vmem>>, %arg6: memref<64x64xbf16, #tpu.memory_space<vmem>>, %arg7: memref<1x64xf32, #tpu.memory_space<vmem>>, %arg8: memref<1x9x64xf32, #tpu.memory_space<vmem>>) attributes {dimension_semantics = [#tpu.dimension_semantics<parallel>], iteration_bounds = array<i64: 2>, scalar_prefetch = 0 : i64, scratch_operands = 0 : i64, tpu.core_type = #tpu.core_type<tc>, window_params = [{transform_indices = @transform_0, window_bounds = array<i64: 1, 9, 64>}, {pipeline_mode = #tpu.pipeline_mode<synchronous>, transform_indices = @transform_1, window_bounds = array<i64: 1, 64>}, {pipeline_mode = #tpu.pipeline_mode<synchronous>, transform_indices = @transform_2, window_bounds = array<i64: 1, 64>}, {pipeline_mode = #tpu.pipeline_mode<synchronous>, transform_indices = @transform_3, window_bounds = array<i64: 64, 192>}, {pipeline_mode = #tpu.pipeline_mode<synchronous>, transform_indices = @transform_4, window_bounds = array<i64: 1, 192>}, {pipeline_mode = #tpu.pipeline_mode<synchronous>, transform_indices = @transform_5, window_bounds = array<i64: 64, 64>}, {pipeline_mode = #tpu.pipeline_mode<synchronous>, transform_indices = @transform_6, window_bounds = array<i64: 1, 64>}, {transform_indices = @transform_7, window_bounds = array<i64: 1, 9, 64>}]} {
    %c0 = arith.constant 0 : index
    %c0_0 = arith.constant 0 : index
    %0 = vector.load %arg2[%c0, %c0_0] : memref<1x64xf32, #tpu.memory_space<vmem>>, vector<1x64xf32>
    %c0_1 = arith.constant 0 : index
    %c0_2 = arith.constant 0 : index
    %1 = vector.load %arg3[%c0_1, %c0_2] : memref<1x64xf32, #tpu.memory_space<vmem>>, vector<1x64xf32>
    %c0_3 = arith.constant 0 : index
    %c0_4 = arith.constant 0 : index
    %2 = vector.load %arg4[%c0_3, %c0_4] : memref<64x192xbf16, #tpu.memory_space<vmem>>, vector<64x192xbf16>
    %c0_5 = arith.constant 0 : index
    %c0_6 = arith.constant 0 : index
    %3 = vector.load %arg5[%c0_5, %c0_6] : memref<1x192xf32, #tpu.memory_space<vmem>>, vector<1x192xf32>
    %c0_7 = arith.constant 0 : index
    %c0_8 = arith.constant 0 : index
    %4 = vector.load %arg6[%c0_7, %c0_8] : memref<64x64xbf16, #tpu.memory_space<vmem>>, vector<64x64xbf16>
    %c0_9 = arith.constant 0 : index
    %c0_10 = arith.constant 0 : index
    %5 = vector.load %arg7[%c0_9, %c0_10] : memref<1x64xf32, #tpu.memory_space<vmem>>, vector<1x64xf32>
    %c0_11 = arith.constant 0 : index
    %c0_12 = arith.constant 0 : index
    %c0_13 = arith.constant 0 : index
    %6 = vector.load %arg1[%c0_11, %c0_12, %c0_13] : memref<1x9x64xf32, #tpu.memory_space<vmem>>, vector<1x9x64xf32>
    %7 = vector.shape_cast %6 : vector<1x9x64xf32> to vector<9x64xf32>
    %cst = arith.constant dense<0.000000e+00> : vector<9xf32>
    %8 = vector.multi_reduction <add>, %7, %cst [1] : vector<9x64xf32> to vector<9xf32>
    %9 = vector.shape_cast %8 : vector<9xf32> to vector<9x1xf32>
    %cst_14 = arith.constant 6.400000e+01 : f32
    %10 = vector.broadcast %cst_14 : f32 to vector<9x1xf32>
    %11 = arith.divf %9, %10 : vector<9x1xf32>
    %12 = vector.broadcast %11 : vector<9x1xf32> to vector<9x64xf32>
    %13 = arith.subf %7, %12 : vector<9x64xf32>
    %14 = arith.mulf %13, %13 : vector<9x64xf32>
    %cst_15 = arith.constant dense<0.000000e+00> : vector<9xf32>
    %15 = vector.multi_reduction <add>, %14, %cst_15 [1] : vector<9x64xf32> to vector<9xf32>
    %16 = vector.shape_cast %15 : vector<9xf32> to vector<9x1xf32>
    %cst_16 = arith.constant 6.400000e+01 : f32
    %17 = vector.broadcast %cst_16 : f32 to vector<9x1xf32>
    %18 = arith.divf %16, %17 : vector<9x1xf32>
    %19 = vector.broadcast %11 : vector<9x1xf32> to vector<9x64xf32>
    %20 = arith.subf %7, %19 : vector<9x64xf32>
    %cst_17 = arith.constant 9.99999974E-6 : f32
    %21 = vector.broadcast %cst_17 : f32 to vector<9x1xf32>
    %22 = arith.addf %18, %21 : vector<9x1xf32>
    %23 = math.rsqrt %22 : vector<9x1xf32>
    %24 = vector.broadcast %23 : vector<9x1xf32> to vector<9x64xf32>
    %25 = arith.mulf %20, %24 : vector<9x64xf32>
    %26 = vector.broadcast %0 : vector<1x64xf32> to vector<9x64xf32>
    %27 = arith.mulf %25, %26 : vector<9x64xf32>
    %28 = vector.broadcast %1 : vector<1x64xf32> to vector<9x64xf32>
    %29 = arith.addf %27, %28 : vector<9x64xf32>
    %30 = arith.truncf %29 : vector<9x64xf32> to vector<9x64xbf16>
    %cst_18 = arith.constant dense<0.000000e+00> : vector<9x192xf32>
    %31 = tpu.matmul %30, %2, %cst_18 {dimension_numbers = #tpu.dot_dimension_numbers<[1], [0], [0], [1], [0, 0, 1, 1], [], []>} : vector<9x64xbf16>, vector<64x192xbf16>, vector<9x192xf32> -> vector<9x192xf32>
    %32 = vector.broadcast %3 : vector<1x192xf32> to vector<9x192xf32>
    %33 = arith.addf %31, %32 : vector<9x192xf32>
    %34 = vector.extract_strided_slice %33 {offsets = [0, 0], sizes = [9, 8], strides = [1, 1]} : vector<9x192xf32> to vector<9x8xf32>
    %35 = vector.extract_strided_slice %33 {offsets = [0, 64], sizes = [9, 8], strides = [1, 1]} : vector<9x192xf32> to vector<9x8xf32>
    %36 = vector.extract_strided_slice %33 {offsets = [0, 128], sizes = [9, 8], strides = [1, 1]} : vector<9x192xf32> to vector<9x8xf32>
    %cst_19 = arith.constant dense<0.000000e+00> : vector<9x9xf32>
    %37 = tpu.matmul %34, %35, %cst_19 {dimension_numbers = #tpu.dot_dimension_numbers<[1], [1], [0], [0], [0, 0, 1, 0], [], []>} : vector<9x8xf32>, vector<9x8xf32>, vector<9x9xf32> -> vector<9x9xf32>
    %cst_20 = arith.constant dense<0xFF800000> : vector<9xf32>
    %38 = vector.multi_reduction <maximumf>, %37, %cst_20 [1] : vector<9x9xf32> to vector<9xf32>
    %39 = vector.shape_cast %38 : vector<9xf32> to vector<9x1xf32>
    %40 = vector.broadcast %39 : vector<9x1xf32> to vector<9x9xf32>
    %41 = arith.subf %37, %40 : vector<9x9xf32>
    %42 = math.exp %41 : vector<9x9xf32>
    %cst_21 = arith.constant dense<0.000000e+00> : vector<9xf32>
    %43 = vector.multi_reduction <add>, %42, %cst_21 [1] : vector<9x9xf32> to vector<9xf32>
    %44 = vector.shape_cast %43 : vector<9xf32> to vector<9x1xf32>
    %cst_22 = arith.constant dense<0.000000e+00> : vector<9x8xf32>
    %45 = tpu.matmul %42, %36, %cst_22 {dimension_numbers = #tpu.dot_dimension_numbers<[1], [0], [0], [1], [0, 0, 1, 1], [], []>} : vector<9x9xf32>, vector<9x8xf32>, vector<9x8xf32> -> vector<9x8xf32>
    %46 = tpu.reciprocal %44 {approx = true} : vector<9x1xf32> -> vector<9x1xf32>
    %cst_23 = arith.constant 1.250000e-01 : f32
    %47 = vector.broadcast %cst_23 : f32 to vector<9x1xf32>
    %48 = arith.mulf %46, %47 : vector<9x1xf32>
    %49 = vector.broadcast %48 : vector<9x1xf32> to vector<9x8xf32>
    %50 = arith.mulf %45, %49 : vector<9x8xf32>
    %51 = vector.extract_strided_slice %33 {offsets = [0, 8], sizes = [9, 8], strides = [1, 1]} : vector<9x192xf32> to vector<9x8xf32>
    %52 = vector.extract_strided_slice %33 {offsets = [0, 72], sizes = [9, 8], strides = [1, 1]} : vector<9x192xf32> to vector<9x8xf32>
    %53 = vector.extract_strided_slice %33 {offsets = [0, 136], sizes = [9, 8], strides = [1, 1]} : vector<9x192xf32> to vector<9x8xf32>
    %cst_24 = arith.constant dense<0.000000e+00> : vector<9x9xf32>
    %54 = tpu.matmul %51, %52, %cst_24 {dimension_numbers = #tpu.dot_dimension_numbers<[1], [1], [0], [0], [0, 0, 1, 0], [], []>} : vector<9x8xf32>, vector<9x8xf32>, vector<9x9xf32> -> vector<9x9xf32>
    %cst_25 = arith.constant dense<0xFF800000> : vector<9xf32>
    %55 = vector.multi_reduction <maximumf>, %54, %cst_25 [1] : vector<9x9xf32> to vector<9xf32>
    %56 = vector.shape_cast %55 : vector<9xf32> to vector<9x1xf32>
    %57 = vector.broadcast %56 : vector<9x1xf32> to vector<9x9xf32>
    %58 = arith.subf %54, %57 : vector<9x9xf32>
    %59 = math.exp %58 : vector<9x9xf32>
    %cst_26 = arith.constant dense<0.000000e+00> : vector<9xf32>
    %60 = vector.multi_reduction <add>, %59, %cst_26 [1] : vector<9x9xf32> to vector<9xf32>
    %61 = vector.shape_cast %60 : vector<9xf32> to vector<9x1xf32>
    %cst_27 = arith.constant dense<0.000000e+00> : vector<9x8xf32>
    %62 = tpu.matmul %59, %53, %cst_27 {dimension_numbers = #tpu.dot_dimension_numbers<[1], [0], [0], [1], [0, 0, 1, 1], [], []>} : vector<9x9xf32>, vector<9x8xf32>, vector<9x8xf32> -> vector<9x8xf32>
    %63 = tpu.reciprocal %61 {approx = true} : vector<9x1xf32> -> vector<9x1xf32>
    %cst_28 = arith.constant 1.250000e-01 : f32
    %64 = vector.broadcast %cst_28 : f32 to vector<9x1xf32>
    %65 = arith.mulf %63, %64 : vector<9x1xf32>
    %66 = vector.broadcast %65 : vector<9x1xf32> to vector<9x8xf32>
    %67 = arith.mulf %62, %66 : vector<9x8xf32>
    %68 = vector.extract_strided_slice %33 {offsets = [0, 16], sizes = [9, 8], strides = [1, 1]} : vector<9x192xf32> to vector<9x8xf32>
    %69 = vector.extract_strided_slice %33 {offsets = [0, 80], sizes = [9, 8], strides = [1, 1]} : vector<9x192xf32> to vector<9x8xf32>
    %70 = vector.extract_strided_slice %33 {offsets = [0, 144], sizes = [9, 8], strides = [1, 1]} : vector<9x192xf32> to vector<9x8xf32>
    %cst_29 = arith.constant dense<0.000000e+00> : vector<9x9xf32>
    %71 = tpu.matmul %68, %69, %cst_29 {dimension_numbers = #tpu.dot_dimension_numbers<[1], [1], [0], [0], [0, 0, 1, 0], [], []>} : vector<9x8xf32>, vector<9x8xf32>, vector<9x9xf32> -> vector<9x9xf32>
    %cst_30 = arith.constant dense<0xFF800000> : vector<9xf32>
    %72 = vector.multi_reduction <maximumf>, %71, %cst_30 [1] : vector<9x9xf32> to vector<9xf32>
    %73 = vector.shape_cast %72 : vector<9xf32> to vector<9x1xf32>
    %74 = vector.broadcast %73 : vector<9x1xf32> to vector<9x9xf32>
    %75 = arith.subf %71, %74 : vector<9x9xf32>
    %76 = math.exp %75 : vector<9x9xf32>
    %cst_31 = arith.constant dense<0.000000e+00> : vector<9xf32>
    %77 = vector.multi_reduction <add>, %76, %cst_31 [1] : vector<9x9xf32> to vector<9xf32>
    %78 = vector.shape_cast %77 : vector<9xf32> to vector<9x1xf32>
    %cst_32 = arith.constant dense<0.000000e+00> : vector<9x8xf32>
    %79 = tpu.matmul %76, %70, %cst_32 {dimension_numbers = #tpu.dot_dimension_numbers<[1], [0], [0], [1], [0, 0, 1, 1], [], []>} : vector<9x9xf32>, vector<9x8xf32>, vector<9x8xf32> -> vector<9x8xf32>
    %80 = tpu.reciprocal %78 {approx = true} : vector<9x1xf32> -> vector<9x1xf32>
    %cst_33 = arith.constant 1.250000e-01 : f32
    %81 = vector.broadcast %cst_33 : f32 to vector<9x1xf32>
    %82 = arith.mulf %80, %81 : vector<9x1xf32>
    %83 = vector.broadcast %82 : vector<9x1xf32> to vector<9x8xf32>
    %84 = arith.mulf %79, %83 : vector<9x8xf32>
    %85 = vector.extract_strided_slice %33 {offsets = [0, 24], sizes = [9, 8], strides = [1, 1]} : vector<9x192xf32> to vector<9x8xf32>
    %86 = vector.extract_strided_slice %33 {offsets = [0, 88], sizes = [9, 8], strides = [1, 1]} : vector<9x192xf32> to vector<9x8xf32>
    %87 = vector.extract_strided_slice %33 {offsets = [0, 152], sizes = [9, 8], strides = [1, 1]} : vector<9x192xf32> to vector<9x8xf32>
    %cst_34 = arith.constant dense<0.000000e+00> : vector<9x9xf32>
    %88 = tpu.matmul %85, %86, %cst_34 {dimension_numbers = #tpu.dot_dimension_numbers<[1], [1], [0], [0], [0, 0, 1, 0], [], []>} : vector<9x8xf32>, vector<9x8xf32>, vector<9x9xf32> -> vector<9x9xf32>
    %cst_35 = arith.constant dense<0xFF800000> : vector<9xf32>
    %89 = vector.multi_reduction <maximumf>, %88, %cst_35 [1] : vector<9x9xf32> to vector<9xf32>
    %90 = vector.shape_cast %89 : vector<9xf32> to vector<9x1xf32>
    %91 = vector.broadcast %90 : vector<9x1xf32> to vector<9x9xf32>
    %92 = arith.subf %88, %91 : vector<9x9xf32>
    %93 = math.exp %92 : vector<9x9xf32>
    %cst_36 = arith.constant dense<0.000000e+00> : vector<9xf32>
    %94 = vector.multi_reduction <add>, %93, %cst_36 [1] : vector<9x9xf32> to vector<9xf32>
    %95 = vector.shape_cast %94 : vector<9xf32> to vector<9x1xf32>
    %cst_37 = arith.constant dense<0.000000e+00> : vector<9x8xf32>
    %96 = tpu.matmul %93, %87, %cst_37 {dimension_numbers = #tpu.dot_dimension_numbers<[1], [0], [0], [1], [0, 0, 1, 1], [], []>} : vector<9x9xf32>, vector<9x8xf32>, vector<9x8xf32> -> vector<9x8xf32>
    %97 = tpu.reciprocal %95 {approx = true} : vector<9x1xf32> -> vector<9x1xf32>
    %cst_38 = arith.constant 1.250000e-01 : f32
    %98 = vector.broadcast %cst_38 : f32 to vector<9x1xf32>
    %99 = arith.mulf %97, %98 : vector<9x1xf32>
    %100 = vector.broadcast %99 : vector<9x1xf32> to vector<9x8xf32>
    %101 = arith.mulf %96, %100 : vector<9x8xf32>
    %102 = vector.extract_strided_slice %33 {offsets = [0, 32], sizes = [9, 8], strides = [1, 1]} : vector<9x192xf32> to vector<9x8xf32>
    %103 = vector.extract_strided_slice %33 {offsets = [0, 96], sizes = [9, 8], strides = [1, 1]} : vector<9x192xf32> to vector<9x8xf32>
    %104 = vector.extract_strided_slice %33 {offsets = [0, 160], sizes = [9, 8], strides = [1, 1]} : vector<9x192xf32> to vector<9x8xf32>
    %cst_39 = arith.constant dense<0.000000e+00> : vector<9x9xf32>
    %105 = tpu.matmul %102, %103, %cst_39 {dimension_numbers = #tpu.dot_dimension_numbers<[1], [1], [0], [0], [0, 0, 1, 0], [], []>} : vector<9x8xf32>, vector<9x8xf32>, vector<9x9xf32> -> vector<9x9xf32>
    %cst_40 = arith.constant dense<0xFF800000> : vector<9xf32>
    %106 = vector.multi_reduction <maximumf>, %105, %cst_40 [1] : vector<9x9xf32> to vector<9xf32>
    %107 = vector.shape_cast %106 : vector<9xf32> to vector<9x1xf32>
    %108 = vector.broadcast %107 : vector<9x1xf32> to vector<9x9xf32>
    %109 = arith.subf %105, %108 : vector<9x9xf32>
    %110 = math.exp %109 : vector<9x9xf32>
    %cst_41 = arith.constant dense<0.000000e+00> : vector<9xf32>
    %111 = vector.multi_reduction <add>, %110, %cst_41 [1] : vector<9x9xf32> to vector<9xf32>
    %112 = vector.shape_cast %111 : vector<9xf32> to vector<9x1xf32>
    %cst_42 = arith.constant dense<0.000000e+00> : vector<9x8xf32>
    %113 = tpu.matmul %110, %104, %cst_42 {dimension_numbers = #tpu.dot_dimension_numbers<[1], [0], [0], [1], [0, 0, 1, 1], [], []>} : vector<9x9xf32>, vector<9x8xf32>, vector<9x8xf32> -> vector<9x8xf32>
    %114 = tpu.reciprocal %112 {approx = true} : vector<9x1xf32> -> vector<9x1xf32>
    %cst_43 = arith.constant 1.250000e-01 : f32
    %115 = vector.broadcast %cst_43 : f32 to vector<9x1xf32>
    %116 = arith.mulf %114, %115 : vector<9x1xf32>
    %117 = vector.broadcast %116 : vector<9x1xf32> to vector<9x8xf32>
    %118 = arith.mulf %113, %117 : vector<9x8xf32>
    %119 = vector.extract_strided_slice %33 {offsets = [0, 40], sizes = [9, 8], strides = [1, 1]} : vector<9x192xf32> to vector<9x8xf32>
    %120 = vector.extract_strided_slice %33 {offsets = [0, 104], sizes = [9, 8], strides = [1, 1]} : vector<9x192xf32> to vector<9x8xf32>
    %121 = vector.extract_strided_slice %33 {offsets = [0, 168], sizes = [9, 8], strides = [1, 1]} : vector<9x192xf32> to vector<9x8xf32>
    %cst_44 = arith.constant dense<0.000000e+00> : vector<9x9xf32>
    %122 = tpu.matmul %119, %120, %cst_44 {dimension_numbers = #tpu.dot_dimension_numbers<[1], [1], [0], [0], [0, 0, 1, 0], [], []>} : vector<9x8xf32>, vector<9x8xf32>, vector<9x9xf32> -> vector<9x9xf32>
    %cst_45 = arith.constant dense<0xFF800000> : vector<9xf32>
    %123 = vector.multi_reduction <maximumf>, %122, %cst_45 [1] : vector<9x9xf32> to vector<9xf32>
    %124 = vector.shape_cast %123 : vector<9xf32> to vector<9x1xf32>
    %125 = vector.broadcast %124 : vector<9x1xf32> to vector<9x9xf32>
    %126 = arith.subf %122, %125 : vector<9x9xf32>
    %127 = math.exp %126 : vector<9x9xf32>
    %cst_46 = arith.constant dense<0.000000e+00> : vector<9xf32>
    %128 = vector.multi_reduction <add>, %127, %cst_46 [1] : vector<9x9xf32> to vector<9xf32>
    %129 = vector.shape_cast %128 : vector<9xf32> to vector<9x1xf32>
    %cst_47 = arith.constant dense<0.000000e+00> : vector<9x8xf32>
    %130 = tpu.matmul %127, %121, %cst_47 {dimension_numbers = #tpu.dot_dimension_numbers<[1], [0], [0], [1], [0, 0, 1, 1], [], []>} : vector<9x9xf32>, vector<9x8xf32>, vector<9x8xf32> -> vector<9x8xf32>
    %131 = tpu.reciprocal %129 {approx = true} : vector<9x1xf32> -> vector<9x1xf32>
    %cst_48 = arith.constant 1.250000e-01 : f32
    %132 = vector.broadcast %cst_48 : f32 to vector<9x1xf32>
    %133 = arith.mulf %131, %132 : vector<9x1xf32>
    %134 = vector.broadcast %133 : vector<9x1xf32> to vector<9x8xf32>
    %135 = arith.mulf %130, %134 : vector<9x8xf32>
    %136 = vector.extract_strided_slice %33 {offsets = [0, 48], sizes = [9, 8], strides = [1, 1]} : vector<9x192xf32> to vector<9x8xf32>
    %137 = vector.extract_strided_slice %33 {offsets = [0, 112], sizes = [9, 8], strides = [1, 1]} : vector<9x192xf32> to vector<9x8xf32>
    %138 = vector.extract_strided_slice %33 {offsets = [0, 176], sizes = [9, 8], strides = [1, 1]} : vector<9x192xf32> to vector<9x8xf32>
    %cst_49 = arith.constant dense<0.000000e+00> : vector<9x9xf32>
    %139 = tpu.matmul %136, %137, %cst_49 {dimension_numbers = #tpu.dot_dimension_numbers<[1], [1], [0], [0], [0, 0, 1, 0], [], []>} : vector<9x8xf32>, vector<9x8xf32>, vector<9x9xf32> -> vector<9x9xf32>
    %cst_50 = arith.constant dense<0xFF800000> : vector<9xf32>
    %140 = vector.multi_reduction <maximumf>, %139, %cst_50 [1] : vector<9x9xf32> to vector<9xf32>
    %141 = vector.shape_cast %140 : vector<9xf32> to vector<9x1xf32>
    %142 = vector.broadcast %141 : vector<9x1xf32> to vector<9x9xf32>
    %143 = arith.subf %139, %142 : vector<9x9xf32>
    %144 = math.exp %143 : vector<9x9xf32>
    %cst_51 = arith.constant dense<0.000000e+00> : vector<9xf32>
    %145 = vector.multi_reduction <add>, %144, %cst_51 [1] : vector<9x9xf32> to vector<9xf32>
    %146 = vector.shape_cast %145 : vector<9xf32> to vector<9x1xf32>
    %cst_52 = arith.constant dense<0.000000e+00> : vector<9x8xf32>
    %147 = tpu.matmul %144, %138, %cst_52 {dimension_numbers = #tpu.dot_dimension_numbers<[1], [0], [0], [1], [0, 0, 1, 1], [], []>} : vector<9x9xf32>, vector<9x8xf32>, vector<9x8xf32> -> vector<9x8xf32>
    %148 = tpu.reciprocal %146 {approx = true} : vector<9x1xf32> -> vector<9x1xf32>
    %cst_53 = arith.constant 1.250000e-01 : f32
    %149 = vector.broadcast %cst_53 : f32 to vector<9x1xf32>
    %150 = arith.mulf %148, %149 : vector<9x1xf32>
    %151 = vector.broadcast %150 : vector<9x1xf32> to vector<9x8xf32>
    %152 = arith.mulf %147, %151 : vector<9x8xf32>
    %153 = vector.extract_strided_slice %33 {offsets = [0, 56], sizes = [9, 8], strides = [1, 1]} : vector<9x192xf32> to vector<9x8xf32>
    %154 = vector.extract_strided_slice %33 {offsets = [0, 120], sizes = [9, 8], strides = [1, 1]} : vector<9x192xf32> to vector<9x8xf32>
    %155 = vector.extract_strided_slice %33 {offsets = [0, 184], sizes = [9, 8], strides = [1, 1]} : vector<9x192xf32> to vector<9x8xf32>
    %cst_54 = arith.constant dense<0.000000e+00> : vector<9x9xf32>
    %156 = tpu.matmul %153, %154, %cst_54 {dimension_numbers = #tpu.dot_dimension_numbers<[1], [1], [0], [0], [0, 0, 1, 0], [], []>} : vector<9x8xf32>, vector<9x8xf32>, vector<9x9xf32> -> vector<9x9xf32>
    %cst_55 = arith.constant dense<0xFF800000> : vector<9xf32>
    %157 = vector.multi_reduction <maximumf>, %156, %cst_55 [1] : vector<9x9xf32> to vector<9xf32>
    %158 = vector.shape_cast %157 : vector<9xf32> to vector<9x1xf32>
    %159 = vector.broadcast %158 : vector<9x1xf32> to vector<9x9xf32>
    %160 = arith.subf %156, %159 : vector<9x9xf32>
    %161 = math.exp %160 : vector<9x9xf32>
    %cst_56 = arith.constant dense<0.000000e+00> : vector<9xf32>
    %162 = vector.multi_reduction <add>, %161, %cst_56 [1] : vector<9x9xf32> to vector<9xf32>
    %163 = vector.shape_cast %162 : vector<9xf32> to vector<9x1xf32>
    %cst_57 = arith.constant dense<0.000000e+00> : vector<9x8xf32>
    %164 = tpu.matmul %161, %155, %cst_57 {dimension_numbers = #tpu.dot_dimension_numbers<[1], [0], [0], [1], [0, 0, 1, 1], [], []>} : vector<9x9xf32>, vector<9x8xf32>, vector<9x8xf32> -> vector<9x8xf32>
    %165 = tpu.reciprocal %163 {approx = true} : vector<9x1xf32> -> vector<9x1xf32>
    %cst_58 = arith.constant 1.250000e-01 : f32
    %166 = vector.broadcast %cst_58 : f32 to vector<9x1xf32>
    %167 = arith.mulf %165, %166 : vector<9x1xf32>
    %168 = vector.broadcast %167 : vector<9x1xf32> to vector<9x8xf32>
    %169 = arith.mulf %164, %168 : vector<9x8xf32>
    %170 = tpu.concatenate %50, %67, %84, %101, %118, %135, %152, %169 in 1 : vector<9x8xf32>, vector<9x8xf32>, vector<9x8xf32>, vector<9x8xf32>, vector<9x8xf32>, vector<9x8xf32>, vector<9x8xf32>, vector<9x8xf32> -> vector<9x64xf32>
    %171 = arith.truncf %170 : vector<9x64xf32> to vector<9x64xbf16>
    %cst_59 = arith.constant dense<0.000000e+00> : vector<9x64xf32>
    %172 = tpu.matmul %171, %4, %cst_59 {dimension_numbers = #tpu.dot_dimension_numbers<[1], [0], [0], [1], [0, 0, 1, 1], [], []>} : vector<9x64xbf16>, vector<64x64xbf16>, vector<9x64xf32> -> vector<9x64xf32>
    %173 = vector.broadcast %5 : vector<1x64xf32> to vector<9x64xf32>
    %174 = arith.addf %172, %173 : vector<9x64xf32>
    %175 = arith.addf %174, %7 : vector<9x64xf32>
    %c0_60 = arith.constant 0 : index
    %c0_61 = arith.constant 0 : index
    %c0_62 = arith.constant 0 : index
    %176 = vector.load %arg8[%c0_60, %c0_61, %c0_62] : memref<1x9x64xf32, #tpu.memory_space<vmem>>, vector<1x9x64xf32>
    %177 = vector.shape_cast %176 : vector<1x9x64xf32> to vector<9x64xf32>
    %178 = vector.shape_cast %175 : vector<9x64xf32> to vector<1x9x64xf32>
    tpu.vector_store %arg8[%c0_60, %c0_61, %c0_62], %178 {strides = array<i32>} : memref<1x9x64xf32, #tpu.memory_space<vmem>>, vector<1x9x64xf32>,
    return
  }
  func.func @transform_0(%arg0: i32) -> (i32, i32, i32) {
    %c0_i32 = arith.constant 0 : i32
    %c0_i32_0 = arith.constant 0 : i32
    %c0_i32_1 = arith.constant 0 : i32
    return %arg0, %c0_i32, %c0_i32_0 : i32, i32, i32
  }
  func.func @transform_1(%arg0: i32) -> (i32, i32) {
    %c0_i32 = arith.constant 0 : i32
    %c0_i32_0 = arith.constant 0 : i32
    %c0_i32_1 = arith.constant 0 : i32
    return %c0_i32, %c0_i32_0 : i32, i32
  }
  func.func @transform_2(%arg0: i32) -> (i32, i32) {
    %c0_i32 = arith.constant 0 : i32
    %c0_i32_0 = arith.constant 0 : i32
    %c0_i32_1 = arith.constant 0 : i32
    return %c0_i32, %c0_i32_0 : i32, i32
  }
  func.func @transform_3(%arg0: i32) -> (i32, i32) {
    %c0_i32 = arith.constant 0 : i32
    %c0_i32_0 = arith.constant 0 : i32
    %c0_i32_1 = arith.constant 0 : i32
    return %c0_i32, %c0_i32_0 : i32, i32
  }
  func.func @transform_4(%arg0: i32) -> (i32, i32) {
    %c0_i32 = arith.constant 0 : i32
    %c0_i32_0 = arith.constant 0 : i32
    %c0_i32_1 = arith.constant 0 : i32
    return %c0_i32, %c0_i32_0 : i32, i32
  }
  func.func @transform_5(%arg0: i32) -> (i32, i32) {
    %c0_i32 = arith.constant 0 : i32
    %c0_i32_0 = arith.constant 0 : i32
    %c0_i32_1 = arith.constant 0 : i32
    return %c0_i32, %c0_i32_0 : i32, i32
  }
  func.func @transform_6(%arg0: i32) -> (i32, i32) {
    %c0_i32 = arith.constant 0 : i32
    %c0_i32_0 = arith.constant 0 : i32
    %c0_i32_1 = arith.constant 0 : i32
    return %c0_i32, %c0_i32_0 : i32, i32
  }
  func.func @transform_7(%arg0: i32) -> (i32, i32, i32) {
    %c0_i32 = arith.constant 0 : i32
    %c0_i32_0 = arith.constant 0 : i32
    %c0_i32_1 = arith.constant 0 : i32
    return %arg0, %c0_i32, %c0_i32_0 : i32, i32, i32
  }
}

module attributes {stable_mosaic.version = 11 : i64} {
  func.func @kernel(%arg0: i32, %arg1: memref<1x9x64xf32, #tpu.memory_space<vmem>>, %arg2: memref<1x64xf32, #tpu.memory_space<vmem>>, %arg3: memref<1x64xf32, #tpu.memory_space<vmem>>, %arg4: memref<64x256xbf16, #tpu.memory_space<vmem>>, %arg5: memref<1x256xf32, #tpu.memory_space<vmem>>, %arg6: memref<256x64xbf16, #tpu.memory_space<vmem>>, %arg7: memref<1x64xf32, #tpu.memory_space<vmem>>, %arg8: memref<1x9x64xf32, #tpu.memory_space<vmem>>) attributes {dimension_semantics = [#tpu.dimension_semantics<parallel>], iteration_bounds = array<i64: 2>, scalar_prefetch = 0 : i64, scratch_operands = 0 : i64, tpu.core_type = #tpu.core_type<tc>, window_params = [{transform_indices = @transform_0, window_bounds = array<i64: 1, 9, 64>}, {pipeline_mode = #tpu.pipeline_mode<synchronous>, transform_indices = @transform_1, window_bounds = array<i64: 1, 64>}, {pipeline_mode = #tpu.pipeline_mode<synchronous>, transform_indices = @transform_2, window_bounds = array<i64: 1, 64>}, {pipeline_mode = #tpu.pipeline_mode<synchronous>, transform_indices = @transform_3, window_bounds = array<i64: 64, 256>}, {pipeline_mode = #tpu.pipeline_mode<synchronous>, transform_indices = @transform_4, window_bounds = array<i64: 1, 256>}, {pipeline_mode = #tpu.pipeline_mode<synchronous>, transform_indices = @transform_5, window_bounds = array<i64: 256, 64>}, {pipeline_mode = #tpu.pipeline_mode<synchronous>, transform_indices = @transform_6, window_bounds = array<i64: 1, 64>}, {transform_indices = @transform_7, window_bounds = array<i64: 1, 9, 64>}]} {
    %c0 = arith.constant 0 : index
    %c0_0 = arith.constant 0 : index
    %0 = vector.load %arg2[%c0, %c0_0] : memref<1x64xf32, #tpu.memory_space<vmem>>, vector<1x64xf32>
    %c0_1 = arith.constant 0 : index
    %c0_2 = arith.constant 0 : index
    %1 = vector.load %arg3[%c0_1, %c0_2] : memref<1x64xf32, #tpu.memory_space<vmem>>, vector<1x64xf32>
    %c0_3 = arith.constant 0 : index
    %c0_4 = arith.constant 0 : index
    %2 = vector.load %arg4[%c0_3, %c0_4] : memref<64x256xbf16, #tpu.memory_space<vmem>>, vector<64x256xbf16>
    %c0_5 = arith.constant 0 : index
    %c0_6 = arith.constant 0 : index
    %3 = vector.load %arg5[%c0_5, %c0_6] : memref<1x256xf32, #tpu.memory_space<vmem>>, vector<1x256xf32>
    %c0_7 = arith.constant 0 : index
    %c0_8 = arith.constant 0 : index
    %4 = vector.load %arg6[%c0_7, %c0_8] : memref<256x64xbf16, #tpu.memory_space<vmem>>, vector<256x64xbf16>
    %c0_9 = arith.constant 0 : index
    %c0_10 = arith.constant 0 : index
    %5 = vector.load %arg7[%c0_9, %c0_10] : memref<1x64xf32, #tpu.memory_space<vmem>>, vector<1x64xf32>
    %c0_11 = arith.constant 0 : index
    %c0_12 = arith.constant 0 : index
    %c0_13 = arith.constant 0 : index
    %6 = vector.load %arg1[%c0_11, %c0_12, %c0_13] : memref<1x9x64xf32, #tpu.memory_space<vmem>>, vector<1x9x64xf32>
    %7 = vector.shape_cast %6 : vector<1x9x64xf32> to vector<9x64xf32>
    %cst = arith.constant dense<0.000000e+00> : vector<9xf32>
    %8 = vector.multi_reduction <add>, %7, %cst [1] : vector<9x64xf32> to vector<9xf32>
    %9 = vector.shape_cast %8 : vector<9xf32> to vector<9x1xf32>
    %cst_14 = arith.constant 6.400000e+01 : f32
    %10 = vector.broadcast %cst_14 : f32 to vector<9x1xf32>
    %11 = arith.divf %9, %10 : vector<9x1xf32>
    %12 = vector.broadcast %11 : vector<9x1xf32> to vector<9x64xf32>
    %13 = arith.subf %7, %12 : vector<9x64xf32>
    %14 = arith.mulf %13, %13 : vector<9x64xf32>
    %cst_15 = arith.constant dense<0.000000e+00> : vector<9xf32>
    %15 = vector.multi_reduction <add>, %14, %cst_15 [1] : vector<9x64xf32> to vector<9xf32>
    %16 = vector.shape_cast %15 : vector<9xf32> to vector<9x1xf32>
    %cst_16 = arith.constant 6.400000e+01 : f32
    %17 = vector.broadcast %cst_16 : f32 to vector<9x1xf32>
    %18 = arith.divf %16, %17 : vector<9x1xf32>
    %19 = vector.broadcast %11 : vector<9x1xf32> to vector<9x64xf32>
    %20 = arith.subf %7, %19 : vector<9x64xf32>
    %cst_17 = arith.constant 9.99999974E-6 : f32
    %21 = vector.broadcast %cst_17 : f32 to vector<9x1xf32>
    %22 = arith.addf %18, %21 : vector<9x1xf32>
    %23 = math.rsqrt %22 : vector<9x1xf32>
    %24 = vector.broadcast %23 : vector<9x1xf32> to vector<9x64xf32>
    %25 = arith.mulf %20, %24 : vector<9x64xf32>
    %26 = vector.broadcast %0 : vector<1x64xf32> to vector<9x64xf32>
    %27 = arith.mulf %25, %26 : vector<9x64xf32>
    %28 = vector.broadcast %1 : vector<1x64xf32> to vector<9x64xf32>
    %29 = arith.addf %27, %28 : vector<9x64xf32>
    %30 = arith.truncf %29 : vector<9x64xf32> to vector<9x64xbf16>
    %cst_18 = arith.constant dense<0.000000e+00> : vector<9x256xf32>
    %31 = tpu.matmul %30, %2, %cst_18 {dimension_numbers = #tpu.dot_dimension_numbers<[1], [0], [0], [1], [0, 0, 1, 1], [], []>} : vector<9x64xbf16>, vector<64x256xbf16>, vector<9x256xf32> -> vector<9x256xf32>
    %32 = vector.broadcast %3 : vector<1x256xf32> to vector<9x256xf32>
    %33 = arith.addf %31, %32 : vector<9x256xf32>
    %cst_19 = arith.constant 5.000000e-01 : f32
    %34 = vector.broadcast %cst_19 : f32 to vector<9x256xf32>
    %35 = arith.mulf %34, %33 : vector<9x256xf32>
    %cst_20 = arith.constant 0.707106769 : f32
    %36 = vector.broadcast %cst_20 : f32 to vector<9x256xf32>
    %37 = arith.mulf %33, %36 : vector<9x256xf32>
    %cst_21 = arith.constant 0.000000e+00 : f32
    %38 = vector.broadcast %cst_21 : f32 to vector<9x256xf32>
    %39 = arith.cmpf olt, %37, %38 : vector<9x256xf32>
    %cst_22 = arith.constant -1.000000e+00 : f32
    %cst_23 = arith.constant 1.000000e+00 : f32
    %40 = vector.broadcast %cst_22 : f32 to vector<9x256xf32>
    %41 = vector.broadcast %cst_23 : f32 to vector<9x256xf32>
    %42 = arith.select %39, %40, %41 : vector<9x256xi1>, vector<9x256xf32>
    %43 = math.absf %37 : vector<9x256xf32>
    %cst_24 = arith.constant 0.327591091 : f32
    %44 = vector.broadcast %cst_24 : f32 to vector<9x256xf32>
    %45 = arith.mulf %44, %43 : vector<9x256xf32>
    %cst_25 = arith.constant 1.000000e+00 : f32
    %46 = vector.broadcast %cst_25 : f32 to vector<9x256xf32>
    %47 = arith.addf %46, %45 : vector<9x256xf32>
    %cst_26 = arith.constant 1.000000e+00 : f32
    %48 = vector.broadcast %cst_26 : f32 to vector<9x256xf32>
    %49 = arith.divf %48, %47 : vector<9x256xf32>
    %cst_27 = arith.constant 1.06140542 : f32
    %50 = vector.broadcast %cst_27 : f32 to vector<9x256xf32>
    %51 = arith.mulf %50, %49 : vector<9x256xf32>
    %cst_28 = arith.constant -1.45315206 : f32
    %52 = vector.broadcast %cst_28 : f32 to vector<9x256xf32>
    %53 = arith.addf %51, %52 : vector<9x256xf32>
    %54 = arith.mulf %53, %49 : vector<9x256xf32>
    %cst_29 = arith.constant 1.42141378 : f32
    %55 = vector.broadcast %cst_29 : f32 to vector<9x256xf32>
    %56 = arith.addf %54, %55 : vector<9x256xf32>
    %57 = arith.mulf %56, %49 : vector<9x256xf32>
    %cst_30 = arith.constant -0.284496725 : f32
    %58 = vector.broadcast %cst_30 : f32 to vector<9x256xf32>
    %59 = arith.addf %57, %58 : vector<9x256xf32>
    %60 = arith.mulf %59, %49 : vector<9x256xf32>
    %cst_31 = arith.constant 0.254829586 : f32
    %61 = vector.broadcast %cst_31 : f32 to vector<9x256xf32>
    %62 = arith.addf %60, %61 : vector<9x256xf32>
    %63 = arith.mulf %62, %49 : vector<9x256xf32>
    %cst_32 = arith.constant 0.000000e+00 : f32
    %64 = vector.broadcast %cst_32 : f32 to vector<9x256xf32>
    %65 = arith.subf %64, %43 : vector<9x256xf32>
    %66 = arith.mulf %65, %43 : vector<9x256xf32>
    %67 = math.exp %66 : vector<9x256xf32>
    %68 = arith.mulf %63, %67 : vector<9x256xf32>
    %cst_33 = arith.constant 1.000000e+00 : f32
    %69 = vector.broadcast %cst_33 : f32 to vector<9x256xf32>
    %70 = arith.subf %69, %68 : vector<9x256xf32>
    %71 = arith.mulf %42, %70 : vector<9x256xf32>
    %cst_34 = arith.constant 1.000000e+00 : f32
    %72 = vector.broadcast %cst_34 : f32 to vector<9x256xf32>
    %73 = arith.addf %72, %71 : vector<9x256xf32>
    %74 = arith.mulf %35, %73 : vector<9x256xf32>
    %75 = arith.truncf %74 : vector<9x256xf32> to vector<9x256xbf16>
    %cst_35 = arith.constant dense<0.000000e+00> : vector<9x64xf32>
    %76 = tpu.matmul %75, %4, %cst_35 {dimension_numbers = #tpu.dot_dimension_numbers<[1], [0], [0], [1], [0, 0, 1, 1], [], []>} : vector<9x256xbf16>, vector<256x64xbf16>, vector<9x64xf32> -> vector<9x64xf32>
    %77 = vector.broadcast %5 : vector<1x64xf32> to vector<9x64xf32>
    %78 = arith.addf %76, %77 : vector<9x64xf32>
    %79 = arith.addf %78, %7 : vector<9x64xf32>
    %c0_36 = arith.constant 0 : index
    %c0_37 = arith.constant 0 : index
    %c0_38 = arith.constant 0 : index
    %80 = vector.load %arg8[%c0_36, %c0_37, %c0_38] : memref<1x9x64xf32, #tpu.memory_space<vmem>>, vector<1x9x64xf32>
    %81 = vector.shape_cast %80 : vector<1x9x64xf32> to vector<9x64xf32>
    %82 = vector.shape_cast %79 : vector<9x64xf32> to vector<1x9x64xf32>
    tpu.vector_store %arg8[%c0_36, %c0_37, %c0_38], %82 {strides = array<i32>} : memref<1x9x64xf32, #tpu.memory_space<vmem>>, vector<1x9x64xf32>,
    return
  }
  func.func @transform_0(%arg0: i32) -> (i32, i32, i32) {
    %c0_i32 = arith.constant 0 : i32
    %c0_i32_0 = arith.constant 0 : i32
    %c0_i32_1 = arith.constant 0 : i32
    return %arg0, %c0_i32, %c0_i32_0 : i32, i32, i32
  }
  func.func @transform_1(%arg0: i32) -> (i32, i32) {
    %c0_i32 = arith.constant 0 : i32
    %c0_i32_0 = arith.constant 0 : i32
    %c0_i32_1 = arith.constant 0 : i32
    return %c0_i32, %c0_i32_0 : i32, i32
  }
  func.func @transform_2(%arg0: i32) -> (i32, i32) {
    %c0_i32 = arith.constant 0 : i32
    %c0_i32_0 = arith.constant 0 : i32
    %c0_i32_1 = arith.constant 0 : i32
    return %c0_i32, %c0_i32_0 : i32, i32
  }
  func.func @transform_3(%arg0: i32) -> (i32, i32) {
    %c0_i32 = arith.constant 0 : i32
    %c0_i32_0 = arith.constant 0 : i32
    %c0_i32_1 = arith.constant 0 : i32
    return %c0_i32, %c0_i32_0 : i32, i32
  }
  func.func @transform_4(%arg0: i32) -> (i32, i32) {
    %c0_i32 = arith.constant 0 : i32
    %c0_i32_0 = arith.constant 0 : i32
    %c0_i32_1 = arith.constant 0 : i32
    return %c0_i32, %c0_i32_0 : i32, i32
  }
  func.func @transform_5(%arg0: i32) -> (i32, i32) {
    %c0_i32 = arith.constant 0 : i32
    %c0_i32_0 = arith.constant 0 : i32
    %c0_i32_1 = arith.constant 0 : i32
    return %c0_i32, %c0_i32_0 : i32, i32
  }
  func.func @transform_6(%arg0: i32) -> (i32, i32) {
    %c0_i32 = arith.constant 0 : i32
    %c0_i32_0 = arith.constant 0 : i32
    %c0_i32_1 = arith.constant 0 : i32
    return %c0_i32, %c0_i32_0 : i32, i32
  }
  func.func @transform_7(%arg0: i32) -> (i32, i32, i32) {
    %c0_i32 = arith.constant 0 : i32
    %c0_i32_0 = arith.constant 0 : i32
    %c0_i32_1 = arith.constant 0 : i32
    return %arg0, %c0_i32, %c0_i32_0 : i32, i32, i32
  }
}

</mosaic_0001>

<llo_original>
// kernel: block.3
$region0: #{block.3}
  #allocation0 [shape = 'u32[]', space=smem, size = 0x4, offset = 0x4, fixed_abs, tag = 'smem constant byte address 0x4 - core index']
  #allocation1 [shape = 'u32[144,128]{1,0:T(1,128)}', space=vmem, size = 0x12000, scoped, tag = 'internal scratch']
  %s0 = inlined_call_operand.vmem [shape: f32[2,9,64], index: 0, kind: input, shape index: {}]
  %s1 = inlined_call_operand.vmem [shape: f32[1,64], index: 1, kind: input, shape index: {}]
  %s2 = inlined_call_operand.vmem [shape: f32[1,64], index: 2, kind: input, shape index: {}]
  %s3 = inlined_call_operand.vmem [shape: bf16[64,256], index: 3, kind: input, shape index: {}]
  %s4 = inlined_call_operand.vmem [shape: f32[1,256], index: 4, kind: input, shape index: {}]
  %s5 = inlined_call_operand.vmem [shape: bf16[256,64], index: 5, kind: input, shape index: {}]
  %s6 = inlined_call_operand.vmem [shape: f32[1,64], index: 6, kind: input, shape index: {}]
  %s7 = inlined_call_operand.vmem [shape: f32[2,9,64], index: 7, kind: output, shape index: {}]
  %s8 = sld [smem:[#allocation0]]
  $region61: #{block.3} parent=0
    _
  %s10 = ssub.s32 1, %s8
  %s11 = scalar_select 0, %s10, %s8
  loop: start=0, step=1, limit=4
  $region2: #{block.3} parent=0 // loop_pre_header
    _
  $region3: #{block.3} parent=0 // loop_header
    %s13 = sphi 0, %s17
    %p14 = scmp.ge.s32.totalorder %s13, 4
    %s23 = sphi 0, %s25
    %s26 = sphi 0, %s23
    %s27 = sphi 0, %s26
    %s43 = sphi 0, %s27
    %s47 = sphi 0, %s47
    %s49 = sphi 0, %s47
    %s50 = sphi 0, %s49
    %s64 = sphi 0, %s50
    %s68 = sphi 0, %s68
    %s70 = sphi 0, %s68
    %s71 = sphi 0, %s70
    %s85 = sphi 0, %s71
    %s89 = sphi 0, %s89
    %s91 = sphi 0, %s89
    %s92 = sphi 0, %s91
    %s106 = sphi 0, %s92
    %s110 = sphi 0, %s110
    %s112 = sphi 0, %s110
    %s113 = sphi 0, %s112
    %s127 = sphi 0, %s113
    %s131 = sphi 0, %s131
    %s133 = sphi 0, %s131
    %s134 = sphi 0, %s133
    %s148 = sphi 0, %s134
    %s152 = sphi 0, %s152
    %s154 = sphi 0, %s152
    %s155 = sphi 0, %s154
    %s169 = sphi 0, %s155
    %s175 = sphi 0, %s177
    %s178 = sphi 0, %s175
    %s179 = sphi 0, %s178
    %s195 = sphi 0, %s179
  $region4: #{block.3} parent=0 // loop_header_branch
    %16 = sbr.rel (%p14) target = $region8
  $region5: #{block.3} parent=0 // loop_body
    %s18 = ssub.s32 %s13, 1
    %s19 = ssub.s32 %s13, 2
    %s20 = sadd.s32 %s13, 1
    %s21 = ssub.s32 %s13, %s20
    %p22 = scmp.eq.s32.totalorder %s21, 0
    %s24 = sadd.s32 %s23, 1
    %s25 = scalar_select %p22, %s23, %s24
    %p28 = pneg %p22
    %p29 = scmp.eq.s32.totalorder %s13, 1
    %p30 = por %p28, %p29
    %p31 = scmp.ne.s32.totalorder %s23, %s26
    %p32 = scmp.eq.s32.totalorder %s13, 0
    %p33 = por %p31, %p32
    %p34 = scmp.ne.s32.totalorder %s23, %s26
    %p35 = scmp.eq.s32.totalorder %s18, 1
    %p36 = por %p34, %p35
    %p37 = scmp.ne.s32.totalorder %s26, %s27
    %p38 = scmp.eq.s32.totalorder %s18, 0
    %p39 = por %p37, %p38
    %p40 = scmp.ne.s32.totalorder %s26, %s27
    %p41 = scmp.eq.s32.totalorder %s19, 1
    %p42 = por %p40, %p41
    %p44 = scmp.ne.s32.totalorder %s27, %s43
    %p45 = scmp.eq.s32.totalorder %s19, 0
    %p46 = por %p44, %p45
    %s48 = sadd.s32 %s47, 1
    %p51 = scmp.eq.s32.totalorder %s13, 1
    %p52 = scmp.ne.s32.totalorder %s47, %s49
    %p53 = scmp.eq.s32.totalorder %s13, 0
    %p54 = por %p52, %p53
    %p55 = scmp.ne.s32.totalorder %s47, %s49
    %p56 = scmp.eq.s32.totalorder %s18, 1
    %p57 = por %p55, %p56
    %p58 = scmp.ne.s32.totalorder %s49, %s50
    %p59 = scmp.eq.s32.totalorder %s18, 0
    %p60 = por %p58, %p59
    %p61 = scmp.ne.s32.totalorder %s49, %s50
    %p62 = scmp.eq.s32.totalorder %s19, 1
    %p63 = por %p61, %p62
    %p65 = scmp.ne.s32.totalorder %s50, %s64
    %p66 = scmp.eq.s32.totalorder %s19, 0
    %p67 = por %p65, %p66
    %s69 = sadd.s32 %s68, 1
    %p72 = scmp.eq.s32.totalorder %s13, 1
    %p73 = scmp.ne.s32.totalorder %s68, %s70
    %p74 = scmp.eq.s32.totalorder %s13, 0
    %p75 = por %p73, %p74
    %p76 = scmp.ne.s32.totalorder %s68, %s70
    %p77 = scmp.eq.s32.totalorder %s18, 1
    %p78 = por %p76, %p77
    %p79 = scmp.ne.s32.totalorder %s70, %s71
    %p80 = scmp.eq.s32.totalorder %s18, 0
    %p81 = por %p79, %p80
    %p82 = scmp.ne.s32.totalorder %s70, %s71
    %p83 = scmp.eq.s32.totalorder %s19, 1
    %p84 = por %p82, %p83
    %p86 = scmp.ne.s32.totalorder %s71, %s85
    %p87 = scmp.eq.s32.totalorder %s19, 0
    %p88 = por %p86, %p87
    %s90 = sadd.s32 %s89, 1
    %p93 = scmp.eq.s32.totalorder %s13, 1
    %p94 = scmp.ne.s32.totalorder %s89, %s91
    %p95 = scmp.eq.s32.totalorder %s13, 0
    %p96 = por %p94, %p95
    %p97 = scmp.ne.s32.totalorder %s89, %s91
    %p98 = scmp.eq.s32.totalorder %s18, 1
    %p99 = por %p97, %p98
    %p100 = scmp.ne.s32.totalorder %s91, %s92
    %p101 = scmp.eq.s32.totalorder %s18, 0
    %p102 = por %p100, %p101
    %p103 = scmp.ne.s32.totalorder %s91, %s92
    %p104 = scmp.eq.s32.totalorder %s19, 1
    %p105 = por %p103, %p104
    %p107 = scmp.ne.s32.totalorder %s92, %s106
    %p108 = scmp.eq.s32.totalorder %s19, 0
    %p109 = por %p107, %p108
    %s111 = sadd.s32 %s110, 1
    %p114 = scmp.eq.s32.totalorder %s13, 1
    %p115 = scmp.ne.s32.totalorder %s110, %s112
    %p116 = scmp.eq.s32.totalorder %s13, 0
    %p117 = por %p115, %p116
    %p118 = scmp.ne.s32.totalorder %s110, %s112
    %p119 = scmp.eq.s32.totalorder %s18, 1
    %p120 = por %p118, %p119
    %p121 = scmp.ne.s32.totalorder %s112, %s113
    %p122 = scmp.eq.s32.totalorder %s18, 0
    %p123 = por %p121, %p122
    %p124 = scmp.ne.s32.totalorder %s112, %s113
    %p125 = scmp.eq.s32.totalorder %s19, 1
    %p126 = por %p124, %p125
    %p128 = scmp.ne.s32.totalorder %s113, %s127
    %p129 = scmp.eq.s32.totalorder %s19, 0
    %p130 = por %p128, %p129
    %s132 = sadd.s32 %s131, 1
    %p135 = scmp.eq.s32.totalorder %s13, 1
    %p136 = scmp.ne.s32.totalorder %s131, %s133
    %p137 = scmp.eq.s32.totalorder %s13, 0
    %p138 = por %p136, %p137
    %p139 = scmp.ne.s32.totalorder %s131, %s133
    %p140 = scmp.eq.s32.totalorder %s18, 1
    %p141 = por %p139, %p140
    %p142 = scmp.ne.s32.totalorder %s133, %s134
    %p143 = scmp.eq.s32.totalorder %s18, 0
    %p144 = por %p142, %p143
    %p145 = scmp.ne.s32.totalorder %s133, %s134
    %p146 = scmp.eq.s32.totalorder %s19, 1
    %p147 = por %p145, %p146
    %p149 = scmp.ne.s32.totalorder %s134, %s148
    %p150 = scmp.eq.s32.totalorder %s19, 0
    %p151 = por %p149, %p150
    %s153 = sadd.s32 %s152, 1
    %p156 = scmp.eq.s32.totalorder %s13, 1
    %p157 = scmp.ne.s32.totalorder %s152, %s154
    %p158 = scmp.eq.s32.totalorder %s13, 0
    %p159 = por %p157, %p158
    %p160 = scmp.ne.s32.totalorder %s152, %s154
    %p161 = scmp.eq.s32.totalorder %s18, 1
    %p162 = por %p160, %p161
    %p163 = scmp.ne.s32.totalorder %s154, %s155
    %p164 = scmp.eq.s32.totalorder %s18, 0
    %p165 = por %p163, %p164
    %p166 = scmp.ne.s32.totalorder %s154, %s155
    %p167 = scmp.eq.s32.totalorder %s19, 1
    %p168 = por %p166, %p167
    %p170 = scmp.ne.s32.totalorder %s155, %s169
    %p171 = scmp.eq.s32.totalorder %s19, 0
    %p172 = por %p170, %p171
    %s173 = ssub.s32 %s13, %s20
    %p174 = scmp.eq.s32.totalorder %s173, 0
    %s176 = sadd.s32 %s175, 1
    %s177 = scalar_select %p174, %s175, %s176
    %p180 = pneg %p174
    %p181 = scmp.eq.s32.totalorder %s13, 1
    %p182 = por %p180, %p181
    %p183 = scmp.ne.s32.totalorder %s175, %s178
    %p184 = scmp.eq.s32.totalorder %s13, 0
    %p185 = por %p183, %p184
    %p186 = scmp.ne.s32.totalorder %s175, %s178
    %p187 = scmp.eq.s32.totalorder %s18, 1
    %p188 = por %p186, %p187
    %p189 = scmp.ne.s32.totalorder %s178, %s179
    %p190 = scmp.eq.s32.totalorder %s18, 0
    %p191 = por %p189, %p190
    %p192 = scmp.ne.s32.totalorder %s178, %s179
    %p193 = scmp.eq.s32.totalorder %s19, 1
    %p194 = por %p192, %p193
    %p196 = scmp.ne.s32.totalorder %s179, %s195
    %p197 = scmp.eq.s32.totalorder %s19, 0
    %p198 = por %p196, %p197
    %p199 = scmp.le.s32.totalorder 1, %s13
    %p200 = scmp.lt.s32.totalorder %s13, 3
    %p201 = pnand %p199, %p200
    %p202 = pneg %p201
    // Predicated region
    $region9: #{block.3} parent=5 // pred_check
      _
    $region10: #{block.3} parent=5 // pred_check_branch
      %204 = sbr.rel (%p201) target = $region12
    $region11: #{block.3} parent=5 // pred_region
      %s205 = ssub.s32 %s13, 1
      // Predicated region
      $region13: #{block.3} parent=11 // pred_check
        %p206 = pneg %p60
      $region14: #{block.3} parent=11 // pred_check_branch
        %208 = sbr.rel (%p206) target = $region16
      $region15: #{block.3} parent=11 // pred_region
        _
      $region16: #{block.3} parent=11 // pred_fallthru
        _
      // Predicated region
      $region17: #{block.3} parent=11 // pred_check
        %p209 = pneg %p81
      $region18: #{block.3} parent=11 // pred_check_branch
        %211 = sbr.rel (%p209) target = $region20
      $region19: #{block.3} parent=11 // pred_region
        _
      $region20: #{block.3} parent=11 // pred_fallthru
        _
      // Predicated region
      $region21: #{block.3} parent=11 // pred_check
        %p212 = pneg %p102
      $region22: #{block.3} parent=11 // pred_check_branch
        %214 = sbr.rel (%p212) target = $region24
      $region23: #{block.3} parent=11 // pred_region
        _
      $region24: #{block.3} parent=11 // pred_fallthru
        _
      // Predicated region
      $region25: #{block.3} parent=11 // pred_check
        %p215 = pneg %p123
      $region26: #{block.3} parent=11 // pred_check_branch
        %217 = sbr.rel (%p215) target = $region28
      $region27: #{block.3} parent=11 // pred_region
        _
      $region28: #{block.3} parent=11 // pred_fallthru
        _
      // Predicated region
      $region29: #{block.3} parent=11 // pred_check
        %p218 = pneg %p144
      $region30: #{block.3} parent=11 // pred_check_branch
        %220 = sbr.rel (%p218) target = $region32
      $region31: #{block.3} parent=11 // pred_region
        _
      $region32: #{block.3} parent=11 // pred_fallthru
        _
      // Predicated region
      $region33: #{block.3} parent=11 // pred_check
        %p221 = pneg %p165
      $region34: #{block.3} parent=11 // pred_check_branch
        %223 = sbr.rel (%p221) target = $region36
      $region35: #{block.3} parent=11 // pred_region
        _
      $region36: #{block.3} parent=11 // pred_fallthru
        _
    $region12: #{block.3} parent=5 // pred_fallthru
      _
    %p224 = scmp.lt.s32.totalorder %s13, 2
    // Predicated region
    $region37: #{block.3} parent=5 // pred_check
      %p225 = pneg %p224
    $region38: #{block.3} parent=5 // pred_check_branch
      %227 = sbr.rel (%p225) target = $region40
    $region39: #{block.3} parent=5 // pred_region
      // Predicated region
      $region41: #{block.3} parent=39 // pred_check
        %p228 = pneg %p33
      $region42: #{block.3} parent=39 // pred_check_branch
        %230 = sbr.rel (%p228) target = $region44
      $region43: #{block.3} parent=39 // pred_region
        %p231 = scmp.lt.s32.totalorder %s13, 1
        %s232 = scalar_select %p231, %s13, 1
        %s233 = smul.addr %s232, 2
        %s234 = smul.addr %s233, 8
        %s235 = scalar_lea.vmem %s0, %s234
      $region44: #{block.3} parent=39 // pred_fallthru
        _
    $region40: #{block.3} parent=5 // pred_fallthru
      _
    %p236 = scmp.le.s32.totalorder 1, %s13
    %p237 = scmp.lt.s32.totalorder %s13, 3
    %p238 = pnand %p236, %p237
    %p239 = pneg %p238
    // Predicated region
    $region45: #{block.3} parent=5 // pred_check
      _
    $region46: #{block.3} parent=5 // pred_check_branch
      %241 = sbr.rel (%p238) target = $region48
    $region47: #{block.3} parent=5 // pred_region
      %s242 = ssub.s32 %s13, 1
      %p243 = scmp.lt.s32.totalorder %s18, 1
      %s244 = scalar_select %p243, %s18, 1
      %s245 = smul.addr %s244, 2
      %s246 = smul.addr %s245, 8
      %s247 = scalar_lea.vmem %s0, %s246
      %p248 = pneg %p39
      %p249 = pneg %p36
      %p250 = pneg %p60
      %p251 = pneg %p57
      %p252 = pneg %p81
      %p253 = pneg %p78
      %p254 = pneg %p102
      %p255 = pneg %p99
      %p256 = pneg %p123
      %p257 = pneg %p120
      %p258 = pneg %p144
      %p259 = pneg %p141
      %p260 = pneg %p165
      %p261 = pneg %p162
      %p262 = pneg %p191
      %p263 = pneg %p188
      %p264 = scmp.lt.s32.totalorder %s18, 1
      %s265 = scalar_select %p264, %s18, 1
      %s266 = smul.addr %s265, 2
      %s267 = smul.addr %s266, 8
      %s268 = scalar_lea.vmem %s7, %s267
      %p269 = scmp.lt.s32.totalorder %s18, 1
      %s270 = scalar_select %p269, %s18, 1
      %s271 = smul.addr %s270, 2
      %s272 = smul.addr %s271, 8
      %s273 = scalar_lea.vmem %s0, %s272
      %p274 = scmp.lt.s32.totalorder %s18, 1
      %s275 = scalar_select %p274, %s18, 1
      %s276 = smul.addr %s275, 2
      %s277 = smul.addr %s276, 8
      %s278 = scalar_lea.vmem %s7, %s277
      %v280 = vld [vmem:[%s1] sm:$0x1]
      %v281 = vld [vmem:[%s2] sm:$0x1]
      %v282 = vld [vmem:[%s3] sm:$0xff]
      %v283 = vld [vmem:[%s3 + $0x8] sm:$0xff]
      %v284 = vld [vmem:[%s3 + $0x10] sm:$0xff]
      %v285 = vld [vmem:[%s3 + $0x18] sm:$0xff]
      %v286 = vld [vmem:[%s3 + $0x20] sm:$0xff]
      %v287 = vld [vmem:[%s3 + $0x28] sm:$0xff]
      %v288 = vld [vmem:[%s3 + $0x30] sm:$0xff]
      %v289 = vld [vmem:[%s3 + $0x38] sm:$0xff]
      %v290 = vld [vmem:[%s4] sm:$0x3]
      %v291 = vld [vmem:[%s5] sm:$0xf]
      %v292 = vld [vmem:[%s5 + $0x4] sm:$0xf]
      %v293 = vld [vmem:[%s5 + $0x8] sm:$0xf]
      %v294 = vld [vmem:[%s5 + $0xc] sm:$0xf]
      %v295 = vld [vmem:[%s5 + $0x10] sm:$0xf]
      %v296 = vld [vmem:[%s5 + $0x14] sm:$0xf]
      %v297 = vld [vmem:[%s5 + $0x18] sm:$0xf]
      %v298 = vld [vmem:[%s5 + $0x1c] sm:$0xf]
      %v299 = vld [vmem:[%s5 + $0x20] sm:$0xf]
      %v300 = vld [vmem:[%s5 + $0x24] sm:$0xf]
      %v301 = vld [vmem:[%s5 + $0x28] sm:$0xf]
      %v302 = vld [vmem:[%s5 + $0x2c] sm:$0xf]
      %v303 = vld [vmem:[%s5 + $0x30] sm:$0xf]
      %v304 = vld [vmem:[%s5 + $0x34] sm:$0xf]
      %v305 = vld [vmem:[%s5 + $0x38] sm:$0xf]
      %v306 = vld [vmem:[%s5 + $0x3c] sm:$0xf]
      %v307 = vld [vmem:[%s5 + $0x40] sm:$0xf]
      %v308 = vld [vmem:[%s5 + $0x44] sm:$0xf]
      %v309 = vld [vmem:[%s5 + $0x48] sm:$0xf]
      %v310 = vld [vmem:[%s5 + $0x4c] sm:$0xf]
      %v311 = vld [vmem:[%s5 + $0x50] sm:$0xf]
      %v312 = vld [vmem:[%s5 + $0x54] sm:$0xf]
      %v313 = vld [vmem:[%s5 + $0x58] sm:$0xf]
      %v314 = vld [vmem:[%s5 + $0x5c] sm:$0xf]
      %v315 = vld [vmem:[%s5 + $0x60] sm:$0xf]
      %v316 = vld [vmem:[%s5 + $0x64] sm:$0xf]
      %v317 = vld [vmem:[%s5 + $0x68] sm:$0xf]
      %v318 = vld [vmem:[%s5 + $0x6c] sm:$0xf]
      %v319 = vld [vmem:[%s5 + $0x70] sm:$0xf]
      %v320 = vld [vmem:[%s5 + $0x74] sm:$0xf]
      %v321 = vld [vmem:[%s5 + $0x78] sm:$0xf]
      %v322 = vld [vmem:[%s5 + $0x7c] sm:$0xf]
      %v323 = vld [vmem:[%s6] sm:$0x1]
      %v324 = vld [vmem:[%s273] sm:$0xff]
      %v325 = vld [vmem:[%s273 + $0x8] sm:$0x1]
      %vm326 = vcmask 523264
      %v327 = vsel %vm326, %v324, 0.0
      %328 = vadd.xlane.f32.xlu0 %v327
      %v329 = vpop.xlane.xlu0 %328
      %vm330 = vcmask 516096
      %v331 = vsel %vm330, %v325, 0.0
      %332 = vadd.xlane.f32.xlu0 %v331
      %v333 = vpop.xlane.xlu0 %332
      %v334 = vrcp.pop 64.0
      %v335 = vmul.f32 %v329, %v334
      %v336 = vmul.f32 %v333, %v334
      %v337 = vsub.f32 %v324, %v335
      %v338 = vsub.f32 %v325, %v336
      %v339 = vmul.f32 %v337, %v337
      %v340 = vmul.f32 %v338, %v338
      %v341 = vsel %vm326, %v339, 0.0
      %342 = vadd.xlane.f32.xlu0 %v341
      %v343 = vpop.xlane.xlu0 %342
      %v344 = vsel %vm330, %v340, 0.0
      %345 = vadd.xlane.f32.xlu0 %v344
      %v346 = vpop.xlane.xlu0 %345
      %v347 = vmul.f32 %v343, %v334
      %v348 = vmul.f32 %v346, %v334
      %v349 = vadd.f32 %v347, 1e-05
      %v350 = vadd.f32 %v348, 1e-05
      %v351 = vrsqrt.pop %v349
      %v352 = vrsqrt.pop %v350
      %v353 = vmul.f32 %v337, %v351
      %v354 = vmul.f32 %v338, %v352
      %v356 = vlaneseq
      %v357 = vshrl.u32 %v356, 7
      %v358 = vsub.s32 0, %v357
      %v359 = vrot.slane %v280, %v358
      %v361 = vmul.f32 %v353, %v359
      %v362 = vmul.f32 %v354, %v359
      %v364 = vlaneseq
      %v365 = vshrl.u32 %v364, 7
      %v366 = vsub.s32 0, %v365
      %v367 = vrot.slane %v281, %v366
      %v369 = vadd.f32 %v361, %v367
      %v370 = vadd.f32 %v362, %v367
      %v371 = vpack.c.bf16 %v370, %v369
      %v373 = vlaneseq
      %v374 = vshrl.u32 %v373, 7
      %v375 = vsub.s32 0, %v374
      %v376 = vrot.slane %v290, %v375
      %v377 = vlaneseq
      %v378 = vshrl.u32 %v377, 7
      %v379 = vsub.s32 1, %v378
      %v380 = vrot.slane %v290, %v379
      %v391 = vunpack.c.l.b16 %v282
      %v392 = vunpack.c.h.b16 %v282
      %v393 = vunpack.c.l.b16 %v283
      %v394 = vunpack.c.h.b16 %v283
      %v395 = vunpack.c.l.b16 %v284
      %v396 = vunpack.c.h.b16 %v284
      %v397 = vunpack.c.l.b16 %v285
      %v398 = vunpack.c.h.b16 %v285
      %v399 = vunpack.c.l.b16 %v286
      %v400 = vunpack.c.h.b16 %v286
      %v401 = vunpack.c.l.b16 %v287
      %v402 = vunpack.c.h.b16 %v287
      %v403 = vunpack.c.l.b16 %v288
      %v404 = vunpack.c.h.b16 %v288
      %v405 = vunpack.c.l.b16 %v289
      %v406 = vunpack.c.h.b16 %v289
      %v407 = vpack.c.b16 %v393, %v391
      %v408 = vpack.c.b16 %v394, %v392
      %v409 = vpack.c.b16 %v397, %v395
      %v410 = vpack.c.b16 %v398, %v396
      %v411 = vpack.c.b16 %v401, %v399
      %v412 = vpack.c.b16 %v402, %v400
      %v413 = vpack.c.b16 %v405, %v403
      %v414 = vpack.c.b16 %v406, %v404
      %v424 = vsel %vm326, %v371, 0
      %426 = vmatprep.subr.bf16.mxu0 %v408
      %427 = vmatpush1.bf16.msra.mxu0 %v407
      %428 = vmatprep.subr.bf16.mxu0 %v410
      %429 = vmatpush1.bf16.msra.mxu0 %v409
      %430 = vmatprep.subr.bf16.mxu0 %v412
      %431 = vmatpush1.bf16.msra.mxu0 %v411
      %432 = vmatprep.subr.bf16.mxu0 %v414
      %433 = vmatpush1.bf16.msra.mxu0 %v413
      %434 = vmatprep.subr.bf16.mxu0 0
      %435 = vmatpush1.bf16.msra.mxu0 0
      %436 = vmatprep.subr.bf16.mxu0 0
      %437 = vmatpush1.bf16.msra.mxu0 0
      %438 = vmatprep.subr.bf16.mxu0 0
      %439 = vmatpush1.bf16.msra.mxu0 0
      %440 = vmatprep.subr.bf16.mxu0 0
      %441 = vmatpush1.bf16.msra.mxu0 0
      %442 = vmatprep.subr.bf16.mxu0 0
      %443 = vmatpush1.bf16.msra.mxu0 0
      %444 = vmatprep.subr.bf16.mxu0 0
      %445 = vmatpush1.bf16.msra.mxu0 0
      %446 = vmatprep.subr.bf16.mxu0 0
      %447 = vmatpush1.bf16.msra.mxu0 0
      %448 = vmatprep.subr.bf16.mxu0 0
      %449 = vmatpush1.bf16.msra.mxu0 0
      %450 = vmatprep.subr.bf16.mxu0 0
      %451 = vmatpush1.bf16.msra.mxu0 0
      %452 = vmatprep.subr.bf16.mxu0 0
      %453 = vmatpush1.bf16.msra.mxu0 0
      %454 = vmatprep.subr.bf16.mxu0 0
      %455 = vmatpush1.bf16.msra.mxu0 0
      %456 = vmatprep.subr.bf16.mxu0 0
      %457 = vmatpush1.bf16.msra.mxu0 0
      %458 = vmatprep.mubr.bf16.mxu0 0
      %459 = vmatmul.mubr.bf16.gmra.mrb[0].mxu0 %v424
      %v460 = vpop.f32.mrb[0].mxu0
      %v461 = vadd.f32 %v376, %v460
      %v462 = vpop.f32.mrb[0].mxu0
      %v463 = vadd.f32 %v380, %v462
      %v464 = vpop.f32.mrb[0].mxu0
      %v465 = vadd.f32 %v376, %v464
      %v466 = vpop.f32.mrb[0].mxu0
      %v467 = vadd.f32 %v380, %v466
      %468 = vdwg.mxu0
      %v469 = vmul.f32 %v461, 0.5
      %v470 = vmul.f32 %v463, 0.5
      %v471 = vmul.f32 %v465, 0.5
      %v472 = vmul.f32 %v467, 0.5
      %v473 = vmul.f32 %v461, 0.70710677
      %v474 = vmul.f32 %v463, 0.70710677
      %v475 = vmul.f32 %v465, 0.70710677
      %v476 = vmul.f32 %v467, 0.70710677
      %vm477 = vcmp.lt.f32.partialorder %v473, 0.0
      %vm478 = vcmp.lt.f32.partialorder %v474, 0.0
      %vm479 = vcmp.lt.f32.partialorder %v475, 0.0
      %vm480 = vcmp.lt.f32.partialorder %v476, 0.0
      %v481 = vsel %vm477, -1.0, 1.0
      %v482 = vsel %vm478, -1.0, 1.0
      %v483 = vsel %vm479, -1.0, 1.0
      %v484 = vsel %vm480, -1.0, 1.0
      %v485 = vand.u32 2147483647, %v473
      %v486 = vand.u32 2147483647, %v474
      %v487 = vand.u32 2147483647, %v475
      %v488 = vand.u32 2147483647, %v476
      %v489 = vmul.f32 %v485, 0.3275911
      %v490 = vmul.f32 %v486, 0.3275911
      %v491 = vmul.f32 %v487, 0.3275911
      %v492 = vmul.f32 %v488, 0.3275911
      %v493 = vadd.f32 %v489, 1.0
      %v494 = vadd.f32 %v490, 1.0
      %v495 = vadd.f32 %v491, 1.0
      %v496 = vadd.f32 %v492, 1.0
      %v497 = vrcp.pop %v493
      %v498 = vmul.f32 1.0, %v497
      %v499 = vrcp.pop %v494
      %v500 = vmul.f32 1.0, %v499
      %v501 = vrcp.pop %v495
      %v502 = vmul.f32 1.0, %v501
      %v503 = vrcp.pop %v496
      %v504 = vmul.f32 1.0, %v503
      %v505 = vmul.f32 %v498, 1.0614054
      %v506 = vmul.f32 %v500, 1.0614054
      %v507 = vmul.f32 %v502, 1.0614054
      %v508 = vmul.f32 %v504, 1.0614054
      %v509 = vadd.f32 %v505, -1.4531521
      %v510 = vadd.f32 %v506, -1.4531521
      %v511 = vadd.f32 %v507, -1.4531521
      %v512 = vadd.f32 %v508, -1.4531521
      %v513 = vmul.f32 %v509, %v498
      %v514 = vmul.f32 %v510, %v500
      %v515 = vmul.f32 %v511, %v502
      %v516 = vmul.f32 %v512, %v504
      %v517 = vadd.f32 %v513, 1.4214138
      %v518 = vadd.f32 %v514, 1.4214138
      %v519 = vadd.f32 %v515, 1.4214138
      %v520 = vadd.f32 %v516, 1.4214138
      %v521 = vmul.f32 %v517, %v498
      %v522 = vmul.f32 %v518, %v500
      %v523 = vmul.f32 %v519, %v502
      %v524 = vmul.f32 %v520, %v504
      %v525 = vadd.f32 %v521, -0.28449672
      %v526 = vadd.f32 %v522, -0.28449672
      %v527 = vadd.f32 %v523, -0.28449672
      %v528 = vadd.f32 %v524, -0.28449672
      %v529 = vmul.f32 %v525, %v498
      %v530 = vmul.f32 %v526, %v500
      %v531 = vmul.f32 %v527, %v502
      %v532 = vmul.f32 %v528, %v504
      %v533 = vadd.f32 %v529, 0.2548296
      %v534 = vadd.f32 %v530, 0.2548296
      %v535 = vadd.f32 %v531, 0.2548296
      %v536 = vadd.f32 %v532, 0.2548296
      %v537 = vmul.f32 %v533, %v498
      %v538 = vmul.f32 %v534, %v500
      %v539 = vmul.f32 %v535, %v502
      %v540 = vmul.f32 %v536, %v504
      %v541 = vsub.f32 0.0, %v485
      %v542 = vsub.f32 0.0, %v486
      %v543 = vsub.f32 0.0, %v487
      %v544 = vsub.f32 0.0, %v488
      %v545 = vmul.f32 %v541, %v485
      %v546 = vmul.f32 %v542, %v486
      %v547 = vmul.f32 %v543, %v487
      %v548 = vmul.f32 %v544, %v488
      %v549 = vmul.f32 %v545, 1.442695
      %v550 = vpow.pop %v549
      %v551 = vmul.f32 %v546, 1.442695
      %v552 = vpow.pop %v551
      %v553 = vmul.f32 %v547, 1.442695
      %v554 = vpow.pop %v553
      %v555 = vmul.f32 %v548, 1.442695
      %v556 = vpow.pop %v555
      %v557 = vmul.f32 %v537, %v550
      %v558 = vmul.f32 %v538, %v552
      %v559 = vmul.f32 %v539, %v554
      %v560 = vmul.f32 %v540, %v556
      %v561 = vsub.f32 1.0, %v557
      %v562 = vsub.f32 1.0, %v558
      %v563 = vsub.f32 1.0, %v559
      %v564 = vsub.f32 1.0, %v560
      %v565 = vmul.f32 %v481, %v561
      %v566 = vmul.f32 %v482, %v562
      %v567 = vmul.f32 %v483, %v563
      %v568 = vmul.f32 %v484, %v564
      %v569 = vadd.f32 %v565, 1.0
      %v570 = vadd.f32 %v566, 1.0
      %v571 = vadd.f32 %v567, 1.0
      %v572 = vadd.f32 %v568, 1.0
      %v573 = vmul.f32 %v469, %v569
      %v574 = vmul.f32 %v470, %v570
      %v575 = vmul.f32 %v471, %v571
      %v576 = vmul.f32 %v472, %v572
      %v577 = vpack.c.bf16 %v575, %v573
      %v578 = vpack.c.bf16 %v576, %v574
      %v580 = vlaneseq
      %v581 = vshrl.u32 %v580, 7
      %v582 = vsub.s32 0, %v581
      %v583 = vrot.slane %v323, %v582
      %v617 = vunpack.c.l.b16 %v291
      %v618 = vunpack.c.l.b16 %v292
      %v619 = vunpack.c.l.b16 %v293
      %v620 = vunpack.c.l.b16 %v294
      %v621 = vunpack.c.l.b16 %v295
      %v622 = vunpack.c.l.b16 %v296
      %v623 = vunpack.c.l.b16 %v297
      %v624 = vunpack.c.l.b16 %v298
      %v625 = vunpack.c.l.b16 %v299
      %v626 = vunpack.c.l.b16 %v300
      %v627 = vunpack.c.l.b16 %v301
      %v628 = vunpack.c.l.b16 %v302
      %v629 = vunpack.c.l.b16 %v303
      %v630 = vunpack.c.l.b16 %v304
      %v631 = vunpack.c.l.b16 %v305
      %v632 = vunpack.c.l.b16 %v306
      %v633 = vunpack.c.l.b16 %v307
      %v634 = vunpack.c.l.b16 %v308
      %v635 = vunpack.c.l.b16 %v309
      %v636 = vunpack.c.l.b16 %v310
      %v637 = vunpack.c.l.b16 %v311
      %v638 = vunpack.c.l.b16 %v312
      %v639 = vunpack.c.l.b16 %v313
      %v640 = vunpack.c.l.b16 %v314
      %v641 = vunpack.c.l.b16 %v315
      %v642 = vunpack.c.l.b16 %v316
      %v643 = vunpack.c.l.b16 %v317
      %v644 = vunpack.c.l.b16 %v318
      %v645 = vunpack.c.l.b16 %v319
      %v646 = vunpack.c.l.b16 %v320
      %v647 = vunpack.c.l.b16 %v321
      %v648 = vunpack.c.l.b16 %v322
      %v649 = vpack.c.b16 %v618, %v617
      %v650 = vpack.c.b16 %v620, %v619
      %v651 = vpack.c.b16 %v622, %v621
      %v652 = vpack.c.b16 %v624, %v623
      %v653 = vpack.c.b16 %v626, %v625
      %v654 = vpack.c.b16 %v628, %v627
      %v655 = vpack.c.b16 %v630, %v629
      %v656 = vpack.c.b16 %v632, %v631
      %v657 = vpack.c.b16 %v634, %v633
      %v658 = vpack.c.b16 %v636, %v635
      %v659 = vpack.c.b16 %v638, %v637
      %v660 = vpack.c.b16 %v640, %v639
      %v661 = vpack.c.b16 %v642, %v641
      %v662 = vpack.c.b16 %v644, %v643
      %v663 = vpack.c.b16 %v646, %v645
      %v664 = vpack.c.b16 %v648, %v647
      %681 = vmatprep.subr.bf16.mxu0 0
      %682 = vmatpush1.bf16.msra.mxu0 %v649
      %683 = vmatprep.subr.bf16.mxu0 0
      %684 = vmatpush1.bf16.msra.mxu0 %v650
      %685 = vmatprep.subr.bf16.mxu0 0
      %686 = vmatpush1.bf16.msra.mxu0 %v651
      %687 = vmatprep.subr.bf16.mxu0 0
      %688 = vmatpush1.bf16.msra.mxu0 %v652
      %689 = vmatprep.subr.bf16.mxu0 0
      %690 = vmatpush1.bf16.msra.mxu0 %v653
      %691 = vmatprep.subr.bf16.mxu0 0
      %692 = vmatpush1.bf16.msra.mxu0 %v654
      %693 = vmatprep.subr.bf16.mxu0 0
      %694 = vmatpush1.bf16.msra.mxu0 %v655
      %695 = vmatprep.subr.bf16.mxu0 0
      %696 = vmatpush1.bf16.msra.mxu0 %v656
      %697 = vmatprep.subr.bf16.mxu0 0
      %698 = vmatpush1.bf16.msra.mxu0 %v657
      %699 = vmatprep.subr.bf16.mxu0 0
      %700 = vmatpush1.bf16.msra.mxu0 %v658
      %701 = vmatprep.subr.bf16.mxu0 0
      %702 = vmatpush1.bf16.msra.mxu0 %v659
      %703 = vmatprep.subr.bf16.mxu0 0
      %704 = vmatpush1.bf16.msra.mxu0 %v660
      %705 = vmatprep.subr.bf16.mxu0 0
      %706 = vmatpush1.bf16.msra.mxu0 %v661
      %707 = vmatprep.subr.bf16.mxu0 0
      %708 = vmatpush1.bf16.msra.mxu0 %v662
      %709 = vmatprep.subr.bf16.mxu0 0
      %710 = vmatpush1.bf16.msra.mxu0 %v663
      %711 = vmatprep.subr.bf16.mxu0 0
      %712 = vmatpush1.bf16.msra.mxu0 %v664
      %713 = vmatprep.mubr.bf16.mxu0 %v578
      %714 = vmatmul.mubr.bf16.gmra.mrb[0].mxu0 %v577
      %v715 = vpop.f32.mrb[0].mxu0
      %v716 = vadd.f32 %v583, %v715
      %v717 = vpop.f32.mrb[0].mxu0
      %v718 = vpop.f32.mrb[0].mxu0
      %v719 = vadd.f32 %v583, %v718
      %v720 = vpop.f32.mrb[0].mxu0
      %721 = vdwg.mxu0
      %v722 = vadd.f32 %v716, %v324
      %v723 = vadd.f32 %v719, %v325
      %724 = vst.msk [vmem:[%s278] sm:$0xff] %vm326, %v722
      %725 = vst.msk [vmem:[%s278 + $0x8] sm:$0x1] %vm330, %v723
      %p726 = scmp.lt.s32.totalorder %s18, 1
      %s727 = scalar_select %p726, %s18, 1
      %s728 = smul.addr %s727, 2
      %s729 = smul.addr %s728, 8
      %s730 = scalar_lea.vmem %s7, %s729
      // Predicated region
      $region49: #{block.3} parent=47 // pred_check
        %p731 = pneg %p188
      $region50: #{block.3} parent=47 // pred_check_branch
        %733 = sbr.rel (%p731) target = $region52
      $region51: #{block.3} parent=47 // pred_region
        _
      $region52: #{block.3} parent=47 // pred_fallthru
        _
    $region48: #{block.3} parent=5 // pred_fallthru
      _
    %p734 = scmp.le.s32.totalorder 2, %s13
    // Predicated region
    $region53: #{block.3} parent=5 // pred_check
      %p735 = pneg %p734
    $region54: #{block.3} parent=5 // pred_check_branch
      %737 = sbr.rel (%p735) target = $region56
    $region55: #{block.3} parent=5 // pred_region
      %s738 = ssub.s32 %s13, 2
      // Predicated region
      $region57: #{block.3} parent=55 // pred_check
        %p739 = pneg %p194
      $region58: #{block.3} parent=55 // pred_check_branch
        %741 = sbr.rel (%p739) target = $region60
      $region59: #{block.3} parent=55 // pred_region
        %p742 = scmp.lt.s32.totalorder %s19, 1
        %s743 = scalar_select %p742, %s19, 1
        %s744 = smul.addr %s743, 2
        %s745 = smul.addr %s744, 8
        %s746 = scalar_lea.vmem %s7, %s745
      $region60: #{block.3} parent=55 // pred_fallthru
        _
    $region56: #{block.3} parent=5 // pred_fallthru
      _
  $region6: #{block.3} parent=0 // loop_footer
    %s17 = sadd.s32 1, %s13
  $region7: #{block.3} parent=0 // loop_footer_branch
    %12 = sbr.rel target = $region3
  $region8: #{block.3} parent=0 // loop_exit
    _

// kernel: block.2
$region0: #{block.2}
  #allocation0 [shape = 'u32[]', space=smem, size = 0x4, offset = 0x4, fixed_abs, tag = 'smem constant byte address 0x4 - core index']
  #allocation1 [shape = 'u32[144,128]{1,0:T(1,128)}', space=vmem, size = 0x12000, scoped, tag = 'internal scratch']
  %s0 = inlined_call_operand.vmem [shape: f32[2,9,64], index: 0, kind: input, shape index: {}]
  %s1 = inlined_call_operand.vmem [shape: f32[1,64], index: 1, kind: input, shape index: {}]
  %s2 = inlined_call_operand.vmem [shape: f32[1,64], index: 2, kind: input, shape index: {}]
  %s3 = inlined_call_operand.vmem [shape: bf16[64,192], index: 3, kind: input, shape index: {}]
  %s4 = inlined_call_operand.vmem [shape: f32[1,192], index: 4, kind: input, shape index: {}]
  %s5 = inlined_call_operand.vmem [shape: bf16[64,64], index: 5, kind: input, shape index: {}]
  %s6 = inlined_call_operand.vmem [shape: f32[1,64], index: 6, kind: input, shape index: {}]
  %s7 = inlined_call_operand.vmem [shape: f32[2,9,64], index: 7, kind: output, shape index: {}]
  %s8 = sld [smem:[#allocation0]]
  $region61: #{block.2} parent=0
    _
  %s10 = ssub.s32 1, %s8
  %s11 = scalar_select 0, %s10, %s8
  loop: start=0, step=1, limit=4
  $region2: #{block.2} parent=0 // loop_pre_header
    _
  $region3: #{block.2} parent=0 // loop_header
    %s13 = sphi 0, %s17
    %p14 = scmp.ge.s32.totalorder %s13, 4
    %s23 = sphi 0, %s25
    %s26 = sphi 0, %s23
    %s27 = sphi 0, %s26
    %s43 = sphi 0, %s27
    %s47 = sphi 0, %s47
    %s49 = sphi 0, %s47
    %s50 = sphi 0, %s49
    %s64 = sphi 0, %s50
    %s68 = sphi 0, %s68
    %s70 = sphi 0, %s68
    %s71 = sphi 0, %s70
    %s85 = sphi 0, %s71
    %s89 = sphi 0, %s89
    %s91 = sphi 0, %s89
    %s92 = sphi 0, %s91
    %s106 = sphi 0, %s92
    %s110 = sphi 0, %s110
    %s112 = sphi 0, %s110
    %s113 = sphi 0, %s112
    %s127 = sphi 0, %s113
    %s131 = sphi 0, %s131
    %s133 = sphi 0, %s131
    %s134 = sphi 0, %s133
    %s148 = sphi 0, %s134
    %s152 = sphi 0, %s152
    %s154 = sphi 0, %s152
    %s155 = sphi 0, %s154
    %s169 = sphi 0, %s155
    %s175 = sphi 0, %s177
    %s178 = sphi 0, %s175
    %s179 = sphi 0, %s178
    %s195 = sphi 0, %s179
  $region4: #{block.2} parent=0 // loop_header_branch
    %16 = sbr.rel (%p14) target = $region8
  $region5: #{block.2} parent=0 // loop_body
    %s18 = ssub.s32 %s13, 1
    %s19 = ssub.s32 %s13, 2
    %s20 = sadd.s32 %s13, 1
    %s21 = ssub.s32 %s13, %s20
    %p22 = scmp.eq.s32.totalorder %s21, 0
    %s24 = sadd.s32 %s23, 1
    %s25 = scalar_select %p22, %s23, %s24
    %p28 = pneg %p22
    %p29 = scmp.eq.s32.totalorder %s13, 1
    %p30 = por %p28, %p29
    %p31 = scmp.ne.s32.totalorder %s23, %s26
    %p32 = scmp.eq.s32.totalorder %s13, 0
    %p33 = por %p31, %p32
    %p34 = scmp.ne.s32.totalorder %s23, %s26
    %p35 = scmp.eq.s32.totalorder %s18, 1
    %p36 = por %p34, %p35
    %p37 = scmp.ne.s32.totalorder %s26, %s27
    %p38 = scmp.eq.s32.totalorder %s18, 0
    %p39 = por %p37, %p38
    %p40 = scmp.ne.s32.totalorder %s26, %s27
    %p41 = scmp.eq.s32.totalorder %s19, 1
    %p42 = por %p40, %p41
    %p44 = scmp.ne.s32.totalorder %s27, %s43
    %p45 = scmp.eq.s32.totalorder %s19, 0
    %p46 = por %p44, %p45
    %s48 = sadd.s32 %s47, 1
    %p51 = scmp.eq.s32.totalorder %s13, 1
    %p52 = scmp.ne.s32.totalorder %s47, %s49
    %p53 = scmp.eq.s32.totalorder %s13, 0
    %p54 = por %p52, %p53
    %p55 = scmp.ne.s32.totalorder %s47, %s49
    %p56 = scmp.eq.s32.totalorder %s18, 1
    %p57 = por %p55, %p56
    %p58 = scmp.ne.s32.totalorder %s49, %s50
    %p59 = scmp.eq.s32.totalorder %s18, 0
    %p60 = por %p58, %p59
    %p61 = scmp.ne.s32.totalorder %s49, %s50
    %p62 = scmp.eq.s32.totalorder %s19, 1
    %p63 = por %p61, %p62
    %p65 = scmp.ne.s32.totalorder %s50, %s64
    %p66 = scmp.eq.s32.totalorder %s19, 0
    %p67 = por %p65, %p66
    %s69 = sadd.s32 %s68, 1
    %p72 = scmp.eq.s32.totalorder %s13, 1
    %p73 = scmp.ne.s32.totalorder %s68, %s70
    %p74 = scmp.eq.s32.totalorder %s13, 0
    %p75 = por %p73, %p74
    %p76 = scmp.ne.s32.totalorder %s68, %s70
    %p77 = scmp.eq.s32.totalorder %s18, 1
    %p78 = por %p76, %p77
    %p79 = scmp.ne.s32.totalorder %s70, %s71
    %p80 = scmp.eq.s32.totalorder %s18, 0
    %p81 = por %p79, %p80
    %p82 = scmp.ne.s32.totalorder %s70, %s71
    %p83 = scmp.eq.s32.totalorder %s19, 1
    %p84 = por %p82, %p83
    %p86 = scmp.ne.s32.totalorder %s71, %s85
    %p87 = scmp.eq.s32.totalorder %s19, 0
    %p88 = por %p86, %p87
    %s90 = sadd.s32 %s89, 1
    %p93 = scmp.eq.s32.totalorder %s13, 1
    %p94 = scmp.ne.s32.totalorder %s89, %s91
    %p95 = scmp.eq.s32.totalorder %s13, 0
    %p96 = por %p94, %p95
    %p97 = scmp.ne.s32.totalorder %s89, %s91
    %p98 = scmp.eq.s32.totalorder %s18, 1
    %p99 = por %p97, %p98
    %p100 = scmp.ne.s32.totalorder %s91, %s92
    %p101 = scmp.eq.s32.totalorder %s18, 0
    %p102 = por %p100, %p101
    %p103 = scmp.ne.s32.totalorder %s91, %s92
    %p104 = scmp.eq.s32.totalorder %s19, 1
    %p105 = por %p103, %p104
    %p107 = scmp.ne.s32.totalorder %s92, %s106
    %p108 = scmp.eq.s32.totalorder %s19, 0
    %p109 = por %p107, %p108
    %s111 = sadd.s32 %s110, 1
    %p114 = scmp.eq.s32.totalorder %s13, 1
    %p115 = scmp.ne.s32.totalorder %s110, %s112
    %p116 = scmp.eq.s32.totalorder %s13, 0
    %p117 = por %p115, %p116
    %p118 = scmp.ne.s32.totalorder %s110, %s112
    %p119 = scmp.eq.s32.totalorder %s18, 1
    %p120 = por %p118, %p119
    %p121 = scmp.ne.s32.totalorder %s112, %s113
    %p122 = scmp.eq.s32.totalorder %s18, 0
    %p123 = por %p121, %p122
    %p124 = scmp.ne.s32.totalorder %s112, %s113
    %p125 = scmp.eq.s32.totalorder %s19, 1
    %p126 = por %p124, %p125
    %p128 = scmp.ne.s32.totalorder %s113, %s127
    %p129 = scmp.eq.s32.totalorder %s19, 0
    %p130 = por %p128, %p129
    %s132 = sadd.s32 %s131, 1
    %p135 = scmp.eq.s32.totalorder %s13, 1
    %p136 = scmp.ne.s32.totalorder %s131, %s133
    %p137 = scmp.eq.s32.totalorder %s13, 0
    %p138 = por %p136, %p137
    %p139 = scmp.ne.s32.totalorder %s131, %s133
    %p140 = scmp.eq.s32.totalorder %s18, 1
    %p141 = por %p139, %p140
    %p142 = scmp.ne.s32.totalorder %s133, %s134
    %p143 = scmp.eq.s32.totalorder %s18, 0
    %p144 = por %p142, %p143
    %p145 = scmp.ne.s32.totalorder %s133, %s134
    %p146 = scmp.eq.s32.totalorder %s19, 1
    %p147 = por %p145, %p146
    %p149 = scmp.ne.s32.totalorder %s134, %s148
    %p150 = scmp.eq.s32.totalorder %s19, 0
    %p151 = por %p149, %p150
    %s153 = sadd.s32 %s152, 1
    %p156 = scmp.eq.s32.totalorder %s13, 1
    %p157 = scmp.ne.s32.totalorder %s152, %s154
    %p158 = scmp.eq.s32.totalorder %s13, 0
    %p159 = por %p157, %p158
    %p160 = scmp.ne.s32.totalorder %s152, %s154
    %p161 = scmp.eq.s32.totalorder %s18, 1
    %p162 = por %p160, %p161
    %p163 = scmp.ne.s32.totalorder %s154, %s155
    %p164 = scmp.eq.s32.totalorder %s18, 0
    %p165 = por %p163, %p164
    %p166 = scmp.ne.s32.totalorder %s154, %s155
    %p167 = scmp.eq.s32.totalorder %s19, 1
    %p168 = por %p166, %p167
    %p170 = scmp.ne.s32.totalorder %s155, %s169
    %p171 = scmp.eq.s32.totalorder %s19, 0
    %p172 = por %p170, %p171
    %s173 = ssub.s32 %s13, %s20
    %p174 = scmp.eq.s32.totalorder %s173, 0
    %s176 = sadd.s32 %s175, 1
    %s177 = scalar_select %p174, %s175, %s176
    %p180 = pneg %p174
    %p181 = scmp.eq.s32.totalorder %s13, 1
    %p182 = por %p180, %p181
    %p183 = scmp.ne.s32.totalorder %s175, %s178
    %p184 = scmp.eq.s32.totalorder %s13, 0
    %p185 = por %p183, %p184
    %p186 = scmp.ne.s32.totalorder %s175, %s178
    %p187 = scmp.eq.s32.totalorder %s18, 1
    %p188 = por %p186, %p187
    %p189 = scmp.ne.s32.totalorder %s178, %s179
    %p190 = scmp.eq.s32.totalorder %s18, 0
    %p191 = por %p189, %p190
    %p192 = scmp.ne.s32.totalorder %s178, %s179
    %p193 = scmp.eq.s32.totalorder %s19, 1
    %p194 = por %p192, %p193
    %p196 = scmp.ne.s32.totalorder %s179, %s195
    %p197 = scmp.eq.s32.totalorder %s19, 0
    %p198 = por %p196, %p197
    %p199 = scmp.le.s32.totalorder 1, %s13
    %p200 = scmp.lt.s32.totalorder %s13, 3
    %p201 = pnand %p199, %p200
    %p202 = pneg %p201
    // Predicated region
    $region9: #{block.2} parent=5 // pred_check
      _
    $region10: #{block.2} parent=5 // pred_check_branch
      %204 = sbr.rel (%p201) target = $region12
    $region11: #{block.2} parent=5 // pred_region
      %s205 = ssub.s32 %s13, 1
      // Predicated region
      $region13: #{block.2} parent=11 // pred_check
        %p206 = pneg %p60
      $region14: #{block.2} parent=11 // pred_check_branch
        %208 = sbr.rel (%p206) target = $region16
      $region15: #{block.2} parent=11 // pred_region
        _
      $region16: #{block.2} parent=11 // pred_fallthru
        _
      // Predicated region
      $region17: #{block.2} parent=11 // pred_check
        %p209 = pneg %p81
      $region18: #{block.2} parent=11 // pred_check_branch
        %211 = sbr.rel (%p209) target = $region20
      $region19: #{block.2} parent=11 // pred_region
        _
      $region20: #{block.2} parent=11 // pred_fallthru
        _
      // Predicated region
      $region21: #{block.2} parent=11 // pred_check
        %p212 = pneg %p102
      $region22: #{block.2} parent=11 // pred_check_branch
        %214 = sbr.rel (%p212) target = $region24
      $region23: #{block.2} parent=11 // pred_region
        _
      $region24: #{block.2} parent=11 // pred_fallthru
        _
      // Predicated region
      $region25: #{block.2} parent=11 // pred_check
        %p215 = pneg %p123
      $region26: #{block.2} parent=11 // pred_check_branch
        %217 = sbr.rel (%p215) target = $region28
      $region27: #{block.2} parent=11 // pred_region
        _
      $region28: #{block.2} parent=11 // pred_fallthru
        _
      // Predicated region
      $region29: #{block.2} parent=11 // pred_check
        %p218 = pneg %p144
      $region30: #{block.2} parent=11 // pred_check_branch
        %220 = sbr.rel (%p218) target = $region32
      $region31: #{block.2} parent=11 // pred_region
        _
      $region32: #{block.2} parent=11 // pred_fallthru
        _
      // Predicated region
      $region33: #{block.2} parent=11 // pred_check
        %p221 = pneg %p165
      $region34: #{block.2} parent=11 // pred_check_branch
        %223 = sbr.rel (%p221) target = $region36
      $region35: #{block.2} parent=11 // pred_region
        _
      $region36: #{block.2} parent=11 // pred_fallthru
        _
    $region12: #{block.2} parent=5 // pred_fallthru
      _
    %p224 = scmp.lt.s32.totalorder %s13, 2
    // Predicated region
    $region37: #{block.2} parent=5 // pred_check
      %p225 = pneg %p224
    $region38: #{block.2} parent=5 // pred_check_branch
      %227 = sbr.rel (%p225) target = $region40
    $region39: #{block.2} parent=5 // pred_region
      // Predicated region
      $region41: #{block.2} parent=39 // pred_check
        %p228 = pneg %p33
      $region42: #{block.2} parent=39 // pred_check_branch
        %230 = sbr.rel (%p228) target = $region44
      $region43: #{block.2} parent=39 // pred_region
        %p231 = scmp.lt.s32.totalorder %s13, 1
        %s232 = scalar_select %p231, %s13, 1
        %s233 = smul.addr %s232, 2
        %s234 = smul.addr %s233, 8
        %s235 = scalar_lea.vmem %s0, %s234
      $region44: #{block.2} parent=39 // pred_fallthru
        _
    $region40: #{block.2} parent=5 // pred_fallthru
      _
    %p236 = scmp.le.s32.totalorder 1, %s13
    %p237 = scmp.lt.s32.totalorder %s13, 3
    %p238 = pnand %p236, %p237
    %p239 = pneg %p238
    // Predicated region
    $region45: #{block.2} parent=5 // pred_check
      _
    $region46: #{block.2} parent=5 // pred_check_branch
      %241 = sbr.rel (%p238) target = $region48
    $region47: #{block.2} parent=5 // pred_region
      %s242 = ssub.s32 %s13, 1
      %p243 = scmp.lt.s32.totalorder %s18, 1
      %s244 = scalar_select %p243, %s18, 1
      %s245 = smul.addr %s244, 2
      %s246 = smul.addr %s245, 8
      %s247 = scalar_lea.vmem %s0, %s246
      %p248 = pneg %p39
      %p249 = pneg %p36
      %p250 = pneg %p60
      %p251 = pneg %p57
      %p252 = pneg %p81
      %p253 = pneg %p78
      %p254 = pneg %p102
      %p255 = pneg %p99
      %p256 = pneg %p123
      %p257 = pneg %p120
      %p258 = pneg %p144
      %p259 = pneg %p141
      %p260 = pneg %p165
      %p261 = pneg %p162
      %p262 = pneg %p191
      %p263 = pneg %p188
      %p264 = scmp.lt.s32.totalorder %s18, 1
      %s265 = scalar_select %p264, %s18, 1
      %s266 = smul.addr %s265, 2
      %s267 = smul.addr %s266, 8
      %s268 = scalar_lea.vmem %s7, %s267
      %p269 = scmp.lt.s32.totalorder %s18, 1
      %s270 = scalar_select %p269, %s18, 1
      %s271 = smul.addr %s270, 2
      %s272 = smul.addr %s271, 8
      %s273 = scalar_lea.vmem %s0, %s272
      %p274 = scmp.lt.s32.totalorder %s18, 1
      %s275 = scalar_select %p274, %s18, 1
      %s276 = smul.addr %s275, 2
      %s277 = smul.addr %s276, 8
      %s278 = scalar_lea.vmem %s7, %s277
      %v280 = vld [vmem:[%s1] sm:$0x1]
      %v281 = vld [vmem:[%s2] sm:$0x1]
      %v282 = vld [vmem:[%s3] sm:$0xff]
      %v283 = vld [vmem:[%s3 + $0x8] sm:$0xff]
      %v284 = vld [vmem:[%s3 + $0x10] sm:$0xff]
      %v285 = vld [vmem:[%s3 + $0x18] sm:$0xff]
      %v286 = vld [vmem:[%s3 + $0x20] sm:$0xff]
      %v287 = vld [vmem:[%s3 + $0x28] sm:$0xff]
      %v288 = vld [vmem:[%s3 + $0x30] sm:$0xff]
      %v289 = vld [vmem:[%s3 + $0x38] sm:$0xff]
      %v290 = vld [vmem:[%s4] sm:$0x3]
      %v291 = vld [vmem:[%s5] sm:$0xf]
      %v292 = vld [vmem:[%s5 + $0x4] sm:$0xf]
      %v293 = vld [vmem:[%s5 + $0x8] sm:$0xf]
      %v294 = vld [vmem:[%s5 + $0xc] sm:$0xf]
      %v295 = vld [vmem:[%s5 + $0x10] sm:$0xf]
      %v296 = vld [vmem:[%s5 + $0x14] sm:$0xf]
      %v297 = vld [vmem:[%s5 + $0x18] sm:$0xf]
      %v298 = vld [vmem:[%s5 + $0x1c] sm:$0xf]
      %v299 = vld [vmem:[%s6] sm:$0x1]
      %v300 = vld [vmem:[%s273] sm:$0xff]
      %v301 = vld [vmem:[%s273 + $0x8] sm:$0x1]
      %vm302 = vcmask 523264
      %v303 = vsel %vm302, %v300, 0.0
      %304 = vadd.xlane.f32.xlu0 %v303
      %v305 = vpop.xlane.xlu0 %304
      %vm306 = vcmask 516096
      %v307 = vsel %vm306, %v301, 0.0
      %308 = vadd.xlane.f32.xlu0 %v307
      %v309 = vpop.xlane.xlu0 %308
      %v310 = vrcp.pop 64.0
      %v311 = vmul.f32 %v305, %v310
      %v312 = vmul.f32 %v309, %v310
      %v313 = vsub.f32 %v300, %v311
      %v314 = vsub.f32 %v301, %v312
      %v315 = vmul.f32 %v313, %v313
      %v316 = vmul.f32 %v314, %v314
      %v317 = vsel %vm302, %v315, 0.0
      %318 = vadd.xlane.f32.xlu0 %v317
      %v319 = vpop.xlane.xlu0 %318
      %v320 = vsel %vm306, %v316, 0.0
      %321 = vadd.xlane.f32.xlu0 %v320
      %v322 = vpop.xlane.xlu0 %321
      %v323 = vmul.f32 %v319, %v310
      %v324 = vmul.f32 %v322, %v310
      %v325 = vadd.f32 %v323, 1e-05
      %v326 = vadd.f32 %v324, 1e-05
      %v327 = vrsqrt.pop %v325
      %v328 = vrsqrt.pop %v326
      %v329 = vmul.f32 %v313, %v327
      %v330 = vmul.f32 %v314, %v328
      %v332 = vlaneseq
      %v333 = vshrl.u32 %v332, 7
      %v334 = vsub.s32 0, %v333
      %v335 = vrot.slane %v280, %v334
      %v337 = vmul.f32 %v329, %v335
      %v338 = vmul.f32 %v330, %v335
      %v340 = vlaneseq
      %v341 = vshrl.u32 %v340, 7
      %v342 = vsub.s32 0, %v341
      %v343 = vrot.slane %v281, %v342
      %v345 = vadd.f32 %v337, %v343
      %v346 = vadd.f32 %v338, %v343
      %v347 = vpack.c.bf16 %v346, %v345
      %v349 = vlaneseq
      %v350 = vshrl.u32 %v349, 7
      %v351 = vsub.s32 0, %v350
      %v352 = vrot.slane %v290, %v351
      %v353 = vlaneseq
      %v354 = vshrl.u32 %v353, 7
      %v355 = vsub.s32 1, %v354
      %v356 = vrot.slane %v290, %v355
      %v367 = vunpack.c.l.b16 %v282
      %v368 = vunpack.c.h.b16 %v282
      %v369 = vunpack.c.l.b16 %v283
      %v370 = vunpack.c.h.b16 %v283
      %v371 = vunpack.c.l.b16 %v284
      %v372 = vunpack.c.h.b16 %v284
      %v373 = vunpack.c.l.b16 %v285
      %v374 = vunpack.c.h.b16 %v285
      %v375 = vunpack.c.l.b16 %v286
      %v376 = vunpack.c.h.b16 %v286
      %v377 = vunpack.c.l.b16 %v287
      %v378 = vunpack.c.h.b16 %v287
      %v379 = vunpack.c.l.b16 %v288
      %v380 = vunpack.c.h.b16 %v288
      %v381 = vunpack.c.l.b16 %v289
      %v382 = vunpack.c.h.b16 %v289
      %v383 = vpack.c.b16 %v369, %v367
      %v384 = vpack.c.b16 %v370, %v368
      %v385 = vpack.c.b16 %v373, %v371
      %v386 = vpack.c.b16 %v374, %v372
      %v387 = vpack.c.b16 %v377, %v375
      %v388 = vpack.c.b16 %v378, %v376
      %v389 = vpack.c.b16 %v381, %v379
      %v390 = vpack.c.b16 %v382, %v380
      %v400 = vsel %vm302, %v347, 0
      %402 = vmatprep.subr.bf16.mxu0 %v384
      %403 = vmatpush1.bf16.msra.mxu0 %v383
      %404 = vmatprep.subr.bf16.mxu0 %v386
      %405 = vmatpush1.bf16.msra.mxu0 %v385
      %406 = vmatprep.subr.bf16.mxu0 %v388
      %407 = vmatpush1.bf16.msra.mxu0 %v387
      %408 = vmatprep.subr.bf16.mxu0 %v390
      %409 = vmatpush1.bf16.msra.mxu0 %v389
      %410 = vmatprep.subr.bf16.mxu0 0
      %411 = vmatpush1.bf16.msra.mxu0 0
      %412 = vmatprep.subr.bf16.mxu0 0
      %413 = vmatpush1.bf16.msra.mxu0 0
      %414 = vmatprep.subr.bf16.mxu0 0
      %415 = vmatpush1.bf16.msra.mxu0 0
      %416 = vmatprep.subr.bf16.mxu0 0
      %417 = vmatpush1.bf16.msra.mxu0 0
      %418 = vmatprep.subr.bf16.mxu0 0
      %419 = vmatpush1.bf16.msra.mxu0 0
      %420 = vmatprep.subr.bf16.mxu0 0
      %421 = vmatpush1.bf16.msra.mxu0 0
      %422 = vmatprep.subr.bf16.mxu0 0
      %423 = vmatpush1.bf16.msra.mxu0 0
      %424 = vmatprep.subr.bf16.mxu0 0
      %425 = vmatpush1.bf16.msra.mxu0 0
      %426 = vmatprep.subr.bf16.mxu0 0
      %427 = vmatpush1.bf16.msra.mxu0 0
      %428 = vmatprep.subr.bf16.mxu0 0
      %429 = vmatpush1.bf16.msra.mxu0 0
      %430 = vmatprep.subr.bf16.mxu0 0
      %431 = vmatpush1.bf16.msra.mxu0 0
      %432 = vmatprep.subr.bf16.mxu0 0
      %433 = vmatpush1.bf16.msra.mxu0 0
      %434 = vmatprep.mubr.bf16.mxu0 0
      %435 = vmatmul.mubr.bf16.gmra.mrb[0].mxu0 %v400
      %v436 = vpop.f32.mrb[0].mxu0
      %v437 = vadd.f32 %v352, %v436
      %v438 = vpop.f32.mrb[0].mxu0
      %v439 = vadd.f32 %v356, %v438
      %v440 = vpop.f32.mrb[0].mxu0
      %v441 = vadd.f32 %v352, %v440
      %v442 = vpop.f32.mrb[0].mxu0
      %v443 = vadd.f32 %v356, %v442
      %444 = vdwg.mxu0
      %447 = vrot.lane.b32.xlu0 %v437, 64
      %v448 = vpop.permute.xlu0 %447
      %449 = vrot.lane.b32.xlu0 %v441, 64
      %v450 = vpop.permute.xlu0 %449
      %vm451 = vcmask 64512
      %v452 = vsel %vm451, %v437, 0
      %v454 = vsel %vm451, %v441, 0
      %v456 = vsel %vm451, %v448, 0
      %v458 = vsel %vm451, %v450, 0
      %460 = vmatprep.subr.mxu0 0.0
      %461 = vmatpush1.xpose.msra.mxu0 %v456
      %462 = vmatprep.subr.mxu0 0.0
      %463 = vmatpush1.xpose.msra.mxu0 %v458
      %464 = vmatprep.subr.mxu0 0.0
      %465 = vmatpush1.xpose.msra.mxu0 0.0
      %466 = vmatprep.subr.mxu0 0.0
      %467 = vmatpush1.xpose.msra.mxu0 0.0
      %468 = vmatprep.subr.mxu0 0.0
      %469 = vmatpush1.xpose.msra.mxu0 0.0
      %470 = vmatprep.subr.mxu0 0.0
      %471 = vmatpush1.xpose.msra.mxu0 0.0
      %472 = vmatprep.subr.mxu0 0.0
      %473 = vmatpush1.xpose.msra.mxu0 0.0
      %474 = vmatprep.subr.mxu0 0.0
      %475 = vmatpush1.xpose.msra.mxu0 0.0
      %476 = vmatprep.subr.mxu0 0.0
      %477 = vmatpush1.xpose.msra.mxu0 0.0
      %478 = vmatprep.subr.mxu0 0.0
      %479 = vmatpush1.xpose.msra.mxu0 0.0
      %480 = vmatprep.subr.mxu0 0.0
      %481 = vmatpush1.xpose.msra.mxu0 0.0
      %482 = vmatprep.subr.mxu0 0.0
      %483 = vmatpush1.xpose.msra.mxu0 0.0
      %484 = vmatprep.subr.mxu0 0.0
      %485 = vmatpush1.xpose.msra.mxu0 0.0
      %486 = vmatprep.subr.mxu0 0.0
      %487 = vmatpush1.xpose.msra.mxu0 0.0
      %488 = vmatprep.subr.mxu0 0.0
      %489 = vmatpush1.xpose.msra.mxu0 0.0
      %490 = vmatprep.subr.mxu0 0.0
      %491 = vmatpush1.xpose.msra.mxu0 0.0
      %492 = vmatprep.subr.mxu0 0.0
      %493 = vmatpush1.xpose.msra.mxu0 0.0
      %494 = vmatprep.subr.mxu0 0.0
      %495 = vmatpush1.xpose.msra.mxu0 0.0
      %496 = vmatprep.subr.mxu0 0.0
      %497 = vmatpush1.xpose.msra.mxu0 0.0
      %498 = vmatprep.subr.mxu0 0.0
      %499 = vmatpush1.xpose.msra.mxu0 0.0
      %500 = vmatprep.subr.mxu0 0.0
      %501 = vmatpush1.xpose.msra.mxu0 0.0
      %502 = vmatprep.subr.mxu0 0.0
      %503 = vmatpush1.xpose.msra.mxu0 0.0
      %504 = vmatprep.subr.mxu0 0.0
      %505 = vmatpush1.xpose.msra.mxu0 0.0
      %506 = vmatprep.subr.mxu0 0.0
      %507 = vmatpush1.xpose.msra.mxu0 0.0
      %508 = vmatprep.subr.mxu0 0.0
      %509 = vmatpush1.xpose.msra.mxu0 0.0
      %510 = vmatprep.subr.mxu0 0.0
      %511 = vmatpush1.xpose.msra.mxu0 0.0
      %512 = vmatprep.subr.mxu0 0.0
      %513 = vmatpush1.xpose.msra.mxu0 0.0
      %514 = vmatprep.subr.mxu0 0.0
      %515 = vmatpush1.xpose.msra.mxu0 0.0
      %516 = vmatprep.subr.mxu0 0.0
      %517 = vmatpush1.xpose.msra.mxu0 0.0
      %518 = vmatprep.subr.mxu0 0.0
      %519 = vmatpush1.xpose.msra.mxu0 0.0
      %520 = vmatprep.subr.mxu0 0.0
      %521 = vmatpush1.xpose.msra.mxu0 0.0
      %522 = vmatprep.subr.mxu0 0.0
      %523 = vmatpush1.xpose.msra.mxu0 0.0
      %524 = vmatprep.mubr.f32.mxu0 0.0
      %525 = vmatmul.mubr.f32.gmra.mrb[0].mxu0 %v452
      %v526 = vpop.f32.mrb[0].mxu0
      %v527 = vadd.f32 0.0, %v526
      %v528 = vpop.f32.mrb[0].mxu0
      %529 = vmatprep.mubr.f32.mxu0 0.0
      %530 = vmatmul.mubr.f32.gmra.mrb[0].mxu0 %v454
      %v531 = vpop.f32.mrb[0].mxu0
      %v532 = vadd.f32 0.0, %v531
      %v533 = vpop.f32.mrb[0].mxu0
      %534 = vdwg.mxu0
      %vm535 = vcmask 72704
      %v536 = vsel %vm535, %v527, -inf
      %537 = vmax.xlane.f32.xlu0 %v536
      %v538 = vpop.xlane.xlu0 %537
      %vm539 = vcmask 65536
      %v540 = vsel %vm539, %v532, -inf
      %541 = vmax.xlane.f32.xlu0 %v540
      %v542 = vpop.xlane.xlu0 %541
      %v543 = vsub.f32 %v527, %v538
      %v544 = vsub.f32 %v532, %v542
      %v545 = vmul.f32 %v543, 1.442695
      %v546 = vpow.pop %v545
      %v547 = vmul.f32 %v544, 1.442695
      %v548 = vpow.pop %v547
      %v549 = vsel %vm535, %v546, 0.0
      %550 = vadd.xlane.f32.xlu0 %v549
      %v551 = vpop.xlane.xlu0 %550
      %v552 = vsel %vm539, %v548, 0.0
      %553 = vadd.xlane.f32.xlu0 %v552
      %v554 = vpop.xlane.xlu0 %553
      %v556 = vsel %vm535, %v546, 0
      %v559 = vsel %vm535, %v548, 0
      %vm561 = vcmask 1040384
      %v563 = vsel %vm561, %v443, 0
      %565 = vmatprep.subr.mxu0 0.0
      %566 = vmatpush1.msra.mxu0 %v439
      %567 = vmatprep.subr.mxu0 0.0
      %568 = vmatpush1.msra.mxu0 %v563
      %569 = vmatprep.subr.mxu0 0.0
      %570 = vmatpush1.msra.mxu0 0.0
      %571 = vmatprep.subr.mxu0 0.0
      %572 = vmatpush1.msra.mxu0 0.0
      %573 = vmatprep.subr.mxu0 0.0
      %574 = vmatpush1.msra.mxu0 0.0
      %575 = vmatprep.subr.mxu0 0.0
      %576 = vmatpush1.msra.mxu0 0.0
      %577 = vmatprep.subr.mxu0 0.0
      %578 = vmatpush1.msra.mxu0 0.0
      %579 = vmatprep.subr.mxu0 0.0
      %580 = vmatpush1.msra.mxu0 0.0
      %581 = vmatprep.subr.mxu0 0.0
      %582 = vmatpush1.msra.mxu0 0.0
      %583 = vmatprep.subr.mxu0 0.0
      %584 = vmatpush1.msra.mxu0 0.0
      %585 = vmatprep.subr.mxu0 0.0
      %586 = vmatpush1.msra.mxu0 0.0
      %587 = vmatprep.subr.mxu0 0.0
      %588 = vmatpush1.msra.mxu0 0.0
      %589 = vmatprep.subr.mxu0 0.0
      %590 = vmatpush1.msra.mxu0 0.0
      %591 = vmatprep.subr.mxu0 0.0
      %592 = vmatpush1.msra.mxu0 0.0
      %593 = vmatprep.subr.mxu0 0.0
      %594 = vmatpush1.msra.mxu0 0.0
      %595 = vmatprep.subr.mxu0 0.0
      %596 = vmatpush1.msra.mxu0 0.0
      %597 = vmatprep.subr.mxu0 0.0
      %598 = vmatpush1.msra.mxu0 0.0
      %599 = vmatprep.subr.mxu0 0.0
      %600 = vmatpush1.msra.mxu0 0.0
      %601 = vmatprep.subr.mxu0 0.0
      %602 = vmatpush1.msra.mxu0 0.0
      %603 = vmatprep.subr.mxu0 0.0
      %604 = vmatpush1.msra.mxu0 0.0
      %605 = vmatprep.subr.mxu0 0.0
      %606 = vmatpush1.msra.mxu0 0.0
      %607 = vmatprep.subr.mxu0 0.0
      %608 = vmatpush1.msra.mxu0 0.0
      %609 = vmatprep.subr.mxu0 0.0
      %610 = vmatpush1.msra.mxu0 0.0
      %611 = vmatprep.subr.mxu0 0.0
      %612 = vmatpush1.msra.mxu0 0.0
      %613 = vmatprep.subr.mxu0 0.0
      %614 = vmatpush1.msra.mxu0 0.0
      %615 = vmatprep.subr.mxu0 0.0
      %616 = vmatpush1.msra.mxu0 0.0
      %617 = vmatprep.subr.mxu0 0.0
      %618 = vmatpush1.msra.mxu0 0.0
      %619 = vmatprep.subr.mxu0 0.0
      %620 = vmatpush1.msra.mxu0 0.0
      %621 = vmatprep.subr.mxu0 0.0
      %622 = vmatpush1.msra.mxu0 0.0
      %623 = vmatprep.subr.mxu0 0.0
      %624 = vmatpush1.msra.mxu0 0.0
      %625 = vmatprep.subr.mxu0 0.0
      %626 = vmatpush1.msra.mxu0 0.0
      %627 = vmatprep.subr.mxu0 0.0
      %628 = vmatpush1.msra.mxu0 0.0
      %629 = vmatprep.mubr.f32.mxu0 0.0
      %630 = vmatmul.mubr.f32.gmra.mrb[0].mxu0 %v556
      %v631 = vpop.f32.mrb[0].mxu0
      %v632 = vadd.f32 0.0, %v631
      %v633 = vpop.f32.mrb[0].mxu0
      %634 = vmatprep.mubr.f32.mxu0 0.0
      %635 = vmatmul.mubr.f32.gmra.mrb[0].mxu0 %v559
      %v636 = vpop.f32.mrb[0].mxu0
      %v637 = vadd.f32 0.0, %v636
      %v638 = vpop.f32.mrb[0].mxu0
      %639 = vdwg.mxu0
      %v640 = vrcp.pop %v551
      %v641 = vrcp.pop %v554
      %v642 = vmul.f32 %v640, 0.125
      %v643 = vmul.f32 %v641, 0.125
      %v644 = vmul.f32 %v632, %v642
      %v645 = vmul.f32 %v637, %v643
      %646 = vrot.lane.b32.xlu0 %v437, 120
      %v647 = vpop.permute.xlu0 %646
      %648 = vrot.lane.b32.xlu0 %v441, 120
      %v649 = vpop.permute.xlu0 %648
      %650 = vrot.lane.b32.xlu0 %v437, 56
      %v651 = vpop.permute.xlu0 %650
      %652 = vrot.lane.b32.xlu0 %v441, 56
      %v653 = vpop.permute.xlu0 %652
      %v654 = vsel %vm451, %v647, 0
      %v656 = vsel %vm451, %v649, 0
      %v658 = vsel %vm451, %v651, 0
      %v660 = vsel %vm451, %v653, 0
      %662 = vmatprep.subr.mxu0 0.0
      %663 = vmatpush1.xpose.msra.mxu0 %v658
      %664 = vmatprep.subr.mxu0 0.0
      %665 = vmatpush1.xpose.msra.mxu0 %v660
      %666 = vmatprep.subr.mxu0 0.0
      %667 = vmatpush1.xpose.msra.mxu0 0.0
      %668 = vmatprep.subr.mxu0 0.0
      %669 = vmatpush1.xpose.msra.mxu0 0.0
      %670 = vmatprep.subr.mxu0 0.0
      %671 = vmatpush1.xpose.msra.mxu0 0.0
      %672 = vmatprep.subr.mxu0 0.0
      %673 = vmatpush1.xpose.msra.mxu0 0.0
      %674 = vmatprep.subr.mxu0 0.0
      %675 = vmatpush1.xpose.msra.mxu0 0.0
      %676 = vmatprep.subr.mxu0 0.0
      %677 = vmatpush1.xpose.msra.mxu0 0.0
      %678 = vmatprep.subr.mxu0 0.0
      %679 = vmatpush1.xpose.msra.mxu0 0.0
      %680 = vmatprep.subr.mxu0 0.0
      %681 = vmatpush1.xpose.msra.mxu0 0.0
      %682 = vmatprep.subr.mxu0 0.0
      %683 = vmatpush1.xpose.msra.mxu0 0.0
      %684 = vmatprep.subr.mxu0 0.0
      %685 = vmatpush1.xpose.msra.mxu0 0.0
      %686 = vmatprep.subr.mxu0 0.0
      %687 = vmatpush1.xpose.msra.mxu0 0.0
      %688 = vmatprep.subr.mxu0 0.0
      %689 = vmatpush1.xpose.msra.mxu0 0.0
      %690 = vmatprep.subr.mxu0 0.0
      %691 = vmatpush1.xpose.msra.mxu0 0.0
      %692 = vmatprep.subr.mxu0 0.0
      %693 = vmatpush1.xpose.msra.mxu0 0.0
      %694 = vmatprep.subr.mxu0 0.0
      %695 = vmatpush1.xpose.msra.mxu0 0.0
      %696 = vmatprep.subr.mxu0 0.0
      %697 = vmatpush1.xpose.msra.mxu0 0.0
      %698 = vmatprep.subr.mxu0 0.0
      %699 = vmatpush1.xpose.msra.mxu0 0.0
      %700 = vmatprep.subr.mxu0 0.0
      %701 = vmatpush1.xpose.msra.mxu0 0.0
      %702 = vmatprep.subr.mxu0 0.0
      %703 = vmatpush1.xpose.msra.mxu0 0.0
      %704 = vmatprep.subr.mxu0 0.0
      %705 = vmatpush1.xpose.msra.mxu0 0.0
      %706 = vmatprep.subr.mxu0 0.0
      %707 = vmatpush1.xpose.msra.mxu0 0.0
      %708 = vmatprep.subr.mxu0 0.0
      %709 = vmatpush1.xpose.msra.mxu0 0.0
      %710 = vmatprep.subr.mxu0 0.0
      %711 = vmatpush1.xpose.msra.mxu0 0.0
      %712 = vmatprep.subr.mxu0 0.0
      %713 = vmatpush1.xpose.msra.mxu0 0.0
      %714 = vmatprep.subr.mxu0 0.0
      %715 = vmatpush1.xpose.msra.mxu0 0.0
      %716 = vmatprep.subr.mxu0 0.0
      %717 = vmatpush1.xpose.msra.mxu0 0.0
      %718 = vmatprep.subr.mxu0 0.0
      %719 = vmatpush1.xpose.msra.mxu0 0.0
      %720 = vmatprep.subr.mxu0 0.0
      %721 = vmatpush1.xpose.msra.mxu0 0.0
      %722 = vmatprep.subr.mxu0 0.0
      %723 = vmatpush1.xpose.msra.mxu0 0.0
      %724 = vmatprep.subr.mxu0 0.0
      %725 = vmatpush1.xpose.msra.mxu0 0.0
      %726 = vmatprep.mubr.f32.mxu0 0.0
      %727 = vmatmul.mubr.f32.gmra.mrb[0].mxu0 %v654
      %v728 = vpop.f32.mrb[0].mxu0
      %v729 = vadd.f32 0.0, %v728
      %v730 = vpop.f32.mrb[0].mxu0
      %731 = vmatprep.mubr.f32.mxu0 0.0
      %732 = vmatmul.mubr.f32.gmra.mrb[0].mxu0 %v656
      %v733 = vpop.f32.mrb[0].mxu0
      %v734 = vadd.f32 0.0, %v733
      %v735 = vpop.f32.mrb[0].mxu0
      %736 = vdwg.mxu0
      %v737 = vsel %vm535, %v729, -inf
      %738 = vmax.xlane.f32.xlu0 %v737
      %v739 = vpop.xlane.xlu0 %738
      %v740 = vsel %vm539, %v734, -inf
      %741 = vmax.xlane.f32.xlu0 %v740
      %v742 = vpop.xlane.xlu0 %741
      %v743 = vsub.f32 %v729, %v739
      %v744 = vsub.f32 %v734, %v742
      %v745 = vmul.f32 %v743, 1.442695
      %v746 = vpow.pop %v745
      %v747 = vmul.f32 %v744, 1.442695
      %v748 = vpow.pop %v747
      %v749 = vsel %vm535, %v746, 0.0
      %750 = vadd.xlane.f32.xlu0 %v749
      %v751 = vpop.xlane.xlu0 %750
      %v752 = vsel %vm539, %v748, 0.0
      %753 = vadd.xlane.f32.xlu0 %v752
      %v754 = vpop.xlane.xlu0 %753
      %756 = vrot.lane.b32.xlu0 %v439, 120
      %v757 = vpop.permute.xlu0 %756
      %758 = vrot.lane.b32.xlu0 %v443, 120
      %v759 = vpop.permute.xlu0 %758
      %v762 = vsel %vm535, %v746, 0
      %v765 = vsel %vm535, %v748, 0
      %v767 = vsel %vm561, %v759, 0
      %769 = vmatprep.subr.mxu0 0.0
      %770 = vmatpush1.msra.mxu0 %v757
      %771 = vmatprep.subr.mxu0 0.0
      %772 = vmatpush1.msra.mxu0 %v767
      %773 = vmatprep.subr.mxu0 0.0
      %774 = vmatpush1.msra.mxu0 0.0
      %775 = vmatprep.subr.mxu0 0.0
      %776 = vmatpush1.msra.mxu0 0.0
      %777 = vmatprep.subr.mxu0 0.0
      %778 = vmatpush1.msra.mxu0 0.0
      %779 = vmatprep.subr.mxu0 0.0
      %780 = vmatpush1.msra.mxu0 0.0
      %781 = vmatprep.subr.mxu0 0.0
      %782 = vmatpush1.msra.mxu0 0.0
      %783 = vmatprep.subr.mxu0 0.0
      %784 = vmatpush1.msra.mxu0 0.0
      %785 = vmatprep.subr.mxu0 0.0
      %786 = vmatpush1.msra.mxu0 0.0
      %787 = vmatprep.subr.mxu0 0.0
      %788 = vmatpush1.msra.mxu0 0.0
      %789 = vmatprep.subr.mxu0 0.0
      %790 = vmatpush1.msra.mxu0 0.0
      %791 = vmatprep.subr.mxu0 0.0
      %792 = vmatpush1.msra.mxu0 0.0
      %793 = vmatprep.subr.mxu0 0.0
      %794 = vmatpush1.msra.mxu0 0.0
      %795 = vmatprep.subr.mxu0 0.0
      %796 = vmatpush1.msra.mxu0 0.0
      %797 = vmatprep.subr.mxu0 0.0
      %798 = vmatpush1.msra.mxu0 0.0
      %799 = vmatprep.subr.mxu0 0.0
      %800 = vmatpush1.msra.mxu0 0.0
      %801 = vmatprep.subr.mxu0 0.0
      %802 = vmatpush1.msra.mxu0 0.0
      %803 = vmatprep.subr.mxu0 0.0
      %804 = vmatpush1.msra.mxu0 0.0
      %805 = vmatprep.subr.mxu0 0.0
      %806 = vmatpush1.msra.mxu0 0.0
      %807 = vmatprep.subr.mxu0 0.0
      %808 = vmatpush1.msra.mxu0 0.0
      %809 = vmatprep.subr.mxu0 0.0
      %810 = vmatpush1.msra.mxu0 0.0
      %811 = vmatprep.subr.mxu0 0.0
      %812 = vmatpush1.msra.mxu0 0.0
      %813 = vmatprep.subr.mxu0 0.0
      %814 = vmatpush1.msra.mxu0 0.0
      %815 = vmatprep.subr.mxu0 0.0
      %816 = vmatpush1.msra.mxu0 0.0
      %817 = vmatprep.subr.mxu0 0.0
      %818 = vmatpush1.msra.mxu0 0.0
      %819 = vmatprep.subr.mxu0 0.0
      %820 = vmatpush1.msra.mxu0 0.0
      %821 = vmatprep.subr.mxu0 0.0
      %822 = vmatpush1.msra.mxu0 0.0
      %823 = vmatprep.subr.mxu0 0.0
      %824 = vmatpush1.msra.mxu0 0.0
      %825 = vmatprep.subr.mxu0 0.0
      %826 = vmatpush1.msra.mxu0 0.0
      %827 = vmatprep.subr.mxu0 0.0
      %828 = vmatpush1.msra.mxu0 0.0
      %829 = vmatprep.subr.mxu0 0.0
      %830 = vmatpush1.msra.mxu0 0.0
      %831 = vmatprep.subr.mxu0 0.0
      %832 = vmatpush1.msra.mxu0 0.0
      %833 = vmatprep.mubr.f32.mxu0 0.0
      %834 = vmatmul.mubr.f32.gmra.mrb[0].mxu0 %v762
      %v835 = vpop.f32.mrb[0].mxu0
      %v836 = vadd.f32 0.0, %v835
      %v837 = vpop.f32.mrb[0].mxu0
      %838 = vmatprep.mubr.f32.mxu0 0.0
      %839 = vmatmul.mubr.f32.gmra.mrb[0].mxu0 %v765
      %v840 = vpop.f32.mrb[0].mxu0
      %v841 = vadd.f32 0.0, %v840
      %v842 = vpop.f32.mrb[0].mxu0
      %843 = vdwg.mxu0
      %v844 = vrcp.pop %v751
      %v845 = vrcp.pop %v754
      %v846 = vmul.f32 %v844, 0.125
      %v847 = vmul.f32 %v845, 0.125
      %v848 = vmul.f32 %v836, %v846
      %v849 = vmul.f32 %v841, %v847
      %850 = vrot.lane.b32.xlu0 %v437, 112
      %v851 = vpop.permute.xlu0 %850
      %852 = vrot.lane.b32.xlu0 %v441, 112
      %v853 = vpop.permute.xlu0 %852
      %854 = vrot.lane.b32.xlu0 %v437, 48
      %v855 = vpop.permute.xlu0 %854
      %856 = vrot.lane.b32.xlu0 %v441, 48
      %v857 = vpop.permute.xlu0 %856
      %v858 = vsel %vm451, %v851, 0
      %v860 = vsel %vm451, %v853, 0
      %v862 = vsel %vm451, %v855, 0
      %v864 = vsel %vm451, %v857, 0
      %866 = vmatprep.subr.mxu0 0.0
      %867 = vmatpush1.xpose.msra.mxu0 %v862
      %868 = vmatprep.subr.mxu0 0.0
      %869 = vmatpush1.xpose.msra.mxu0 %v864
      %870 = vmatprep.subr.mxu0 0.0
      %871 = vmatpush1.xpose.msra.mxu0 0.0
      %872 = vmatprep.subr.mxu0 0.0
      %873 = vmatpush1.xpose.msra.mxu0 0.0
      %874 = vmatprep.subr.mxu0 0.0
      %875 = vmatpush1.xpose.msra.mxu0 0.0
      %876 = vmatprep.subr.mxu0 0.0
      %877 = vmatpush1.xpose.msra.mxu0 0.0
      %878 = vmatprep.subr.mxu0 0.0
      %879 = vmatpush1.xpose.msra.mxu0 0.0
      %880 = vmatprep.subr.mxu0 0.0
      %881 = vmatpush1.xpose.msra.mxu0 0.0
      %882 = vmatprep.subr.mxu0 0.0
      %883 = vmatpush1.xpose.msra.mxu0 0.0
      %884 = vmatprep.subr.mxu0 0.0
      %885 = vmatpush1.xpose.msra.mxu0 0.0
      %886 = vmatprep.subr.mxu0 0.0
      %887 = vmatpush1.xpose.msra.mxu0 0.0
      %888 = vmatprep.subr.mxu0 0.0
      %889 = vmatpush1.xpose.msra.mxu0 0.0
      %890 = vmatprep.subr.mxu0 0.0
      %891 = vmatpush1.xpose.msra.mxu0 0.0
      %892 = vmatprep.subr.mxu0 0.0
      %893 = vmatpush1.xpose.msra.mxu0 0.0
      %894 = vmatprep.subr.mxu0 0.0
      %895 = vmatpush1.xpose.msra.mxu0 0.0
      %896 = vmatprep.subr.mxu0 0.0
      %897 = vmatpush1.xpose.msra.mxu0 0.0
      %898 = vmatprep.subr.mxu0 0.0
      %899 = vmatpush1.xpose.msra.mxu0 0.0
      %900 = vmatprep.subr.mxu0 0.0
      %901 = vmatpush1.xpose.msra.mxu0 0.0
      %902 = vmatprep.subr.mxu0 0.0
      %903 = vmatpush1.xpose.msra.mxu0 0.0
      %904 = vmatprep.subr.mxu0 0.0
      %905 = vmatpush1.xpose.msra.mxu0 0.0
      %906 = vmatprep.subr.mxu0 0.0
      %907 = vmatpush1.xpose.msra.mxu0 0.0
      %908 = vmatprep.subr.mxu0 0.0
      %909 = vmatpush1.xpose.msra.mxu0 0.0
      %910 = vmatprep.subr.mxu0 0.0
      %911 = vmatpush1.xpose.msra.mxu0 0.0
      %912 = vmatprep.subr.mxu0 0.0
      %913 = vmatpush1.xpose.msra.mxu0 0.0
      %914 = vmatprep.subr.mxu0 0.0
      %915 = vmatpush1.xpose.msra.mxu0 0.0
      %916 = vmatprep.subr.mxu0 0.0
      %917 = vmatpush1.xpose.msra.mxu0 0.0
      %918 = vmatprep.subr.mxu0 0.0
      %919 = vmatpush1.xpose.msra.mxu0 0.0
      %920 = vmatprep.subr.mxu0 0.0
      %921 = vmatpush1.xpose.msra.mxu0 0.0
      %922 = vmatprep.subr.mxu0 0.0
      %923 = vmatpush1.xpose.msra.mxu0 0.0
      %924 = vmatprep.subr.mxu0 0.0
      %925 = vmatpush1.xpose.msra.mxu0 0.0
      %926 = vmatprep.subr.mxu0 0.0
      %927 = vmatpush1.xpose.msra.mxu0 0.0
      %928 = vmatprep.subr.mxu0 0.0
      %929 = vmatpush1.xpose.msra.mxu0 0.0
      %930 = vmatprep.mubr.f32.mxu0 0.0
      %931 = vmatmul.mubr.f32.gmra.mrb[0].mxu0 %v858
      %v932 = vpop.f32.mrb[0].mxu0
      %v933 = vadd.f32 0.0, %v932
      %v934 = vpop.f32.mrb[0].mxu0
      %935 = vmatprep.mubr.f32.mxu0 0.0
      %936 = vmatmul.mubr.f32.gmra.mrb[0].mxu0 %v860
      %v937 = vpop.f32.mrb[0].mxu0
      %v938 = vadd.f32 0.0, %v937
      %v939 = vpop.f32.mrb[0].mxu0
      %940 = vdwg.mxu0
      %v941 = vsel %vm535, %v933, -inf
      %942 = vmax.xlane.f32.xlu0 %v941
      %v943 = vpop.xlane.xlu0 %942
      %v944 = vsel %vm539, %v938, -inf
      %945 = vmax.xlane.f32.xlu0 %v944
      %v946 = vpop.xlane.xlu0 %945
      %v947 = vsub.f32 %v933, %v943
      %v948 = vsub.f32 %v938, %v946
      %v949 = vmul.f32 %v947, 1.442695
      %v950 = vpow.pop %v949
      %v951 = vmul.f32 %v948, 1.442695
      %v952 = vpow.pop %v951
      %v953 = vsel %vm535, %v950, 0.0
      %954 = vadd.xlane.f32.xlu0 %v953
      %v955 = vpop.xlane.xlu0 %954
      %v956 = vsel %vm539, %v952, 0.0
      %957 = vadd.xlane.f32.xlu0 %v956
      %v958 = vpop.xlane.xlu0 %957
      %959 = vrot.lane.b32.xlu0 %v439, 112
      %v960 = vpop.permute.xlu0 %959
      %961 = vrot.lane.b32.xlu0 %v443, 112
      %v962 = vpop.permute.xlu0 %961
      %v965 = vsel %vm535, %v950, 0
      %v968 = vsel %vm535, %v952, 0
      %v970 = vsel %vm561, %v962, 0
      %972 = vmatprep.subr.mxu0 0.0
      %973 = vmatpush1.msra.mxu0 %v960
      %974 = vmatprep.subr.mxu0 0.0
      %975 = vmatpush1.msra.mxu0 %v970
      %976 = vmatprep.subr.mxu0 0.0
      %977 = vmatpush1.msra.mxu0 0.0
      %978 = vmatprep.subr.mxu0 0.0
      %979 = vmatpush1.msra.mxu0 0.0
      %980 = vmatprep.subr.mxu0 0.0
      %981 = vmatpush1.msra.mxu0 0.0
      %982 = vmatprep.subr.mxu0 0.0
      %983 = vmatpush1.msra.mxu0 0.0
      %984 = vmatprep.subr.mxu0 0.0
      %985 = vmatpush1.msra.mxu0 0.0
      %986 = vmatprep.subr.mxu0 0.0
      %987 = vmatpush1.msra.mxu0 0.0
      %988 = vmatprep.subr.mxu0 0.0
      %989 = vmatpush1.msra.mxu0 0.0
      %990 = vmatprep.subr.mxu0 0.0
      %991 = vmatpush1.msra.mxu0 0.0
      %992 = vmatprep.subr.mxu0 0.0
      %993 = vmatpush1.msra.mxu0 0.0
      %994 = vmatprep.subr.mxu0 0.0
      %995 = vmatpush1.msra.mxu0 0.0
      %996 = vmatprep.subr.mxu0 0.0
      %997 = vmatpush1.msra.mxu0 0.0
      %998 = vmatprep.subr.mxu0 0.0
      %999 = vmatpush1.msra.mxu0 0.0
      %1000 = vmatprep.subr.mxu0 0.0
      %1001 = vmatpush1.msra.mxu0 0.0
      %1002 = vmatprep.subr.mxu0 0.0
      %1003 = vmatpush1.msra.mxu0 0.0
      %1004 = vmatprep.subr.mxu0 0.0
      %1005 = vmatpush1.msra.mxu0 0.0
      %1006 = vmatprep.subr.mxu0 0.0
      %1007 = vmatpush1.msra.mxu0 0.0
      %1008 = vmatprep.subr.mxu0 0.0
      %1009 = vmatpush1.msra.mxu0 0.0
      %1010 = vmatprep.subr.mxu0 0.0
      %1011 = vmatpush1.msra.mxu0 0.0
      %1012 = vmatprep.subr.mxu0 0.0
      %1013 = vmatpush1.msra.mxu0 0.0
      %1014 = vmatprep.subr.mxu0 0.0
      %1015 = vmatpush1.msra.mxu0 0.0
      %1016 = vmatprep.subr.mxu0 0.0
      %1017 = vmatpush1.msra.mxu0 0.0
      %1018 = vmatprep.subr.mxu0 0.0
      %1019 = vmatpush1.msra.mxu0 0.0
      %1020 = vmatprep.subr.mxu0 0.0
      %1021 = vmatpush1.msra.mxu0 0.0
      %1022 = vmatprep.subr.mxu0 0.0
      %1023 = vmatpush1.msra.mxu0 0.0
      %1024 = vmatprep.subr.mxu0 0.0
      %1025 = vmatpush1.msra.mxu0 0.0
      %1026 = vmatprep.subr.mxu0 0.0
      %1027 = vmatpush1.msra.mxu0 0.0
      %1028 = vmatprep.subr.mxu0 0.0
      %1029 = vmatpush1.msra.mxu0 0.0
      %1030 = vmatprep.subr.mxu0 0.0
      %1031 = vmatpush1.msra.mxu0 0.0
      %1032 = vmatprep.subr.mxu0 0.0
      %1033 = vmatpush1.msra.mxu0 0.0
      %1034 = vmatprep.subr.mxu0 0.0
      %1035 = vmatpush1.msra.mxu0 0.0
      %1036 = vmatprep.mubr.f32.mxu0 0.0
      %1037 = vmatmul.mubr.f32.gmra.mrb[0].mxu0 %v965
      %v1038 = vpop.f32.mrb[0].mxu0
      %v1039 = vadd.f32 0.0, %v1038
      %v1040 = vpop.f32.mrb[0].mxu0
      %1041 = vmatprep.mubr.f32.mxu0 0.0
      %1042 = vmatmul.mubr.f32.gmra.mrb[0].mxu0 %v968
      %v1043 = vpop.f32.mrb[0].mxu0
      %v1044 = vadd.f32 0.0, %v1043
      %v1045 = vpop.f32.mrb[0].mxu0
      %1046 = vdwg.mxu0
      %v1047 = vrcp.pop %v955
      %v1048 = vrcp.pop %v958
      %v1049 = vmul.f32 %v1047, 0.125
      %v1050 = vmul.f32 %v1048, 0.125
      %v1051 = vmul.f32 %v1039, %v1049
      %v1052 = vmul.f32 %v1044, %v1050
      %1053 = vrot.lane.b32.xlu0 %v437, 104
      %v1054 = vpop.permute.xlu0 %1053
      %1055 = vrot.lane.b32.xlu0 %v441, 104
      %v1056 = vpop.permute.xlu0 %1055
      %1057 = vrot.lane.b32.xlu0 %v437, 40
      %v1058 = vpop.permute.xlu0 %1057
      %1059 = vrot.lane.b32.xlu0 %v441, 40
      %v1060 = vpop.permute.xlu0 %1059
      %v1061 = vsel %vm451, %v1054, 0
      %v1063 = vsel %vm451, %v1056, 0
      %v1065 = vsel %vm451, %v1058, 0
      %v1067 = vsel %vm451, %v1060, 0
      %1069 = vmatprep.subr.mxu0 0.0
      %1070 = vmatpush1.xpose.msra.mxu0 %v1065
      %1071 = vmatprep.subr.mxu0 0.0
      %1072 = vmatpush1.xpose.msra.mxu0 %v1067
      %1073 = vmatprep.subr.mxu0 0.0
      %1074 = vmatpush1.xpose.msra.mxu0 0.0
      %1075 = vmatprep.subr.mxu0 0.0
      %1076 = vmatpush1.xpose.msra.mxu0 0.0
      %1077 = vmatprep.subr.mxu0 0.0
      %1078 = vmatpush1.xpose.msra.mxu0 0.0
      %1079 = vmatprep.subr.mxu0 0.0
      %1080 = vmatpush1.xpose.msra.mxu0 0.0
      %1081 = vmatprep.subr.mxu0 0.0
      %1082 = vmatpush1.xpose.msra.mxu0 0.0
      %1083 = vmatprep.subr.mxu0 0.0
      %1084 = vmatpush1.xpose.msra.mxu0 0.0
      %1085 = vmatprep.subr.mxu0 0.0
      %1086 = vmatpush1.xpose.msra.mxu0 0.0
      %1087 = vmatprep.subr.mxu0 0.0
      %1088 = vmatpush1.xpose.msra.mxu0 0.0
      %1089 = vmatprep.subr.mxu0 0.0
      %1090 = vmatpush1.xpose.msra.mxu0 0.0
      %1091 = vmatprep.subr.mxu0 0.0
      %1092 = vmatpush1.xpose.msra.mxu0 0.0
      %1093 = vmatprep.subr.mxu0 0.0
      %1094 = vmatpush1.xpose.msra.mxu0 0.0
      %1095 = vmatprep.subr.mxu0 0.0
      %1096 = vmatpush1.xpose.msra.mxu0 0.0
      %1097 = vmatprep.subr.mxu0 0.0
      %1098 = vmatpush1.xpose.msra.mxu0 0.0
      %1099 = vmatprep.subr.mxu0 0.0
      %1100 = vmatpush1.xpose.msra.mxu0 0.0
      %1101 = vmatprep.subr.mxu0 0.0
      %1102 = vmatpush1.xpose.msra.mxu0 0.0
      %1103 = vmatprep.subr.mxu0 0.0
      %1104 = vmatpush1.xpose.msra.mxu0 0.0
      %1105 = vmatprep.subr.mxu0 0.0
      %1106 = vmatpush1.xpose.msra.mxu0 0.0
      %1107 = vmatprep.subr.mxu0 0.0
      %1108 = vmatpush1.xpose.msra.mxu0 0.0
      %1109 = vmatprep.subr.mxu0 0.0
      %1110 = vmatpush1.xpose.msra.mxu0 0.0
      %1111 = vmatprep.subr.mxu0 0.0
      %1112 = vmatpush1.xpose.msra.mxu0 0.0
      %1113 = vmatprep.subr.mxu0 0.0
      %1114 = vmatpush1.xpose.msra.mxu0 0.0
      %1115 = vmatprep.subr.mxu0 0.0
      %1116 = vmatpush1.xpose.msra.mxu0 0.0
      %1117 = vmatprep.subr.mxu0 0.0
      %1118 = vmatpush1.xpose.msra.mxu0 0.0
      %1119 = vmatprep.subr.mxu0 0.0
      %1120 = vmatpush1.xpose.msra.mxu0 0.0
      %1121 = vmatprep.subr.mxu0 0.0
      %1122 = vmatpush1.xpose.msra.mxu0 0.0
      %1123 = vmatprep.subr.mxu0 0.0
      %1124 = vmatpush1.xpose.msra.mxu0 0.0
      %1125 = vmatprep.subr.mxu0 0.0
      %1126 = vmatpush1.xpose.msra.mxu0 0.0
      %1127 = vmatprep.subr.mxu0 0.0
      %1128 = vmatpush1.xpose.msra.mxu0 0.0
      %1129 = vmatprep.subr.mxu0 0.0
      %1130 = vmatpush1.xpose.msra.mxu0 0.0
      %1131 = vmatprep.subr.mxu0 0.0
      %1132 = vmatpush1.xpose.msra.mxu0 0.0
      %1133 = vmatprep.mubr.f32.mxu0 0.0
      %1134 = vmatmul.mubr.f32.gmra.mrb[0].mxu0 %v1061
      %v1135 = vpop.f32.mrb[0].mxu0
      %v1136 = vadd.f32 0.0, %v1135
      %v1137 = vpop.f32.mrb[0].mxu0
      %1138 = vmatprep.mubr.f32.mxu0 0.0
      %1139 = vmatmul.mubr.f32.gmra.mrb[0].mxu0 %v1063
      %v1140 = vpop.f32.mrb[0].mxu0
      %v1141 = vadd.f32 0.0, %v1140
      %v1142 = vpop.f32.mrb[0].mxu0
      %1143 = vdwg.mxu0
      %v1144 = vsel %vm535, %v1136, -inf
      %1145 = vmax.xlane.f32.xlu0 %v1144
      %v1146 = vpop.xlane.xlu0 %1145
      %v1147 = vsel %vm539, %v1141, -inf
      %1148 = vmax.xlane.f32.xlu0 %v1147
      %v1149 = vpop.xlane.xlu0 %1148
      %v1150 = vsub.f32 %v1136, %v1146
      %v1151 = vsub.f32 %v1141, %v1149
      %v1152 = vmul.f32 %v1150, 1.442695
      %v1153 = vpow.pop %v1152
      %v1154 = vmul.f32 %v1151, 1.442695
      %v1155 = vpow.pop %v1154
      %v1156 = vsel %vm535, %v1153, 0.0
      %1157 = vadd.xlane.f32.xlu0 %v1156
      %v1158 = vpop.xlane.xlu0 %1157
      %v1159 = vsel %vm539, %v1155, 0.0
      %1160 = vadd.xlane.f32.xlu0 %v1159
      %v1161 = vpop.xlane.xlu0 %1160
      %1162 = vrot.lane.b32.xlu0 %v439, 104
      %v1163 = vpop.permute.xlu0 %1162
      %1164 = vrot.lane.b32.xlu0 %v443, 104
      %v1165 = vpop.permute.xlu0 %1164
      %v1168 = vsel %vm535, %v1153, 0
      %v1171 = vsel %vm535, %v1155, 0
      %v1173 = vsel %vm561, %v1165, 0
      %1175 = vmatprep.subr.mxu0 0.0
      %1176 = vmatpush1.msra.mxu0 %v1163
      %1177 = vmatprep.subr.mxu0 0.0
      %1178 = vmatpush1.msra.mxu0 %v1173
      %1179 = vmatprep.subr.mxu0 0.0
      %1180 = vmatpush1.msra.mxu0 0.0
      %1181 = vmatprep.subr.mxu0 0.0
      %1182 = vmatpush1.msra.mxu0 0.0
      %1183 = vmatprep.subr.mxu0 0.0
      %1184 = vmatpush1.msra.mxu0 0.0
      %1185 = vmatprep.subr.mxu0 0.0
      %1186 = vmatpush1.msra.mxu0 0.0
      %1187 = vmatprep.subr.mxu0 0.0
      %1188 = vmatpush1.msra.mxu0 0.0
      %1189 = vmatprep.subr.mxu0 0.0
      %1190 = vmatpush1.msra.mxu0 0.0
      %1191 = vmatprep.subr.mxu0 0.0
      %1192 = vmatpush1.msra.mxu0 0.0
      %1193 = vmatprep.subr.mxu0 0.0
      %1194 = vmatpush1.msra.mxu0 0.0
      %1195 = vmatprep.subr.mxu0 0.0
      %1196 = vmatpush1.msra.mxu0 0.0
      %1197 = vmatprep.subr.mxu0 0.0
      %1198 = vmatpush1.msra.mxu0 0.0
      %1199 = vmatprep.subr.mxu0 0.0
      %1200 = vmatpush1.msra.mxu0 0.0
      %1201 = vmatprep.subr.mxu0 0.0
      %1202 = vmatpush1.msra.mxu0 0.0
      %1203 = vmatprep.subr.mxu0 0.0
      %1204 = vmatpush1.msra.mxu0 0.0
      %1205 = vmatprep.subr.mxu0 0.0
      %1206 = vmatpush1.msra.mxu0 0.0
      %1207 = vmatprep.subr.mxu0 0.0
      %1208 = vmatpush1.msra.mxu0 0.0
      %1209 = vmatprep.subr.mxu0 0.0
      %1210 = vmatpush1.msra.mxu0 0.0
      %1211 = vmatprep.subr.mxu0 0.0
      %1212 = vmatpush1.msra.mxu0 0.0
      %1213 = vmatprep.subr.mxu0 0.0
      %1214 = vmatpush1.msra.mxu0 0.0
      %1215 = vmatprep.subr.mxu0 0.0
      %1216 = vmatpush1.msra.mxu0 0.0
      %1217 = vmatprep.subr.mxu0 0.0
      %1218 = vmatpush1.msra.mxu0 0.0
      %1219 = vmatprep.subr.mxu0 0.0
      %1220 = vmatpush1.msra.mxu0 0.0
      %1221 = vmatprep.subr.mxu0 0.0
      %1222 = vmatpush1.msra.mxu0 0.0
      %1223 = vmatprep.subr.mxu0 0.0
      %1224 = vmatpush1.msra.mxu0 0.0
      %1225 = vmatprep.subr.mxu0 0.0
      %1226 = vmatpush1.msra.mxu0 0.0
      %1227 = vmatprep.subr.mxu0 0.0
      %1228 = vmatpush1.msra.mxu0 0.0
      %1229 = vmatprep.subr.mxu0 0.0
      %1230 = vmatpush1.msra.mxu0 0.0
      %1231 = vmatprep.subr.mxu0 0.0
      %1232 = vmatpush1.msra.mxu0 0.0
      %1233 = vmatprep.subr.mxu0 0.0
      %1234 = vmatpush1.msra.mxu0 0.0
      %1235 = vmatprep.subr.mxu0 0.0
      %1236 = vmatpush1.msra.mxu0 0.0
      %1237 = vmatprep.subr.mxu0 0.0
      %1238 = vmatpush1.msra.mxu0 0.0
      %1239 = vmatprep.mubr.f32.mxu0 0.0
      %1240 = vmatmul.mubr.f32.gmra.mrb[0].mxu0 %v1168
      %v1241 = vpop.f32.mrb[0].mxu0
      %v1242 = vadd.f32 0.0, %v1241
      %v1243 = vpop.f32.mrb[0].mxu0
      %1244 = vmatprep.mubr.f32.mxu0 0.0
      %1245 = vmatmul.mubr.f32.gmra.mrb[0].mxu0 %v1171
      %v1246 = vpop.f32.mrb[0].mxu0
      %v1247 = vadd.f32 0.0, %v1246
      %v1248 = vpop.f32.mrb[0].mxu0
      %1249 = vdwg.mxu0
      %v1250 = vrcp.pop %v1158
      %v1251 = vrcp.pop %v1161
      %v1252 = vmul.f32 %v1250, 0.125
      %v1253 = vmul.f32 %v1251, 0.125
      %v1254 = vmul.f32 %v1242, %v1252
      %v1255 = vmul.f32 %v1247, %v1253
      %1256 = vrot.lane.b32.xlu0 %v437, 96
      %v1257 = vpop.permute.xlu0 %1256
      %1258 = vrot.lane.b32.xlu0 %v441, 96
      %v1259 = vpop.permute.xlu0 %1258
      %1260 = vrot.lane.b32.xlu0 %v437, 32
      %v1261 = vpop.permute.xlu0 %1260
      %1262 = vrot.lane.b32.xlu0 %v441, 32
      %v1263 = vpop.permute.xlu0 %1262
      %v1264 = vsel %vm451, %v1257, 0
      %v1266 = vsel %vm451, %v1259, 0
      %v1268 = vsel %vm451, %v1261, 0
      %v1270 = vsel %vm451, %v1263, 0
      %1272 = vmatprep.subr.mxu0 0.0
      %1273 = vmatpush1.xpose.msra.mxu0 %v1268
      %1274 = vmatprep.subr.mxu0 0.0
      %1275 = vmatpush1.xpose.msra.mxu0 %v1270
      %1276 = vmatprep.subr.mxu0 0.0
      %1277 = vmatpush1.xpose.msra.mxu0 0.0
      %1278 = vmatprep.subr.mxu0 0.0
      %1279 = vmatpush1.xpose.msra.mxu0 0.0
      %1280 = vmatprep.subr.mxu0 0.0
      %1281 = vmatpush1.xpose.msra.mxu0 0.0
      %1282 = vmatprep.subr.mxu0 0.0
      %1283 = vmatpush1.xpose.msra.mxu0 0.0
      %1284 = vmatprep.subr.mxu0 0.0
      %1285 = vmatpush1.xpose.msra.mxu0 0.0
      %1286 = vmatprep.subr.mxu0 0.0
      %1287 = vmatpush1.xpose.msra.mxu0 0.0
      %1288 = vmatprep.subr.mxu0 0.0
      %1289 = vmatpush1.xpose.msra.mxu0 0.0
      %1290 = vmatprep.subr.mxu0 0.0
      %1291 = vmatpush1.xpose.msra.mxu0 0.0
      %1292 = vmatprep.subr.mxu0 0.0
      %1293 = vmatpush1.xpose.msra.mxu0 0.0
      %1294 = vmatprep.subr.mxu0 0.0
      %1295 = vmatpush1.xpose.msra.mxu0 0.0
      %1296 = vmatprep.subr.mxu0 0.0
      %1297 = vmatpush1.xpose.msra.mxu0 0.0
      %1298 = vmatprep.subr.mxu0 0.0
      %1299 = vmatpush1.xpose.msra.mxu0 0.0
      %1300 = vmatprep.subr.mxu0 0.0
      %1301 = vmatpush1.xpose.msra.mxu0 0.0
      %1302 = vmatprep.subr.mxu0 0.0
      %1303 = vmatpush1.xpose.msra.mxu0 0.0
      %1304 = vmatprep.subr.mxu0 0.0
      %1305 = vmatpush1.xpose.msra.mxu0 0.0
      %1306 = vmatprep.subr.mxu0 0.0
      %1307 = vmatpush1.xpose.msra.mxu0 0.0
      %1308 = vmatprep.subr.mxu0 0.0
      %1309 = vmatpush1.xpose.msra.mxu0 0.0
      %1310 = vmatprep.subr.mxu0 0.0
      %1311 = vmatpush1.xpose.msra.mxu0 0.0
      %1312 = vmatprep.subr.mxu0 0.0
      %1313 = vmatpush1.xpose.msra.mxu0 0.0
      %1314 = vmatprep.subr.mxu0 0.0
      %1315 = vmatpush1.xpose.msra.mxu0 0.0
      %1316 = vmatprep.subr.mxu0 0.0
      %1317 = vmatpush1.xpose.msra.mxu0 0.0
      %1318 = vmatprep.subr.mxu0 0.0
      %1319 = vmatpush1.xpose.msra.mxu0 0.0
      %1320 = vmatprep.subr.mxu0 0.0
      %1321 = vmatpush1.xpose.msra.mxu0 0.0
      %1322 = vmatprep.subr.mxu0 0.0
      %1323 = vmatpush1.xpose.msra.mxu0 0.0
      %1324 = vmatprep.subr.mxu0 0.0
      %1325 = vmatpush1.xpose.msra.mxu0 0.0
      %1326 = vmatprep.subr.mxu0 0.0
      %1327 = vmatpush1.xpose.msra.mxu0 0.0
      %1328 = vmatprep.subr.mxu0 0.0
      %1329 = vmatpush1.xpose.msra.mxu0 0.0
      %1330 = vmatprep.subr.mxu0 0.0
      %1331 = vmatpush1.xpose.msra.mxu0 0.0
      %1332 = vmatprep.subr.mxu0 0.0
      %1333 = vmatpush1.xpose.msra.mxu0 0.0
      %1334 = vmatprep.subr.mxu0 0.0
      %1335 = vmatpush1.xpose.msra.mxu0 0.0
      %1336 = vmatprep.mubr.f32.mxu0 0.0
      %1337 = vmatmul.mubr.f32.gmra.mrb[0].mxu0 %v1264
      %v1338 = vpop.f32.mrb[0].mxu0
      %v1339 = vadd.f32 0.0, %v1338
      %v1340 = vpop.f32.mrb[0].mxu0
      %1341 = vmatprep.mubr.f32.mxu0 0.0
      %1342 = vmatmul.mubr.f32.gmra.mrb[0].mxu0 %v1266
      %v1343 = vpop.f32.mrb[0].mxu0
      %v1344 = vadd.f32 0.0, %v1343
      %v1345 = vpop.f32.mrb[0].mxu0
      %1346 = vdwg.mxu0
      %v1347 = vsel %vm535, %v1339, -inf
      %1348 = vmax.xlane.f32.xlu0 %v1347
      %v1349 = vpop.xlane.xlu0 %1348
      %v1350 = vsel %vm539, %v1344, -inf
      %1351 = vmax.xlane.f32.xlu0 %v1350
      %v1352 = vpop.xlane.xlu0 %1351
      %v1353 = vsub.f32 %v1339, %v1349
      %v1354 = vsub.f32 %v1344, %v1352
      %v1355 = vmul.f32 %v1353, 1.442695
      %v1356 = vpow.pop %v1355
      %v1357 = vmul.f32 %v1354, 1.442695
      %v1358 = vpow.pop %v1357
      %v1359 = vsel %vm535, %v1356, 0.0
      %1360 = vadd.xlane.f32.xlu0 %v1359
      %v1361 = vpop.xlane.xlu0 %1360
      %v1362 = vsel %vm539, %v1358, 0.0
      %1363 = vadd.xlane.f32.xlu0 %v1362
      %v1364 = vpop.xlane.xlu0 %1363
      %1365 = vrot.lane.b32.xlu0 %v439, 96
      %v1366 = vpop.permute.xlu0 %1365
      %1367 = vrot.lane.b32.xlu0 %v443, 96
      %v1368 = vpop.permute.xlu0 %1367
      %v1371 = vsel %vm535, %v1356, 0
      %v1374 = vsel %vm535, %v1358, 0
      %v1376 = vsel %vm561, %v1368, 0
      %1378 = vmatprep.subr.mxu0 0.0
      %1379 = vmatpush1.msra.mxu0 %v1366
      %1380 = vmatprep.subr.mxu0 0.0
      %1381 = vmatpush1.msra.mxu0 %v1376
      %1382 = vmatprep.subr.mxu0 0.0
      %1383 = vmatpush1.msra.mxu0 0.0
      %1384 = vmatprep.subr.mxu0 0.0
      %1385 = vmatpush1.msra.mxu0 0.0
      %1386 = vmatprep.subr.mxu0 0.0
      %1387 = vmatpush1.msra.mxu0 0.0
      %1388 = vmatprep.subr.mxu0 0.0
      %1389 = vmatpush1.msra.mxu0 0.0
      %1390 = vmatprep.subr.mxu0 0.0
      %1391 = vmatpush1.msra.mxu0 0.0
      %1392 = vmatprep.subr.mxu0 0.0
      %1393 = vmatpush1.msra.mxu0 0.0
      %1394 = vmatprep.subr.mxu0 0.0
      %1395 = vmatpush1.msra.mxu0 0.0
      %1396 = vmatprep.subr.mxu0 0.0
      %1397 = vmatpush1.msra.mxu0 0.0
      %1398 = vmatprep.subr.mxu0 0.0
      %1399 = vmatpush1.msra.mxu0 0.0
      %1400 = vmatprep.subr.mxu0 0.0
      %1401 = vmatpush1.msra.mxu0 0.0
      %1402 = vmatprep.subr.mxu0 0.0
      %1403 = vmatpush1.msra.mxu0 0.0
      %1404 = vmatprep.subr.mxu0 0.0
      %1405 = vmatpush1.msra.mxu0 0.0
      %1406 = vmatprep.subr.mxu0 0.0
      %1407 = vmatpush1.msra.mxu0 0.0
      %1408 = vmatprep.subr.mxu0 0.0
      %1409 = vmatpush1.msra.mxu0 0.0
      %1410 = vmatprep.subr.mxu0 0.0
      %1411 = vmatpush1.msra.mxu0 0.0
      %1412 = vmatprep.subr.mxu0 0.0
      %1413 = vmatpush1.msra.mxu0 0.0
      %1414 = vmatprep.subr.mxu0 0.0
      %1415 = vmatpush1.msra.mxu0 0.0
      %1416 = vmatprep.subr.mxu0 0.0
      %1417 = vmatpush1.msra.mxu0 0.0
      %1418 = vmatprep.subr.mxu0 0.0
      %1419 = vmatpush1.msra.mxu0 0.0
      %1420 = vmatprep.subr.mxu0 0.0
      %1421 = vmatpush1.msra.mxu0 0.0
      %1422 = vmatprep.subr.mxu0 0.0
      %1423 = vmatpush1.msra.mxu0 0.0
      %1424 = vmatprep.subr.mxu0 0.0
      %1425 = vmatpush1.msra.mxu0 0.0
      %1426 = vmatprep.subr.mxu0 0.0
      %1427 = vmatpush1.msra.mxu0 0.0
      %1428 = vmatprep.subr.mxu0 0.0
      %1429 = vmatpush1.msra.mxu0 0.0
      %1430 = vmatprep.subr.mxu0 0.0
      %1431 = vmatpush1.msra.mxu0 0.0
      %1432 = vmatprep.subr.mxu0 0.0
      %1433 = vmatpush1.msra.mxu0 0.0
      %1434 = vmatprep.subr.mxu0 0.0
      %1435 = vmatpush1.msra.mxu0 0.0
      %1436 = vmatprep.subr.mxu0 0.0
      %1437 = vmatpush1.msra.mxu0 0.0
      %1438 = vmatprep.subr.mxu0 0.0
      %1439 = vmatpush1.msra.mxu0 0.0
      %1440 = vmatprep.subr.mxu0 0.0
      %1441 = vmatpush1.msra.mxu0 0.0
      %1442 = vmatprep.mubr.f32.mxu0 0.0
      %1443 = vmatmul.mubr.f32.gmra.mrb[0].mxu0 %v1371
      %v1444 = vpop.f32.mrb[0].mxu0
      %v1445 = vadd.f32 0.0, %v1444
      %v1446 = vpop.f32.mrb[0].mxu0
      %1447 = vmatprep.mubr.f32.mxu0 0.0
      %1448 = vmatmul.mubr.f32.gmra.mrb[0].mxu0 %v1374
      %v1449 = vpop.f32.mrb[0].mxu0
      %v1450 = vadd.f32 0.0, %v1449
      %v1451 = vpop.f32.mrb[0].mxu0
      %1452 = vdwg.mxu0
      %v1453 = vrcp.pop %v1361
      %v1454 = vrcp.pop %v1364
      %v1455 = vmul.f32 %v1453, 0.125
      %v1456 = vmul.f32 %v1454, 0.125
      %v1457 = vmul.f32 %v1445, %v1455
      %v1458 = vmul.f32 %v1450, %v1456
      %1459 = vrot.lane.b32.xlu0 %v437, 88
      %v1460 = vpop.permute.xlu0 %1459
      %1461 = vrot.lane.b32.xlu0 %v441, 88
      %v1462 = vpop.permute.xlu0 %1461
      %1463 = vrot.lane.b32.xlu0 %v437, 24
      %v1464 = vpop.permute.xlu0 %1463
      %1465 = vrot.lane.b32.xlu0 %v441, 24
      %v1466 = vpop.permute.xlu0 %1465
      %v1467 = vsel %vm451, %v1460, 0
      %v1469 = vsel %vm451, %v1462, 0
      %v1471 = vsel %vm451, %v1464, 0
      %v1473 = vsel %vm451, %v1466, 0
      %1475 = vmatprep.subr.mxu0 0.0
      %1476 = vmatpush1.xpose.msra.mxu0 %v1471
      %1477 = vmatprep.subr.mxu0 0.0
      %1478 = vmatpush1.xpose.msra.mxu0 %v1473
      %1479 = vmatprep.subr.mxu0 0.0
      %1480 = vmatpush1.xpose.msra.mxu0 0.0
      %1481 = vmatprep.subr.mxu0 0.0
      %1482 = vmatpush1.xpose.msra.mxu0 0.0
      %1483 = vmatprep.subr.mxu0 0.0
      %1484 = vmatpush1.xpose.msra.mxu0 0.0
      %1485 = vmatprep.subr.mxu0 0.0
      %1486 = vmatpush1.xpose.msra.mxu0 0.0
      %1487 = vmatprep.subr.mxu0 0.0
      %1488 = vmatpush1.xpose.msra.mxu0 0.0
      %1489 = vmatprep.subr.mxu0 0.0
      %1490 = vmatpush1.xpose.msra.mxu0 0.0
      %1491 = vmatprep.subr.mxu0 0.0
      %1492 = vmatpush1.xpose.msra.mxu0 0.0
      %1493 = vmatprep.subr.mxu0 0.0
      %1494 = vmatpush1.xpose.msra.mxu0 0.0
      %1495 = vmatprep.subr.mxu0 0.0
      %1496 = vmatpush1.xpose.msra.mxu0 0.0
      %1497 = vmatprep.subr.mxu0 0.0
      %1498 = vmatpush1.xpose.msra.mxu0 0.0
      %1499 = vmatprep.subr.mxu0 0.0
      %1500 = vmatpush1.xpose.msra.mxu0 0.0
      %1501 = vmatprep.subr.mxu0 0.0
      %1502 = vmatpush1.xpose.msra.mxu0 0.0
      %1503 = vmatprep.subr.mxu0 0.0
      %1504 = vmatpush1.xpose.msra.mxu0 0.0
      %1505 = vmatprep.subr.mxu0 0.0
      %1506 = vmatpush1.xpose.msra.mxu0 0.0
      %1507 = vmatprep.subr.mxu0 0.0
      %1508 = vmatpush1.xpose.msra.mxu0 0.0
      %1509 = vmatprep.subr.mxu0 0.0
      %1510 = vmatpush1.xpose.msra.mxu0 0.0
      %1511 = vmatprep.subr.mxu0 0.0
      %1512 = vmatpush1.xpose.msra.mxu0 0.0
      %1513 = vmatprep.subr.mxu0 0.0
      %1514 = vmatpush1.xpose.msra.mxu0 0.0
      %1515 = vmatprep.subr.mxu0 0.0
      %1516 = vmatpush1.xpose.msra.mxu0 0.0
      %1517 = vmatprep.subr.mxu0 0.0
      %1518 = vmatpush1.xpose.msra.mxu0 0.0
      %1519 = vmatprep.subr.mxu0 0.0
      %1520 = vmatpush1.xpose.msra.mxu0 0.0
      %1521 = vmatprep.subr.mxu0 0.0
      %1522 = vmatpush1.xpose.msra.mxu0 0.0
      %1523 = vmatprep.subr.mxu0 0.0
      %1524 = vmatpush1.xpose.msra.mxu0 0.0
      %1525 = vmatprep.subr.mxu0 0.0
      %1526 = vmatpush1.xpose.msra.mxu0 0.0
      %1527 = vmatprep.subr.mxu0 0.0
      %1528 = vmatpush1.xpose.msra.mxu0 0.0
      %1529 = vmatprep.subr.mxu0 0.0
      %1530 = vmatpush1.xpose.msra.mxu0 0.0
      %1531 = vmatprep.subr.mxu0 0.0
      %1532 = vmatpush1.xpose.msra.mxu0 0.0
      %1533 = vmatprep.subr.mxu0 0.0
      %1534 = vmatpush1.xpose.msra.mxu0 0.0
      %1535 = vmatprep.subr.mxu0 0.0
      %1536 = vmatpush1.xpose.msra.mxu0 0.0
      %1537 = vmatprep.subr.mxu0 0.0
      %1538 = vmatpush1.xpose.msra.mxu0 0.0
      %1539 = vmatprep.mubr.f32.mxu0 0.0
      %1540 = vmatmul.mubr.f32.gmra.mrb[0].mxu0 %v1467
      %v1541 = vpop.f32.mrb[0].mxu0
      %v1542 = vadd.f32 0.0, %v1541
      %v1543 = vpop.f32.mrb[0].mxu0
      %1544 = vmatprep.mubr.f32.mxu0 0.0
      %1545 = vmatmul.mubr.f32.gmra.mrb[0].mxu0 %v1469
      %v1546 = vpop.f32.mrb[0].mxu0
      %v1547 = vadd.f32 0.0, %v1546
      %v1548 = vpop.f32.mrb[0].mxu0
      %1549 = vdwg.mxu0
      %v1550 = vsel %vm535, %v1542, -inf
      %1551 = vmax.xlane.f32.xlu0 %v1550
      %v1552 = vpop.xlane.xlu0 %1551
      %v1553 = vsel %vm539, %v1547, -inf
      %1554 = vmax.xlane.f32.xlu0 %v1553
      %v1555 = vpop.xlane.xlu0 %1554
      %v1556 = vsub.f32 %v1542, %v1552
      %v1557 = vsub.f32 %v1547, %v1555
      %v1558 = vmul.f32 %v1556, 1.442695
      %v1559 = vpow.pop %v1558
      %v1560 = vmul.f32 %v1557, 1.442695
      %v1561 = vpow.pop %v1560
      %v1562 = vsel %vm535, %v1559, 0.0
      %1563 = vadd.xlane.f32.xlu0 %v1562
      %v1564 = vpop.xlane.xlu0 %1563
      %v1565 = vsel %vm539, %v1561, 0.0
      %1566 = vadd.xlane.f32.xlu0 %v1565
      %v1567 = vpop.xlane.xlu0 %1566
      %1568 = vrot.lane.b32.xlu0 %v439, 88
      %v1569 = vpop.permute.xlu0 %1568
      %1570 = vrot.lane.b32.xlu0 %v443, 88
      %v1571 = vpop.permute.xlu0 %1570
      %v1574 = vsel %vm535, %v1559, 0
      %v1577 = vsel %vm535, %v1561, 0
      %v1579 = vsel %vm561, %v1571, 0
      %1581 = vmatprep.subr.mxu0 0.0
      %1582 = vmatpush1.msra.mxu0 %v1569
      %1583 = vmatprep.subr.mxu0 0.0
      %1584 = vmatpush1.msra.mxu0 %v1579
      %1585 = vmatprep.subr.mxu0 0.0
      %1586 = vmatpush1.msra.mxu0 0.0
      %1587 = vmatprep.subr.mxu0 0.0
      %1588 = vmatpush1.msra.mxu0 0.0
      %1589 = vmatprep.subr.mxu0 0.0
      %1590 = vmatpush1.msra.mxu0 0.0
      %1591 = vmatprep.subr.mxu0 0.0
      %1592 = vmatpush1.msra.mxu0 0.0
      %1593 = vmatprep.subr.mxu0 0.0
      %1594 = vmatpush1.msra.mxu0 0.0
      %1595 = vmatprep.subr.mxu0 0.0
      %1596 = vmatpush1.msra.mxu0 0.0
      %1597 = vmatprep.subr.mxu0 0.0
      %1598 = vmatpush1.msra.mxu0 0.0
      %1599 = vmatprep.subr.mxu0 0.0
      %1600 = vmatpush1.msra.mxu0 0.0
      %1601 = vmatprep.subr.mxu0 0.0
      %1602 = vmatpush1.msra.mxu0 0.0
      %1603 = vmatprep.subr.mxu0 0.0
      %1604 = vmatpush1.msra.mxu0 0.0
      %1605 = vmatprep.subr.mxu0 0.0
      %1606 = vmatpush1.msra.mxu0 0.0
      %1607 = vmatprep.subr.mxu0 0.0
      %1608 = vmatpush1.msra.mxu0 0.0
      %1609 = vmatprep.subr.mxu0 0.0
      %1610 = vmatpush1.msra.mxu0 0.0
      %1611 = vmatprep.subr.mxu0 0.0
      %1612 = vmatpush1.msra.mxu0 0.0
      %1613 = vmatprep.subr.mxu0 0.0
      %1614 = vmatpush1.msra.mxu0 0.0
      %1615 = vmatprep.subr.mxu0 0.0
      %1616 = vmatpush1.msra.mxu0 0.0
      %1617 = vmatprep.subr.mxu0 0.0
      %1618 = vmatpush1.msra.mxu0 0.0
      %1619 = vmatprep.subr.mxu0 0.0
      %1620 = vmatpush1.msra.mxu0 0.0
      %1621 = vmatprep.subr.mxu0 0.0
      %1622 = vmatpush1.msra.mxu0 0.0
      %1623 = vmatprep.subr.mxu0 0.0
      %1624 = vmatpush1.msra.mxu0 0.0
      %1625 = vmatprep.subr.mxu0 0.0
      %1626 = vmatpush1.msra.mxu0 0.0
      %1627 = vmatprep.subr.mxu0 0.0
      %1628 = vmatpush1.msra.mxu0 0.0
      %1629 = vmatprep.subr.mxu0 0.0
      %1630 = vmatpush1.msra.mxu0 0.0
      %1631 = vmatprep.subr.mxu0 0.0
      %1632 = vmatpush1.msra.mxu0 0.0
      %1633 = vmatprep.subr.mxu0 0.0
      %1634 = vmatpush1.msra.mxu0 0.0
      %1635 = vmatprep.subr.mxu0 0.0
      %1636 = vmatpush1.msra.mxu0 0.0
      %1637 = vmatprep.subr.mxu0 0.0
      %1638 = vmatpush1.msra.mxu0 0.0
      %1639 = vmatprep.subr.mxu0 0.0
      %1640 = vmatpush1.msra.mxu0 0.0
      %1641 = vmatprep.subr.mxu0 0.0
      %1642 = vmatpush1.msra.mxu0 0.0
      %1643 = vmatprep.subr.mxu0 0.0
      %1644 = vmatpush1.msra.mxu0 0.0
      %1645 = vmatprep.mubr.f32.mxu0 0.0
      %1646 = vmatmul.mubr.f32.gmra.mrb[0].mxu0 %v1574
      %v1647 = vpop.f32.mrb[0].mxu0
      %v1648 = vadd.f32 0.0, %v1647
      %v1649 = vpop.f32.mrb[0].mxu0
      %1650 = vmatprep.mubr.f32.mxu0 0.0
      %1651 = vmatmul.mubr.f32.gmra.mrb[0].mxu0 %v1577
      %v1652 = vpop.f32.mrb[0].mxu0
      %v1653 = vadd.f32 0.0, %v1652
      %v1654 = vpop.f32.mrb[0].mxu0
      %1655 = vdwg.mxu0
      %v1656 = vrcp.pop %v1564
      %v1657 = vrcp.pop %v1567
      %v1658 = vmul.f32 %v1656, 0.125
      %v1659 = vmul.f32 %v1657, 0.125
      %v1660 = vmul.f32 %v1648, %v1658
      %v1661 = vmul.f32 %v1653, %v1659
      %1662 = vrot.lane.b32.xlu0 %v437, 80
      %v1663 = vpop.permute.xlu0 %1662
      %1664 = vrot.lane.b32.xlu0 %v441, 80
      %v1665 = vpop.permute.xlu0 %1664
      %1666 = vrot.lane.b32.xlu0 %v437, 16
      %v1667 = vpop.permute.xlu0 %1666
      %1668 = vrot.lane.b32.xlu0 %v441, 16
      %v1669 = vpop.permute.xlu0 %1668
      %v1670 = vsel %vm451, %v1663, 0
      %v1672 = vsel %vm451, %v1665, 0
      %v1674 = vsel %vm451, %v1667, 0
      %v1676 = vsel %vm451, %v1669, 0
      %1678 = vmatprep.subr.mxu0 0.0
      %1679 = vmatpush1.xpose.msra.mxu0 %v1674
      %1680 = vmatprep.subr.mxu0 0.0
      %1681 = vmatpush1.xpose.msra.mxu0 %v1676
      %1682 = vmatprep.subr.mxu0 0.0
      %1683 = vmatpush1.xpose.msra.mxu0 0.0
      %1684 = vmatprep.subr.mxu0 0.0
      %1685 = vmatpush1.xpose.msra.mxu0 0.0
      %1686 = vmatprep.subr.mxu0 0.0
      %1687 = vmatpush1.xpose.msra.mxu0 0.0
      %1688 = vmatprep.subr.mxu0 0.0
      %1689 = vmatpush1.xpose.msra.mxu0 0.0
      %1690 = vmatprep.subr.mxu0 0.0
      %1691 = vmatpush1.xpose.msra.mxu0 0.0
      %1692 = vmatprep.subr.mxu0 0.0
      %1693 = vmatpush1.xpose.msra.mxu0 0.0
      %1694 = vmatprep.subr.mxu0 0.0
      %1695 = vmatpush1.xpose.msra.mxu0 0.0
      %1696 = vmatprep.subr.mxu0 0.0
      %1697 = vmatpush1.xpose.msra.mxu0 0.0
      %1698 = vmatprep.subr.mxu0 0.0
      %1699 = vmatpush1.xpose.msra.mxu0 0.0
      %1700 = vmatprep.subr.mxu0 0.0
      %1701 = vmatpush1.xpose.msra.mxu0 0.0
      %1702 = vmatprep.subr.mxu0 0.0
      %1703 = vmatpush1.xpose.msra.mxu0 0.0
      %1704 = vmatprep.subr.mxu0 0.0
      %1705 = vmatpush1.xpose.msra.mxu0 0.0
      %1706 = vmatprep.subr.mxu0 0.0
      %1707 = vmatpush1.xpose.msra.mxu0 0.0
      %1708 = vmatprep.subr.mxu0 0.0
      %1709 = vmatpush1.xpose.msra.mxu0 0.0
      %1710 = vmatprep.subr.mxu0 0.0
      %1711 = vmatpush1.xpose.msra.mxu0 0.0
      %1712 = vmatprep.subr.mxu0 0.0
      %1713 = vmatpush1.xpose.msra.mxu0 0.0
      %1714 = vmatprep.subr.mxu0 0.0
      %1715 = vmatpush1.xpose.msra.mxu0 0.0
      %1716 = vmatprep.subr.mxu0 0.0
      %1717 = vmatpush1.xpose.msra.mxu0 0.0
      %1718 = vmatprep.subr.mxu0 0.0
      %1719 = vmatpush1.xpose.msra.mxu0 0.0
      %1720 = vmatprep.subr.mxu0 0.0
      %1721 = vmatpush1.xpose.msra.mxu0 0.0
      %1722 = vmatprep.subr.mxu0 0.0
      %1723 = vmatpush1.xpose.msra.mxu0 0.0
      %1724 = vmatprep.subr.mxu0 0.0
      %1725 = vmatpush1.xpose.msra.mxu0 0.0
      %1726 = vmatprep.subr.mxu0 0.0
      %1727 = vmatpush1.xpose.msra.mxu0 0.0
      %1728 = vmatprep.subr.mxu0 0.0
      %1729 = vmatpush1.xpose.msra.mxu0 0.0
      %1730 = vmatprep.subr.mxu0 0.0
      %1731 = vmatpush1.xpose.msra.mxu0 0.0
      %1732 = vmatprep.subr.mxu0 0.0
      %1733 = vmatpush1.xpose.msra.mxu0 0.0
      %1734 = vmatprep.subr.mxu0 0.0
      %1735 = vmatpush1.xpose.msra.mxu0 0.0
      %1736 = vmatprep.subr.mxu0 0.0
      %1737 = vmatpush1.xpose.msra.mxu0 0.0
      %1738 = vmatprep.subr.mxu0 0.0
      %1739 = vmatpush1.xpose.msra.mxu0 0.0
      %1740 = vmatprep.subr.mxu0 0.0
      %1741 = vmatpush1.xpose.msra.mxu0 0.0
      %1742 = vmatprep.mubr.f32.mxu0 0.0
      %1743 = vmatmul.mubr.f32.gmra.mrb[0].mxu0 %v1670
      %v1744 = vpop.f32.mrb[0].mxu0
      %v1745 = vadd.f32 0.0, %v1744
      %v1746 = vpop.f32.mrb[0].mxu0
      %1747 = vmatprep.mubr.f32.mxu0 0.0
      %1748 = vmatmul.mubr.f32.gmra.mrb[0].mxu0 %v1672
      %v1749 = vpop.f32.mrb[0].mxu0
      %v1750 = vadd.f32 0.0, %v1749
      %v1751 = vpop.f32.mrb[0].mxu0
      %1752 = vdwg.mxu0
      %v1753 = vsel %vm535, %v1745, -inf
      %1754 = vmax.xlane.f32.xlu0 %v1753
      %v1755 = vpop.xlane.xlu0 %1754
      %v1756 = vsel %vm539, %v1750, -inf
      %1757 = vmax.xlane.f32.xlu0 %v1756
      %v1758 = vpop.xlane.xlu0 %1757
      %v1759 = vsub.f32 %v1745, %v1755
      %v1760 = vsub.f32 %v1750, %v1758
      %v1761 = vmul.f32 %v1759, 1.442695
      %v1762 = vpow.pop %v1761
      %v1763 = vmul.f32 %v1760, 1.442695
      %v1764 = vpow.pop %v1763
      %v1765 = vsel %vm535, %v1762, 0.0
      %1766 = vadd.xlane.f32.xlu0 %v1765
      %v1767 = vpop.xlane.xlu0 %1766
      %v1768 = vsel %vm539, %v1764, 0.0
      %1769 = vadd.xlane.f32.xlu0 %v1768
      %v1770 = vpop.xlane.xlu0 %1769
      %1771 = vrot.lane.b32.xlu0 %v439, 80
      %v1772 = vpop.permute.xlu0 %1771
      %1773 = vrot.lane.b32.xlu0 %v443, 80
      %v1774 = vpop.permute.xlu0 %1773
      %v1777 = vsel %vm535, %v1762, 0
      %v1780 = vsel %vm535, %v1764, 0
      %v1782 = vsel %vm561, %v1774, 0
      %1784 = vmatprep.subr.mxu0 0.0
      %1785 = vmatpush1.msra.mxu0 %v1772
      %1786 = vmatprep.subr.mxu0 0.0
      %1787 = vmatpush1.msra.mxu0 %v1782
      %1788 = vmatprep.subr.mxu0 0.0
      %1789 = vmatpush1.msra.mxu0 0.0
      %1790 = vmatprep.subr.mxu0 0.0
      %1791 = vmatpush1.msra.mxu0 0.0
      %1792 = vmatprep.subr.mxu0 0.0
      %1793 = vmatpush1.msra.mxu0 0.0
      %1794 = vmatprep.subr.mxu0 0.0
      %1795 = vmatpush1.msra.mxu0 0.0
      %1796 = vmatprep.subr.mxu0 0.0
      %1797 = vmatpush1.msra.mxu0 0.0
      %1798 = vmatprep.subr.mxu0 0.0
      %1799 = vmatpush1.msra.mxu0 0.0
      %1800 = vmatprep.subr.mxu0 0.0
      %1801 = vmatpush1.msra.mxu0 0.0
      %1802 = vmatprep.subr.mxu0 0.0
      %1803 = vmatpush1.msra.mxu0 0.0
      %1804 = vmatprep.subr.mxu0 0.0
      %1805 = vmatpush1.msra.mxu0 0.0
      %1806 = vmatprep.subr.mxu0 0.0
      %1807 = vmatpush1.msra.mxu0 0.0
      %1808 = vmatprep.subr.mxu0 0.0
      %1809 = vmatpush1.msra.mxu0 0.0
      %1810 = vmatprep.subr.mxu0 0.0
      %1811 = vmatpush1.msra.mxu0 0.0
      %1812 = vmatprep.subr.mxu0 0.0
      %1813 = vmatpush1.msra.mxu0 0.0
      %1814 = vmatprep.subr.mxu0 0.0
      %1815 = vmatpush1.msra.mxu0 0.0
      %1816 = vmatprep.subr.mxu0 0.0
      %1817 = vmatpush1.msra.mxu0 0.0
      %1818 = vmatprep.subr.mxu0 0.0
      %1819 = vmatpush1.msra.mxu0 0.0
      %1820 = vmatprep.subr.mxu0 0.0
      %1821 = vmatpush1.msra.mxu0 0.0
      %1822 = vmatprep.subr.mxu0 0.0
      %1823 = vmatpush1.msra.mxu0 0.0
      %1824 = vmatprep.subr.mxu0 0.0
      %1825 = vmatpush1.msra.mxu0 0.0
      %1826 = vmatprep.subr.mxu0 0.0
      %1827 = vmatpush1.msra.mxu0 0.0
      %1828 = vmatprep.subr.mxu0 0.0
      %1829 = vmatpush1.msra.mxu0 0.0
      %1830 = vmatprep.subr.mxu0 0.0
      %1831 = vmatpush1.msra.mxu0 0.0
      %1832 = vmatprep.subr.mxu0 0.0
      %1833 = vmatpush1.msra.mxu0 0.0
      %1834 = vmatprep.subr.mxu0 0.0
      %1835 = vmatpush1.msra.mxu0 0.0
      %1836 = vmatprep.subr.mxu0 0.0
      %1837 = vmatpush1.msra.mxu0 0.0
      %1838 = vmatprep.subr.mxu0 0.0
      %1839 = vmatpush1.msra.mxu0 0.0
      %1840 = vmatprep.subr.mxu0 0.0
      %1841 = vmatpush1.msra.mxu0 0.0
      %1842 = vmatprep.subr.mxu0 0.0
      %1843 = vmatpush1.msra.mxu0 0.0
      %1844 = vmatprep.subr.mxu0 0.0
      %1845 = vmatpush1.msra.mxu0 0.0
      %1846 = vmatprep.subr.mxu0 0.0
      %1847 = vmatpush1.msra.mxu0 0.0
      %1848 = vmatprep.mubr.f32.mxu0 0.0
      %1849 = vmatmul.mubr.f32.gmra.mrb[0].mxu0 %v1777
      %v1850 = vpop.f32.mrb[0].mxu0
      %v1851 = vadd.f32 0.0, %v1850
      %v1852 = vpop.f32.mrb[0].mxu0
      %1853 = vmatprep.mubr.f32.mxu0 0.0
      %1854 = vmatmul.mubr.f32.gmra.mrb[0].mxu0 %v1780
      %v1855 = vpop.f32.mrb[0].mxu0
      %v1856 = vadd.f32 0.0, %v1855
      %v1857 = vpop.f32.mrb[0].mxu0
      %1858 = vdwg.mxu0
      %v1859 = vrcp.pop %v1767
      %v1860 = vrcp.pop %v1770
      %v1861 = vmul.f32 %v1859, 0.125
      %v1862 = vmul.f32 %v1860, 0.125
      %v1863 = vmul.f32 %v1851, %v1861
      %v1864 = vmul.f32 %v1856, %v1862
      %1865 = vrot.lane.b32.xlu0 %v437, 72
      %v1866 = vpop.permute.xlu0 %1865
      %1867 = vrot.lane.b32.xlu0 %v441, 72
      %v1868 = vpop.permute.xlu0 %1867
      %1869 = vrot.lane.b32.xlu0 %v437, 8
      %v1870 = vpop.permute.xlu0 %1869
      %1871 = vrot.lane.b32.xlu0 %v441, 8
      %v1872 = vpop.permute.xlu0 %1871
      %v1873 = vsel %vm451, %v1866, 0
      %v1875 = vsel %vm451, %v1868, 0
      %v1877 = vsel %vm451, %v1870, 0
      %v1879 = vsel %vm451, %v1872, 0
      %1881 = vmatprep.subr.mxu0 0.0
      %1882 = vmatpush1.xpose.msra.mxu0 %v1877
      %1883 = vmatprep.subr.mxu0 0.0
      %1884 = vmatpush1.xpose.msra.mxu0 %v1879
      %1885 = vmatprep.subr.mxu0 0.0
      %1886 = vmatpush1.xpose.msra.mxu0 0.0
      %1887 = vmatprep.subr.mxu0 0.0
      %1888 = vmatpush1.xpose.msra.mxu0 0.0
      %1889 = vmatprep.subr.mxu0 0.0
      %1890 = vmatpush1.xpose.msra.mxu0 0.0
      %1891 = vmatprep.subr.mxu0 0.0
      %1892 = vmatpush1.xpose.msra.mxu0 0.0
      %1893 = vmatprep.subr.mxu0 0.0
      %1894 = vmatpush1.xpose.msra.mxu0 0.0
      %1895 = vmatprep.subr.mxu0 0.0
      %1896 = vmatpush1.xpose.msra.mxu0 0.0
      %1897 = vmatprep.subr.mxu0 0.0
      %1898 = vmatpush1.xpose.msra.mxu0 0.0
      %1899 = vmatprep.subr.mxu0 0.0
      %1900 = vmatpush1.xpose.msra.mxu0 0.0
      %1901 = vmatprep.subr.mxu0 0.0
      %1902 = vmatpush1.xpose.msra.mxu0 0.0
      %1903 = vmatprep.subr.mxu0 0.0
      %1904 = vmatpush1.xpose.msra.mxu0 0.0
      %1905 = vmatprep.subr.mxu0 0.0
      %1906 = vmatpush1.xpose.msra.mxu0 0.0
      %1907 = vmatprep.subr.mxu0 0.0
      %1908 = vmatpush1.xpose.msra.mxu0 0.0
      %1909 = vmatprep.subr.mxu0 0.0
      %1910 = vmatpush1.xpose.msra.mxu0 0.0
      %1911 = vmatprep.subr.mxu0 0.0
      %1912 = vmatpush1.xpose.msra.mxu0 0.0
      %1913 = vmatprep.subr.mxu0 0.0
      %1914 = vmatpush1.xpose.msra.mxu0 0.0
      %1915 = vmatprep.subr.mxu0 0.0
      %1916 = vmatpush1.xpose.msra.mxu0 0.0
      %1917 = vmatprep.subr.mxu0 0.0
      %1918 = vmatpush1.xpose.msra.mxu0 0.0
      %1919 = vmatprep.subr.mxu0 0.0
      %1920 = vmatpush1.xpose.msra.mxu0 0.0
      %1921 = vmatprep.subr.mxu0 0.0
      %1922 = vmatpush1.xpose.msra.mxu0 0.0
      %1923 = vmatprep.subr.mxu0 0.0
      %1924 = vmatpush1.xpose.msra.mxu0 0.0
      %1925 = vmatprep.subr.mxu0 0.0
      %1926 = vmatpush1.xpose.msra.mxu0 0.0
      %1927 = vmatprep.subr.mxu0 0.0
      %1928 = vmatpush1.xpose.msra.mxu0 0.0
      %1929 = vmatprep.subr.mxu0 0.0
      %1930 = vmatpush1.xpose.msra.mxu0 0.0
      %1931 = vmatprep.subr.mxu0 0.0
      %1932 = vmatpush1.xpose.msra.mxu0 0.0
      %1933 = vmatprep.subr.mxu0 0.0
      %1934 = vmatpush1.xpose.msra.mxu0 0.0
      %1935 = vmatprep.subr.mxu0 0.0
      %1936 = vmatpush1.xpose.msra.mxu0 0.0
      %1937 = vmatprep.subr.mxu0 0.0
      %1938 = vmatpush1.xpose.msra.mxu0 0.0
      %1939 = vmatprep.subr.mxu0 0.0
      %1940 = vmatpush1.xpose.msra.mxu0 0.0
      %1941 = vmatprep.subr.mxu0 0.0
      %1942 = vmatpush1.xpose.msra.mxu0 0.0
      %1943 = vmatprep.subr.mxu0 0.0
      %1944 = vmatpush1.xpose.msra.mxu0 0.0
      %1945 = vmatprep.mubr.f32.mxu0 0.0
      %1946 = vmatmul.mubr.f32.gmra.mrb[0].mxu0 %v1873
      %v1947 = vpop.f32.mrb[0].mxu0
      %v1948 = vadd.f32 0.0, %v1947
      %v1949 = vpop.f32.mrb[0].mxu0
      %1950 = vmatprep.mubr.f32.mxu0 0.0
      %1951 = vmatmul.mubr.f32.gmra.mrb[0].mxu0 %v1875
      %v1952 = vpop.f32.mrb[0].mxu0
      %v1953 = vadd.f32 0.0, %v1952
      %v1954 = vpop.f32.mrb[0].mxu0
      %1955 = vdwg.mxu0
      %v1956 = vsel %vm535, %v1948, -inf
      %1957 = vmax.xlane.f32.xlu0 %v1956
      %v1958 = vpop.xlane.xlu0 %1957
      %v1959 = vsel %vm539, %v1953, -inf
      %1960 = vmax.xlane.f32.xlu0 %v1959
      %v1961 = vpop.xlane.xlu0 %1960
      %v1962 = vsub.f32 %v1948, %v1958
      %v1963 = vsub.f32 %v1953, %v1961
      %v1964 = vmul.f32 %v1962, 1.442695
      %v1965 = vpow.pop %v1964
      %v1966 = vmul.f32 %v1963, 1.442695
      %v1967 = vpow.pop %v1966
      %v1968 = vsel %vm535, %v1965, 0.0
      %1969 = vadd.xlane.f32.xlu0 %v1968
      %v1970 = vpop.xlane.xlu0 %1969
      %v1971 = vsel %vm539, %v1967, 0.0
      %1972 = vadd.xlane.f32.xlu0 %v1971
      %v1973 = vpop.xlane.xlu0 %1972
      %1974 = vrot.lane.b32.xlu0 %v439, 72
      %v1975 = vpop.permute.xlu0 %1974
      %1976 = vrot.lane.b32.xlu0 %v443, 72
      %v1977 = vpop.permute.xlu0 %1976
      %v1980 = vsel %vm535, %v1965, 0
      %v1983 = vsel %vm535, %v1967, 0
      %v1985 = vsel %vm561, %v1977, 0
      %1987 = vmatprep.subr.mxu0 0.0
      %1988 = vmatpush1.msra.mxu0 %v1975
      %1989 = vmatprep.subr.mxu0 0.0
      %1990 = vmatpush1.msra.mxu0 %v1985
      %1991 = vmatprep.subr.mxu0 0.0
      %1992 = vmatpush1.msra.mxu0 0.0
      %1993 = vmatprep.subr.mxu0 0.0
      %1994 = vmatpush1.msra.mxu0 0.0
      %1995 = vmatprep.subr.mxu0 0.0
      %1996 = vmatpush1.msra.mxu0 0.0
      %1997 = vmatprep.subr.mxu0 0.0
      %1998 = vmatpush1.msra.mxu0 0.0
      %1999 = vmatprep.subr.mxu0 0.0
      %2000 = vmatpush1.msra.mxu0 0.0
      %2001 = vmatprep.subr.mxu0 0.0
      %2002 = vmatpush1.msra.mxu0 0.0
      %2003 = vmatprep.subr.mxu0 0.0
      %2004 = vmatpush1.msra.mxu0 0.0
      %2005 = vmatprep.subr.mxu0 0.0
      %2006 = vmatpush1.msra.mxu0 0.0
      %2007 = vmatprep.subr.mxu0 0.0
      %2008 = vmatpush1.msra.mxu0 0.0
      %2009 = vmatprep.subr.mxu0 0.0
      %2010 = vmatpush1.msra.mxu0 0.0
      %2011 = vmatprep.subr.mxu0 0.0
      %2012 = vmatpush1.msra.mxu0 0.0
      %2013 = vmatprep.subr.mxu0 0.0
      %2014 = vmatpush1.msra.mxu0 0.0
      %2015 = vmatprep.subr.mxu0 0.0
      %2016 = vmatpush1.msra.mxu0 0.0
      %2017 = vmatprep.subr.mxu0 0.0
      %2018 = vmatpush1.msra.mxu0 0.0
      %2019 = vmatprep.subr.mxu0 0.0
      %2020 = vmatpush1.msra.mxu0 0.0
      %2021 = vmatprep.subr.mxu0 0.0
      %2022 = vmatpush1.msra.mxu0 0.0
      %2023 = vmatprep.subr.mxu0 0.0
      %2024 = vmatpush1.msra.mxu0 0.0
      %2025 = vmatprep.subr.mxu0 0.0
      %2026 = vmatpush1.msra.mxu0 0.0
      %2027 = vmatprep.subr.mxu0 0.0
      %2028 = vmatpush1.msra.mxu0 0.0
      %2029 = vmatprep.subr.mxu0 0.0
      %2030 = vmatpush1.msra.mxu0 0.0
      %2031 = vmatprep.subr.mxu0 0.0
      %2032 = vmatpush1.msra.mxu0 0.0
      %2033 = vmatprep.subr.mxu0 0.0
      %2034 = vmatpush1.msra.mxu0 0.0
      %2035 = vmatprep.subr.mxu0 0.0
      %2036 = vmatpush1.msra.mxu0 0.0
      %2037 = vmatprep.subr.mxu0 0.0
      %2038 = vmatpush1.msra.mxu0 0.0
      %2039 = vmatprep.subr.mxu0 0.0
      %2040 = vmatpush1.msra.mxu0 0.0
      %2041 = vmatprep.subr.mxu0 0.0
      %2042 = vmatpush1.msra.mxu0 0.0
      %2043 = vmatprep.subr.mxu0 0.0
      %2044 = vmatpush1.msra.mxu0 0.0
      %2045 = vmatprep.subr.mxu0 0.0
      %2046 = vmatpush1.msra.mxu0 0.0
      %2047 = vmatprep.subr.mxu0 0.0
      %2048 = vmatpush1.msra.mxu0 0.0
      %2049 = vmatprep.subr.mxu0 0.0
      %2050 = vmatpush1.msra.mxu0 0.0
      %2051 = vmatprep.mubr.f32.mxu0 0.0
      %2052 = vmatmul.mubr.f32.gmra.mrb[0].mxu0 %v1980
      %v2053 = vpop.f32.mrb[0].mxu0
      %v2054 = vadd.f32 0.0, %v2053
      %v2055 = vpop.f32.mrb[0].mxu0
      %2056 = vmatprep.mubr.f32.mxu0 0.0
      %2057 = vmatmul.mubr.f32.gmra.mrb[0].mxu0 %v1983
      %v2058 = vpop.f32.mrb[0].mxu0
      %v2059 = vadd.f32 0.0, %v2058
      %v2060 = vpop.f32.mrb[0].mxu0
      %2061 = vdwg.mxu0
      %v2062 = vrcp.pop %v1970
      %v2063 = vrcp.pop %v1973
      %v2064 = vmul.f32 %v2062, 0.125
      %v2065 = vmul.f32 %v2063, 0.125
      %v2066 = vmul.f32 %v2054, %v2064
      %v2067 = vmul.f32 %v2059, %v2065
      %2070 = vrot.lane.b32.xlu0 %v848, 8
      %v2071 = vpop.permute.xlu0 %2070
      %2072 = vrot.lane.b32.xlu0 %v849, 8
      %v2073 = vpop.permute.xlu0 %2072
      %2078 = vrot.lane.b32.xlu0 %v1051, 16
      %v2079 = vpop.permute.xlu0 %2078
      %2080 = vrot.lane.b32.xlu0 %v1052, 16
      %v2081 = vpop.permute.xlu0 %2080
      %2086 = vrot.lane.b32.xlu0 %v1254, 24
      %v2087 = vpop.permute.xlu0 %2086
      %2088 = vrot.lane.b32.xlu0 %v1255, 24
      %v2089 = vpop.permute.xlu0 %2088
      %2094 = vrot.lane.b32.xlu0 %v1457, 32
      %v2095 = vpop.permute.xlu0 %2094
      %2096 = vrot.lane.b32.xlu0 %v1458, 32
      %v2097 = vpop.permute.xlu0 %2096
      %2102 = vrot.lane.b32.xlu0 %v1660, 40
      %v2103 = vpop.permute.xlu0 %2102
      %2104 = vrot.lane.b32.xlu0 %v1661, 40
      %v2105 = vpop.permute.xlu0 %2104
      %2110 = vrot.lane.b32.xlu0 %v1863, 48
      %v2111 = vpop.permute.xlu0 %2110
      %2112 = vrot.lane.b32.xlu0 %v1864, 48
      %v2113 = vpop.permute.xlu0 %2112
      %2118 = vrot.lane.b32.xlu0 %v2066, 56
      %v2119 = vpop.permute.xlu0 %2118
      %2120 = vrot.lane.b32.xlu0 %v2067, 56
      %v2121 = vpop.permute.xlu0 %2120
      %v2124 = vsel %vm451, %v644, %v2071
      %v2125 = vsel %vm451, %v645, %v2073
      %vm2126 = vcmask 130048
      %v2127 = vsel %vm2126, %v2124, %v2079
      %v2128 = vsel %vm2126, %v2125, %v2081
      %vm2129 = vcmask 195584
      %v2130 = vsel %vm2129, %v2127, %v2087
      %v2131 = vsel %vm2129, %v2128, %v2089
      %vm2132 = vcmask 261120
      %v2133 = vsel %vm2132, %v2130, %v2095
      %v2134 = vsel %vm2132, %v2131, %v2097
      %vm2135 = vcmask 326656
      %v2136 = vsel %vm2135, %v2133, %v2103
      %v2137 = vsel %vm2135, %v2134, %v2105
      %vm2138 = vcmask 392192
      %v2139 = vsel %vm2138, %v2136, %v2111
      %v2140 = vsel %vm2138, %v2137, %v2113
      %vm2141 = vcmask 457728
      %v2142 = vsel %vm2141, %v2139, %v2119
      %v2143 = vsel %vm2141, %v2140, %v2121
      %v2144 = vpack.c.bf16 %v2143, %v2142
      %v2146 = vlaneseq
      %v2147 = vshrl.u32 %v2146, 7
      %v2148 = vsub.s32 0, %v2147
      %v2149 = vrot.slane %v299, %v2148
      %v2159 = vunpack.c.l.b16 %v291
      %v2160 = vunpack.c.l.b16 %v292
      %v2161 = vunpack.c.l.b16 %v293
      %v2162 = vunpack.c.l.b16 %v294
      %v2163 = vunpack.c.l.b16 %v295
      %v2164 = vunpack.c.l.b16 %v296
      %v2165 = vunpack.c.l.b16 %v297
      %v2166 = vunpack.c.l.b16 %v298
      %v2167 = vpack.c.b16 %v2160, %v2159
      %v2168 = vpack.c.b16 %v2162, %v2161
      %v2169 = vpack.c.b16 %v2164, %v2163
      %v2170 = vpack.c.b16 %v2166, %v2165
      %v2176 = vsel %vm302, %v2144, 0
      %2178 = vmatprep.subr.bf16.mxu0 0
      %2179 = vmatpush1.bf16.msra.mxu0 %v2167
      %2180 = vmatprep.subr.bf16.mxu0 0
      %2181 = vmatpush1.bf16.msra.mxu0 %v2168
      %2182 = vmatprep.subr.bf16.mxu0 0
      %2183 = vmatpush1.bf16.msra.mxu0 %v2169
      %2184 = vmatprep.subr.bf16.mxu0 0
      %2185 = vmatpush1.bf16.msra.mxu0 %v2170
      %2186 = vmatprep.subr.bf16.mxu0 0
      %2187 = vmatpush1.bf16.msra.mxu0 0
      %2188 = vmatprep.subr.bf16.mxu0 0
      %2189 = vmatpush1.bf16.msra.mxu0 0
      %2190 = vmatprep.subr.bf16.mxu0 0
      %2191 = vmatpush1.bf16.msra.mxu0 0
      %2192 = vmatprep.subr.bf16.mxu0 0
      %2193 = vmatpush1.bf16.msra.mxu0 0
      %2194 = vmatprep.subr.bf16.mxu0 0
      %2195 = vmatpush1.bf16.msra.mxu0 0
      %2196 = vmatprep.subr.bf16.mxu0 0
      %2197 = vmatpush1.bf16.msra.mxu0 0
      %2198 = vmatprep.subr.bf16.mxu0 0
      %2199 = vmatpush1.bf16.msra.mxu0 0
      %2200 = vmatprep.subr.bf16.mxu0 0
      %2201 = vmatpush1.bf16.msra.mxu0 0
      %2202 = vmatprep.subr.bf16.mxu0 0
      %2203 = vmatpush1.bf16.msra.mxu0 0
      %2204 = vmatprep.subr.bf16.mxu0 0
      %2205 = vmatpush1.bf16.msra.mxu0 0
      %2206 = vmatprep.subr.bf16.mxu0 0
      %2207 = vmatpush1.bf16.msra.mxu0 0
      %2208 = vmatprep.subr.bf16.mxu0 0
      %2209 = vmatpush1.bf16.msra.mxu0 0
      %2210 = vmatprep.mubr.bf16.mxu0 0
      %2211 = vmatmul.mubr.bf16.gmra.mrb[0].mxu0 %v2176
      %v2212 = vpop.f32.mrb[0].mxu0
      %v2213 = vadd.f32 %v2149, %v2212
      %v2214 = vpop.f32.mrb[0].mxu0
      %v2215 = vpop.f32.mrb[0].mxu0
      %v2216 = vadd.f32 %v2149, %v2215
      %v2217 = vpop.f32.mrb[0].mxu0
      %2218 = vdwg.mxu0
      %v2219 = vadd.f32 %v2213, %v300
      %v2220 = vadd.f32 %v2216, %v301
      %2221 = vst.msk [vmem:[%s278] sm:$0xff] %vm302, %v2219
      %2222 = vst.msk [vmem:[%s278 + $0x8] sm:$0x1] %vm306, %v2220
      %p2223 = scmp.lt.s32.totalorder %s18, 1
      %s2224 = scalar_select %p2223, %s18, 1
      %s2225 = smul.addr %s2224, 2
      %s2226 = smul.addr %s2225, 8
      %s2227 = scalar_lea.vmem %s7, %s2226
      // Predicated region
      $region49: #{block.2} parent=47 // pred_check
        %p2228 = pneg %p188
      $region50: #{block.2} parent=47 // pred_check_branch
        %2230 = sbr.rel (%p2228) target = $region52
      $region51: #{block.2} parent=47 // pred_region
        _
      $region52: #{block.2} parent=47 // pred_fallthru
        _
    $region48: #{block.2} parent=5 // pred_fallthru
      _
    %p2231 = scmp.le.s32.totalorder 2, %s13
    // Predicated region
    $region53: #{block.2} parent=5 // pred_check
      %p2232 = pneg %p2231
    $region54: #{block.2} parent=5 // pred_check_branch
      %2234 = sbr.rel (%p2232) target = $region56
    $region55: #{block.2} parent=5 // pred_region
      %s2235 = ssub.s32 %s13, 2
      // Predicated region
      $region57: #{block.2} parent=55 // pred_check
        %p2236 = pneg %p194
      $region58: #{block.2} parent=55 // pred_check_branch
        %2238 = sbr.rel (%p2236) target = $region60
      $region59: #{block.2} parent=55 // pred_region
        %p2239 = scmp.lt.s32.totalorder %s19, 1
        %s2240 = scalar_select %p2239, %s19, 1
        %s2241 = smul.addr %s2240, 2
        %s2242 = smul.addr %s2241, 8
        %s2243 = scalar_lea.vmem %s7, %s2242
      $region60: #{block.2} parent=55 // pred_fallthru
        _
    $region56: #{block.2} parent=5 // pred_fallthru
      _
  $region6: #{block.2} parent=0 // loop_footer
    %s17 = sadd.s32 1, %s13
  $region7: #{block.2} parent=0 // loop_footer_branch
    %12 = sbr.rel target = $region3
  $region8: #{block.2} parent=0 // loop_exit
    _

</llo_original>
